<compile_context>
chip_gen: v6e
topology: v6e:2x2x1
jax: 0.10.0
libtpu: 0.0.40
codegen_flags: <defaults>
</compile_context>

<pallas_src>
import jax
import jax.numpy as jnp
from jax.experimental import pallas as pl
from jax.experimental.pallas import tpu as pltpu


# ---------------------------------------------------------------------------
# Kernel
# ---------------------------------------------------------------------------
def _weight_update_gru_kernel(x_ref,          # (1, hidden_dim)   bf16, resident
                              hprev_mm_ref,   # (1, hidden_size)  bf16, resident
                              hprev_f32_ref,  # (1, TN)           f32 tile of hprev
                              wih_ref,        # (hidden_dim, 3*TN)  bf16 fused gates
                              whh_ref,        # (hidden_size, 3*TN) bf16 fused gates
                              bih_ref,        # (1, 3*TN) f32 fused gate biases
                              bhh_ref,        # (1, 3*TN) f32 fused gate biases
                              out_ref):       # (1, TN) f32
    tn = out_ref.shape[-1]

    # ---- two wide gate matmuls on the MXU (bf16 inputs, f32 accumulation) ----
    gi = jnp.dot(x_ref[...], wih_ref[...],
                 preferred_element_type=jnp.float32) + bih_ref[...]
    gh = jnp.dot(hprev_mm_ref[...], whh_ref[...],
                 preferred_element_type=jnp.float32) + bhh_ref[...]

    # Lane-dense static slices (offsets are multiples of TN >= 128).
    i_r, i_z, i_n = gi[:, 0:tn], gi[:, tn:2 * tn], gi[:, 2 * tn:3 * tn]
    h_r, h_z, h_n = gh[:, 0:tn], gh[:, tn:2 * tn], gh[:, 2 * tn:3 * tn]

    # ---- GRU elementwise update, all in f32 (VPU/EUP) ----
    r = jax.nn.sigmoid(i_r + h_r)
    z = jax.nn.sigmoid(i_z + h_z)
    n = jnp.tanh(i_n + r * h_n)          # PyTorch: n = tanh(i_n + r*(W_hn h + b_hn))
    hprev_t = hprev_f32_ref[...]
    out_ref[...] = ((1.0 - z) * n + z * hprev_t).astype(out_ref.dtype)


# ---------------------------------------------------------------------------
# Tiling / layout helpers
# ---------------------------------------------------------------------------
def _pick_tile_n(hidden_size, hidden_dim, weight_itemsize=2,
                 budget_bytes=24 * 2 ** 20):
    """Largest TN in {512,256,128} whose double-buffered fused-weight blocks fit
    the VMEM budget (conservative enough for v7x's 64 MiB)."""
    if hidden_size % 128 != 0:
        # TODO(synk): lane dim < 128 (or ragged) -> masked stores; acceptable
        # for tiny configs where launch overhead dominates anyway.
        return hidden_size
    for tn in (512, 256, 128):
        if hidden_size % tn == 0:
            db_weights = 2 * 3 * tn * (hidden_size + hidden_dim) * weight_itemsize
            if db_weights <= budget_bytes:
                return tn
    return 128


def _vmem_limit_bytes(hidden_size, hidden_dim, tn, weight_itemsize):
    fused_cols = 3 * tn
    weights = 2 * fused_cols * (hidden_size + hidden_dim) * weight_itemsize  # dbl-buffered
    biases = 2 * 2 * fused_cols * 4
    small = 2 * 2 * tn * 4                 # hprev f32 tile + out tile, dbl-buffered
    resident = (hidden_size + hidden_dim) * weight_itemsize   # x + hprev (bf16, resident)
    need = weights + biases + small + resident
    return int(min(48 * 2 ** 20, need + 8 * 2 ** 20))


def _fuse_gate_weight(w, hidden_size, tn, dtype):
    """(3*hidden_size, in) PyTorch gate-stacked weight -> (in, n_tiles*3*tn)
    transposed, tile-interleaved [r|z|n] column layout."""
    in_dim = w.shape[1]
    n_tiles = hidden_size // tn
    w_g = w.reshape(3, n_tiles, tn, in_dim)        # (gate, tile, col, in)
    w_g = jnp.transpose(w_g, (3, 1, 0, 2))         # (in, tile, gate, col)
    return w_g.reshape(in_dim, n_tiles * 3 * tn).astype(dtype)


def _fuse_gate_bias(b, hidden_size, tn):
    n_tiles = hidden_size // tn
    b_g = b.reshape(3, n_tiles, tn)                # (gate, tile, col)
    b_g = jnp.transpose(b_g, (1, 0, 2))            # (tile, gate, col)
    return b_g.reshape(1, n_tiles * 3 * tn).astype(jnp.float32)


def prepare_weight_update_gru_params(params, hidden_dim, output_dim,
                                     weights_dtype=jnp.bfloat16):
    """One-time (setup) parameter packing — keeps the per-gate split/transpose
    and the bf16 cast out of the per-call path."""
    hidden_size = hidden_dim * output_dim
    tn = _pick_tile_n(hidden_size, hidden_dim, jnp.dtype(weights_dtype).itemsize)
    return {
        "w_ih": _fuse_gate_weight(params["weight_ih"], hidden_size, tn, weights_dtype),
        "w_hh": _fuse_gate_weight(params["weight_hh"], hidden_size, tn, weights_dtype),
        "b_ih": _fuse_gate_bias(params["bias_ih"], hidden_size, tn),
        "b_hh": _fuse_gate_bias(params["bias_hh"], hidden_size, tn),
    }


# ---------------------------------------------------------------------------
# Forward wrapper
# ---------------------------------------------------------------------------
def weight_update_gru(H, W_prev, prepped, hidden_dim, output_dim):
    """H: (num_vertices, hidden_dim); W_prev: (output_dim, output_dim) with
    output_dim == hidden_dim (implied by the PyTorch module). Returns
    W_next of shape (hidden_dim, output_dim)."""
    hidden_size = hidden_dim * output_dim
    assert W_prev.size == hidden_size, "W_prev must flatten to hidden_dim*output_dim"

    wdtype = prepped["w_ih"].dtype
    w_itemsize = jnp.dtype(wdtype).itemsize
    tn = _pick_tile_n(hidden_size, hidden_dim, w_itemsize)   # deterministic, matches prep
    n_tiles = hidden_size // tn

    # Hoisted mean over vertices (tiny reduction, done once — not per N tile).
    x = jnp.mean(H.astype(jnp.float32), axis=0, keepdims=True)      # (1, hidden_dim)
    x_mm = x.astype(wdtype)
    hprev_f32 = W_prev.reshape(1, hidden_size).astype(jnp.float32)
    hprev_mm = hprev_f32.astype(wdtype)

    grid_spec = pltpu.PrefetchScalarGridSpec(
        num_scalar_prefetch=0,
        grid=(n_tiles,),
        in_specs=[
            pl.BlockSpec((1, hidden_dim), lambda j: (0, 0)),          # x (bf16, resident)
            pl.BlockSpec((1, hidden_size), lambda j: (0, 0)),         # hprev (bf16, resident)
            pl.BlockSpec((1, tn), lambda j: (0, j)),                  # hprev tile (f32)
            pl.BlockSpec((hidden_dim, 3 * tn), lambda j: (0, j)),     # fused W_ih^T
            pl.BlockSpec((hidden_size, 3 * tn), lambda j: (0, j)),    # fused W_hh^T
            pl.BlockSpec((1, 3 * tn), lambda j: (0, j)),              # fused b_ih
            pl.BlockSpec((1, 3 * tn), lambda j: (0, j)),              # fused b_hh
        ],
        out_specs=pl.BlockSpec((1, tn), lambda j: (0, j)),
    )

    # Advisory cost hint: GEMV flops + transcendentals + streamed bytes.
    weight_bytes = 3 * hidden_size * (hidden_dim + hidden_size) * w_itemsize
    cost = pl.CostEstimate(
        flops=2 * 3 * hidden_size * (hidden_dim + hidden_size),
        transcendentals=3 * hidden_size,
        bytes_accessed=weight_bytes + 6 * hidden_size * 4 + hidden_size * 4,
    )

    out_flat = pl.pallas_call(
        _weight_update_gru_kernel,
        out_shape=jax.ShapeDtypeStruct((1, hidden_size), jnp.float32),
        grid_spec=grid_spec,
        compiler_params=pltpu.CompilerParams(
            dimension_semantics=("parallel",),
            vmem_limit_bytes=_vmem_limit_bytes(hidden_size, hidden_dim, tn, w_itemsize),
        ),
        cost_estimate=cost,
    )(x_mm, hprev_mm, hprev_f32,
      prepped["w_ih"], prepped["w_hh"], prepped["b_ih"], prepped["b_hh"])

    return out_flat.reshape(hidden_dim, output_dim)


# ---------------------------------------------------------------------------
# Pure-JAX reference (nn.GRUCell forward on the mean embedding)
# ---------------------------------------------------------------------------
def _reference(H, W_prev, params, hidden_dim, output_dim, weights_dtype=None):
    x = jnp.mean(H.astype(jnp.float32), axis=0)
    h = W_prev.reshape(-1).astype(jnp.float32)

    def cast(a):
        if weights_dtype is None:
            return a.astype(jnp.float32)
        return a.astype(weights_dtype).astype(jnp.float32)

    gi = cast(params["weight_ih"]) @ cast(x) + params["bias_ih"]
    gh = cast(params["weight_hh"]) @ cast(h) + params["bias_hh"]
    i_r, i_z, i_n = jnp.split(gi, 3)
    h_r, h_z, h_n = jnp.split(gh, 3)
    r = jax.nn.sigmoid(i_r + h_r)
    z = jax.nn.sigmoid(i_z + h_z)
    n = jnp.tanh(i_n + r * h_n)
    h_new = (1.0 - z) * n + z * h
    return h_new.reshape(hidden_dim, output_dim)


if __name__ == "__main__":
    hidden_dim = 32
    output_dim = 32              # must equal hidden_dim for W_prev (output_dim, output_dim)
    hidden_size = hidden_dim * output_dim      # 1024 -> 2 column tiles of 512
    num_vertices = 32

    key = jax.random.PRNGKey(0)
    k_h, k_w, k1, k2, k3, k4 = jax.random.split(key, 6)

    H = jax.random.normal(k_h, (num_vertices, hidden_dim), dtype=jnp.float32)
    W_prev = jax.random.normal(k_w, (output_dim, output_dim), dtype=jnp.float32)

    bound = 1.0 / float(hidden_size) ** 0.5
    params = {
        "weight_ih": jax.random.uniform(k1, (3 * hidden_size, hidden_dim),
                                        minval=-bound, maxval=bound, dtype=jnp.float32),
        "weight_hh": jax.random.uniform(k2, (3 * hidden_size, hidden_size),
                                        minval=-bound, maxval=bound, dtype=jnp.float32),
        "bias_ih": jax.random.uniform(k3, (3 * hidden_size,),
                                      minval=-bound, maxval=bound, dtype=jnp.float32),
        "bias_hh": jax.random.uniform(k4, (3 * hidden_size,),
                                      minval=-bound, maxval=bound, dtype=jnp.float32),
    }

    # One-time setup: fused / transposed / bf16 gate weights.
    prepped = prepare_weight_update_gru_params(params, hidden_dim, output_dim)

    run = jax.jit(weight_update_gru, static_argnums=(3, 4))
    W_next = run(H, W_prev, prepped, hidden_dim, output_dim)
    W_next = jax.block_until_ready(W_next)
    assert W_next.shape == (hidden_dim, output_dim)

    # Exactness check vs a reference that uses the same bf16-rounded operands.
    W_ref_match = _reference(H, W_prev, params, hidden_dim, output_dim,
                             weights_dtype=jnp.bfloat16)
    assert jnp.allclose(W_next, W_ref_match, atol=1e-3, rtol=1e-3), \
        "mismatch vs bf16-matched reference"

    # Sanity check vs the full-f32 reference (bounded bf16 streaming error).
    W_ref_f32 = _reference(H, W_prev, params, hidden_dim, output_dim)
    assert jnp.allclose(W_next, W_ref_f32, atol=5e-2, rtol=5e-2), \
        "mismatch vs f32 reference"

    print("KERNEL_OK")
</pallas_src>

<mosaic_0001>
module attributes {stable_mosaic.version = 11 : i64} {
  func.func @_weight_update_gru_kernel(%arg0: i32, %arg1: memref<1x32xbf16, #tpu.memory_space<vmem>>, %arg2: memref<1x1024xbf16, #tpu.memory_space<vmem>>, %arg3: memref<1x512xf32, #tpu.memory_space<vmem>>, %arg4: memref<32x1536xbf16, #tpu.memory_space<vmem>>, %arg5: memref<1024x1536xbf16, #tpu.memory_space<vmem>>, %arg6: memref<1x1536xf32, #tpu.memory_space<vmem>>, %arg7: memref<1x1536xf32, #tpu.memory_space<vmem>>, %arg8: memref<1x512xf32, #tpu.memory_space<vmem>>) attributes {dimension_semantics = [#tpu.dimension_semantics<parallel>], iteration_bounds = array<i64: 2>, scalar_prefetch = 0 : i64, scratch_operands = 0 : i64, tpu.core_type = #tpu.core_type<tc>, window_params = [{pipeline_mode = #tpu.pipeline_mode<synchronous>, transform_indices = @transform_0, window_bounds = array<i64: 1, 32>}, {pipeline_mode = #tpu.pipeline_mode<synchronous>, transform_indices = @transform_1, window_bounds = array<i64: 1, 1024>}, {transform_indices = @transform_2, window_bounds = array<i64: 1, 512>}, {transform_indices = @transform_3, window_bounds = array<i64: 32, 1536>}, {transform_indices = @transform_4, window_bounds = array<i64: 1024, 1536>}, {transform_indices = @transform_5, window_bounds = array<i64: 1, 1536>}, {transform_indices = @transform_6, window_bounds = array<i64: 1, 1536>}, {transform_indices = @transform_7, window_bounds = array<i64: 1, 512>}]} {
    %c0 = arith.constant 0 : index
    %c0_0 = arith.constant 0 : index
    %0 = vector.load %arg1[%c0, %c0_0] : memref<1x32xbf16, #tpu.memory_space<vmem>>, vector<1x32xbf16>
    %c0_1 = arith.constant 0 : index
    %c0_2 = arith.constant 0 : index
    %1 = vector.load %arg4[%c0_1, %c0_2] : memref<32x1536xbf16, #tpu.memory_space<vmem>>, vector<32x1536xbf16>
    %cst = arith.constant dense<0.000000e+00> : vector<1x1536xf32>
    %2 = tpu.matmul %0, %1, %cst {dimension_numbers = #tpu.dot_dimension_numbers<[1], [0], [0], [1], [0, 0, 1, 1], [], []>} : vector<1x32xbf16>, vector<32x1536xbf16>, vector<1x1536xf32> -> vector<1x1536xf32>
    %c0_3 = arith.constant 0 : index
    %c0_4 = arith.constant 0 : index
    %3 = vector.load %arg6[%c0_3, %c0_4] : memref<1x1536xf32, #tpu.memory_space<vmem>>, vector<1x1536xf32>
    %4 = arith.addf %2, %3 : vector<1x1536xf32>
    %c0_5 = arith.constant 0 : index
    %c0_6 = arith.constant 0 : index
    %5 = vector.load %arg2[%c0_5, %c0_6] : memref<1x1024xbf16, #tpu.memory_space<vmem>>, vector<1x1024xbf16>
    %c0_7 = arith.constant 0 : index
    %c0_8 = arith.constant 0 : index
    %6 = vector.load %arg5[%c0_7, %c0_8] : memref<1024x1536xbf16, #tpu.memory_space<vmem>>, vector<1024x1536xbf16>
    %cst_9 = arith.constant dense<0.000000e+00> : vector<1x1536xf32>
    %7 = tpu.matmul %5, %6, %cst_9 {dimension_numbers = #tpu.dot_dimension_numbers<[1], [0], [0], [1], [0, 0, 1, 1], [], []>} : vector<1x1024xbf16>, vector<1024x1536xbf16>, vector<1x1536xf32> -> vector<1x1536xf32>
    %c0_10 = arith.constant 0 : index
    %c0_11 = arith.constant 0 : index
    %8 = vector.load %arg7[%c0_10, %c0_11] : memref<1x1536xf32, #tpu.memory_space<vmem>>, vector<1x1536xf32>
    %9 = arith.addf %7, %8 : vector<1x1536xf32>
    %10 = vector.extract_strided_slice %4 {offsets = [0, 0], sizes = [1, 512], strides = [1, 1]} : vector<1x1536xf32> to vector<1x512xf32>
    %11 = vector.extract_strided_slice %4 {offsets = [0, 512], sizes = [1, 512], strides = [1, 1]} : vector<1x1536xf32> to vector<1x512xf32>
    %12 = vector.extract_strided_slice %4 {offsets = [0, 1024], sizes = [1, 512], strides = [1, 1]} : vector<1x1536xf32> to vector<1x512xf32>
    %13 = vector.extract_strided_slice %9 {offsets = [0, 0], sizes = [1, 512], strides = [1, 1]} : vector<1x1536xf32> to vector<1x512xf32>
    %14 = vector.extract_strided_slice %9 {offsets = [0, 512], sizes = [1, 512], strides = [1, 1]} : vector<1x1536xf32> to vector<1x512xf32>
    %15 = vector.extract_strided_slice %9 {offsets = [0, 1024], sizes = [1, 512], strides = [1, 1]} : vector<1x1536xf32> to vector<1x512xf32>
    %16 = arith.addf %10, %13 : vector<1x512xf32>
    %17 = arith.negf %16 : vector<1x512xf32>
    %18 = math.exp %17 : vector<1x512xf32>
    %cst_12 = arith.constant 1.000000e+00 : f32
    %19 = vector.broadcast %cst_12 : f32 to vector<1x512xf32>
    %20 = arith.addf %19, %18 : vector<1x512xf32>
    %21 = arith.divf %19, %20 : vector<1x512xf32>
    %22 = arith.addf %11, %14 : vector<1x512xf32>
    %23 = arith.negf %22 : vector<1x512xf32>
    %24 = math.exp %23 : vector<1x512xf32>
    %cst_13 = arith.constant 1.000000e+00 : f32
    %25 = vector.broadcast %cst_13 : f32 to vector<1x512xf32>
    %26 = arith.addf %25, %24 : vector<1x512xf32>
    %27 = arith.divf %25, %26 : vector<1x512xf32>
    %28 = arith.mulf %21, %15 : vector<1x512xf32>
    %29 = arith.addf %12, %28 : vector<1x512xf32>
    %30 = math.tanh %29 : vector<1x512xf32>
    %c0_14 = arith.constant 0 : index
    %c0_15 = arith.constant 0 : index
    %31 = vector.load %arg3[%c0_14, %c0_15] : memref<1x512xf32, #tpu.memory_space<vmem>>, vector<1x512xf32>
    %cst_16 = arith.constant 1.000000e+00 : f32
    %32 = vector.broadcast %cst_16 : f32 to vector<1x512xf32>
    %33 = arith.subf %32, %27 : vector<1x512xf32>
    %34 = arith.mulf %33, %30 : vector<1x512xf32>
    %35 = arith.mulf %27, %31 : vector<1x512xf32>
    %36 = arith.addf %34, %35 : vector<1x512xf32>
    %c0_17 = arith.constant 0 : index
    %c0_18 = arith.constant 0 : index
    %37 = vector.load %arg8[%c0_17, %c0_18] : memref<1x512xf32, #tpu.memory_space<vmem>>, vector<1x512xf32>
    tpu.vector_store %arg8[%c0_17, %c0_18], %36 {strides = array<i32>} : memref<1x512xf32, #tpu.memory_space<vmem>>, vector<1x512xf32>,
    return
  }
  func.func @transform_0(%arg0: i32) -> (i32, i32) {
    %c0_i32 = arith.constant 0 : i32
    %c0_i32_0 = arith.constant 0 : i32
    %c0_i32_1 = arith.constant 0 : i32
    return %c0_i32, %c0_i32_0 : i32, i32
  }
  func.func @transform_1(%arg0: i32) -> (i32, i32) {
    %c0_i32 = arith.constant 0 : i32
    %c0_i32_0 = arith.constant 0 : i32
    %c0_i32_1 = arith.constant 0 : i32
    return %c0_i32, %c0_i32_0 : i32, i32
  }
  func.func @transform_2(%arg0: i32) -> (i32, i32) {
    %c0_i32 = arith.constant 0 : i32
    %c0_i32_0 = arith.constant 0 : i32
    return %c0_i32, %arg0 : i32, i32
  }
  func.func @transform_3(%arg0: i32) -> (i32, i32) {
    %c0_i32 = arith.constant 0 : i32
    %c0_i32_0 = arith.constant 0 : i32
    return %c0_i32, %arg0 : i32, i32
  }
  func.func @transform_4(%arg0: i32) -> (i32, i32) {
    %c0_i32 = arith.constant 0 : i32
    %c0_i32_0 = arith.constant 0 : i32
    return %c0_i32, %arg0 : i32, i32
  }
  func.func @transform_5(%arg0: i32) -> (i32, i32) {
    %c0_i32 = arith.constant 0 : i32
    %c0_i32_0 = arith.constant 0 : i32
    return %c0_i32, %arg0 : i32, i32
  }
  func.func @transform_6(%arg0: i32) -> (i32, i32) {
    %c0_i32 = arith.constant 0 : i32
    %c0_i32_0 = arith.constant 0 : i32
    return %c0_i32, %arg0 : i32, i32
  }
  func.func @transform_7(%arg0: i32) -> (i32, i32) {
    %c0_i32 = arith.constant 0 : i32
    %c0_i32_0 = arith.constant 0 : i32
    return %c0_i32, %arg0 : i32, i32
  }
}

</mosaic_0001>

<llo_original>
// kernel: weight_update_gru.1
$region0: #{weight_update_gru.1}
  #allocation0 [shape = 'u32[]', space=smem, size = 0x4, offset = 0x4, fixed_abs, tag = 'smem constant byte address 0x4 - core index']
  #allocation1 [shape = 'u32[144,128]{1,0:T(1,128)}', space=vmem, size = 0x12000, scoped, tag = 'internal scratch']
  %s0 = inlined_call_operand.vmem [shape: bf16[1,32], index: 0, kind: input, shape index: {}]
  %s1 = inlined_call_operand.vmem [shape: bf16[1,1024], index: 1, kind: input, shape index: {}]
  %s2 = inlined_call_operand.vmem [shape: f32[1,1024], index: 2, kind: input, shape index: {}]
  %s3 = inlined_call_operand.hbm [shape: bf16[32,3072], index: 3, kind: input, shape index: {}]
  %s4 = inlined_call_operand.hbm [shape: bf16[1024,3072], index: 4, kind: input, shape index: {}]
  %s5 = inlined_call_operand.hbm [shape: f32[1,3072], index: 5, kind: input, shape index: {}]
  %s6 = inlined_call_operand.hbm [shape: f32[1,3072], index: 6, kind: input, shape index: {}]
  %s7 = inlined_call_operand.vmem [shape: f32[1,1024], index: 7, kind: output, shape index: {}]
  %s8 = sld [smem:[#allocation0]]
  $region77: #{weight_update_gru.1} parent=0
    _
  %s10 = ssub.s32 1, %s8
  %s11 = scalar_select 0, %s10, %s8
  $region1: #{weight_update_gru.1} parent=0
    #allocation2 [shape = 'u8[196608]{0}', space=vmem, size = 0x30000, scoped, tag = 'input window, operand 3']
    #allocation3 [shape = 's32[2]{0}', space=sflag, size = 0x8, scoped, tag = 'scoped memory for weight_update_gru.1']
    #allocation4 [shape = 'u8[6291456]{0}', space=vmem, size = 0x600000, scoped, tag = 'input window, operand 4']
    #allocation5 [shape = 's32[2]{0}', space=sflag, size = 0x8, scoped, tag = 'scoped memory for weight_update_gru.1']
    #allocation6 [shape = 'u8[12288]{0}', space=vmem, size = 0x3000, scoped, tag = 'input window, operand 5']
    #allocation7 [shape = 'u8[12288]{0}', space=vmem, size = 0x3000, scoped, tag = 'input window, operand 6']
    #allocation8 [shape = 's32[2]{0}', space=sflag, size = 0x8, scoped, tag = 'scoped memory for weight_update_gru.1']
    %12 = vsyncpa [#allocation3], 0
    %s13 = scalar_lea.sflag [#allocation3], 1
    %14 = vsyncpa %s13, 0
    %15 = vsyncpa [#allocation5], 0
    %s16 = scalar_lea.sflag [#allocation5], 1
    %17 = vsyncpa %s16, 0
    %18 = vsyncpa [#allocation8], 0
    %s19 = scalar_lea.sflag [#allocation8], 1
    %20 = vsyncpa %s19, 0
    loop: start=0, step=1, limit=4
    $region2: #{weight_update_gru.1} parent=1 // loop_pre_header
      _
    $region3: #{weight_update_gru.1} parent=1 // loop_header
      %s22 = sphi 0, %s26
      %p23 = scmp.ge.s32.totalorder %s22, 4
      %s30 = sphi 0, %s30
      %s32 = sphi 0, %s30
      %s33 = sphi 0, %s32
      %s47 = sphi 0, %s33
      %s51 = sphi 0, %s51
      %s53 = sphi 0, %s51
      %s54 = sphi 0, %s53
      %s68 = sphi 0, %s54
      %s74 = sphi 0, %s76
      %s77 = sphi 0, %s74
      %s78 = sphi 0, %s77
      %s94 = sphi 0, %s78
      %s100 = sphi 0, %s102
      %s103 = sphi 0, %s100
      %s104 = sphi 0, %s103
      %s120 = sphi 0, %s104
      %s126 = sphi 0, %s128
      %s129 = sphi 0, %s126
      %s130 = sphi 0, %s129
      %s146 = sphi 0, %s130
      %s152 = sphi 0, %s154
      %s155 = sphi 0, %s152
      %s156 = sphi 0, %s155
      %s172 = sphi 0, %s156
      %s178 = sphi 0, %s180
      %s181 = sphi 0, %s178
      %s182 = sphi 0, %s181
      %s198 = sphi 0, %s182
      %s204 = sphi 0, %s206
      %s207 = sphi 0, %s204
      %s208 = sphi 0, %s207
      %s224 = sphi 0, %s208
    $region4: #{weight_update_gru.1} parent=1 // loop_header_branch
      %25 = sbr.rel (%p23) target = $region8
    $region5: #{weight_update_gru.1} parent=1 // loop_body
      %s27 = ssub.s32 %s22, 1
      %s28 = ssub.s32 %s22, 2
      %s29 = sadd.s32 %s22, 1
      %s31 = sadd.s32 %s30, 1
      %p34 = scmp.eq.s32.totalorder %s22, 1
      %p35 = scmp.ne.s32.totalorder %s30, %s32
      %p36 = scmp.eq.s32.totalorder %s22, 0
      %p37 = por %p35, %p36
      %p38 = scmp.ne.s32.totalorder %s30, %s32
      %p39 = scmp.eq.s32.totalorder %s27, 1
      %p40 = por %p38, %p39
      %p41 = scmp.ne.s32.totalorder %s32, %s33
      %p42 = scmp.eq.s32.totalorder %s27, 0
      %p43 = por %p41, %p42
      %p44 = scmp.ne.s32.totalorder %s32, %s33
      %p45 = scmp.eq.s32.totalorder %s28, 1
      %p46 = por %p44, %p45
      %p48 = scmp.ne.s32.totalorder %s33, %s47
      %p49 = scmp.eq.s32.totalorder %s28, 0
      %p50 = por %p48, %p49
      %s52 = sadd.s32 %s51, 1
      %p55 = scmp.eq.s32.totalorder %s22, 1
      %p56 = scmp.ne.s32.totalorder %s51, %s53
      %p57 = scmp.eq.s32.totalorder %s22, 0
      %p58 = por %p56, %p57
      %p59 = scmp.ne.s32.totalorder %s51, %s53
      %p60 = scmp.eq.s32.totalorder %s27, 1
      %p61 = por %p59, %p60
      %p62 = scmp.ne.s32.totalorder %s53, %s54
      %p63 = scmp.eq.s32.totalorder %s27, 0
      %p64 = por %p62, %p63
      %p65 = scmp.ne.s32.totalorder %s53, %s54
      %p66 = scmp.eq.s32.totalorder %s28, 1
      %p67 = por %p65, %p66
      %p69 = scmp.ne.s32.totalorder %s54, %s68
      %p70 = scmp.eq.s32.totalorder %s28, 0
      %p71 = por %p69, %p70
      %s72 = ssub.s32 %s22, %s29
      %p73 = scmp.eq.s32.totalorder %s72, 0
      %s75 = sadd.s32 %s74, 1
      %s76 = scalar_select %p73, %s74, %s75
      %p79 = pneg %p73
      %p80 = scmp.eq.s32.totalorder %s22, 1
      %p81 = por %p79, %p80
      %p82 = scmp.ne.s32.totalorder %s74, %s77
      %p83 = scmp.eq.s32.totalorder %s22, 0
      %p84 = por %p82, %p83
      %p85 = scmp.ne.s32.totalorder %s74, %s77
      %p86 = scmp.eq.s32.totalorder %s27, 1
      %p87 = por %p85, %p86
      %p88 = scmp.ne.s32.totalorder %s77, %s78
      %p89 = scmp.eq.s32.totalorder %s27, 0
      %p90 = por %p88, %p89
      %p91 = scmp.ne.s32.totalorder %s77, %s78
      %p92 = scmp.eq.s32.totalorder %s28, 1
      %p93 = por %p91, %p92
      %p95 = scmp.ne.s32.totalorder %s78, %s94
      %p96 = scmp.eq.s32.totalorder %s28, 0
      %p97 = por %p95, %p96
      %s98 = ssub.s32 %s22, %s29
      %p99 = scmp.eq.s32.totalorder %s98, 0
      %s101 = sadd.s32 %s100, 1
      %s102 = scalar_select %p99, %s100, %s101
      %p105 = pneg %p99
      %p106 = scmp.eq.s32.totalorder %s22, 1
      %p107 = por %p105, %p106
      %p108 = scmp.ne.s32.totalorder %s100, %s103
      %p109 = scmp.eq.s32.totalorder %s22, 0
      %p110 = por %p108, %p109
      %p111 = scmp.ne.s32.totalorder %s100, %s103
      %p112 = scmp.eq.s32.totalorder %s27, 1
      %p113 = por %p111, %p112
      %p114 = scmp.ne.s32.totalorder %s103, %s104
      %p115 = scmp.eq.s32.totalorder %s27, 0
      %p116 = por %p114, %p115
      %p117 = scmp.ne.s32.totalorder %s103, %s104
      %p118 = scmp.eq.s32.totalorder %s28, 1
      %p119 = por %p117, %p118
      %p121 = scmp.ne.s32.totalorder %s104, %s120
      %p122 = scmp.eq.s32.totalorder %s28, 0
      %p123 = por %p121, %p122
      %s124 = ssub.s32 %s22, %s29
      %p125 = scmp.eq.s32.totalorder %s124, 0
      %s127 = sadd.s32 %s126, 1
      %s128 = scalar_select %p125, %s126, %s127
      %p131 = pneg %p125
      %p132 = scmp.eq.s32.totalorder %s22, 1
      %p133 = por %p131, %p132
      %p134 = scmp.ne.s32.totalorder %s126, %s129
      %p135 = scmp.eq.s32.totalorder %s22, 0
      %p136 = por %p134, %p135
      %p137 = scmp.ne.s32.totalorder %s126, %s129
      %p138 = scmp.eq.s32.totalorder %s27, 1
      %p139 = por %p137, %p138
      %p140 = scmp.ne.s32.totalorder %s129, %s130
      %p141 = scmp.eq.s32.totalorder %s27, 0
      %p142 = por %p140, %p141
      %p143 = scmp.ne.s32.totalorder %s129, %s130
      %p144 = scmp.eq.s32.totalorder %s28, 1
      %p145 = por %p143, %p144
      %p147 = scmp.ne.s32.totalorder %s130, %s146
      %p148 = scmp.eq.s32.totalorder %s28, 0
      %p149 = por %p147, %p148
      %s150 = ssub.s32 %s22, %s29
      %p151 = scmp.eq.s32.totalorder %s150, 0
      %s153 = sadd.s32 %s152, 1
      %s154 = scalar_select %p151, %s152, %s153
      %p157 = pneg %p151
      %p158 = scmp.eq.s32.totalorder %s22, 1
      %p159 = por %p157, %p158
      %p160 = scmp.ne.s32.totalorder %s152, %s155
      %p161 = scmp.eq.s32.totalorder %s22, 0
      %p162 = por %p160, %p161
      %p163 = scmp.ne.s32.totalorder %s152, %s155
      %p164 = scmp.eq.s32.totalorder %s27, 1
      %p165 = por %p163, %p164
      %p166 = scmp.ne.s32.totalorder %s155, %s156
      %p167 = scmp.eq.s32.totalorder %s27, 0
      %p168 = por %p166, %p167
      %p169 = scmp.ne.s32.totalorder %s155, %s156
      %p170 = scmp.eq.s32.totalorder %s28, 1
      %p171 = por %p169, %p170
      %p173 = scmp.ne.s32.totalorder %s156, %s172
      %p174 = scmp.eq.s32.totalorder %s28, 0
      %p175 = por %p173, %p174
      %s176 = ssub.s32 %s22, %s29
      %p177 = scmp.eq.s32.totalorder %s176, 0
      %s179 = sadd.s32 %s178, 1
      %s180 = scalar_select %p177, %s178, %s179
      %p183 = pneg %p177
      %p184 = scmp.eq.s32.totalorder %s22, 1
      %p185 = por %p183, %p184
      %p186 = scmp.ne.s32.totalorder %s178, %s181
      %p187 = scmp.eq.s32.totalorder %s22, 0
      %p188 = por %p186, %p187
      %p189 = scmp.ne.s32.totalorder %s178, %s181
      %p190 = scmp.eq.s32.totalorder %s27, 1
      %p191 = por %p189, %p190
      %p192 = scmp.ne.s32.totalorder %s181, %s182
      %p193 = scmp.eq.s32.totalorder %s27, 0
      %p194 = por %p192, %p193
      %p195 = scmp.ne.s32.totalorder %s181, %s182
      %p196 = scmp.eq.s32.totalorder %s28, 1
      %p197 = por %p195, %p196
      %p199 = scmp.ne.s32.totalorder %s182, %s198
      %p200 = scmp.eq.s32.totalorder %s28, 0
      %p201 = por %p199, %p200
      %s202 = ssub.s32 %s22, %s29
      %p203 = scmp.eq.s32.totalorder %s202, 0
      %s205 = sadd.s32 %s204, 1
      %s206 = scalar_select %p203, %s204, %s205
      %p209 = pneg %p203
      %p210 = scmp.eq.s32.totalorder %s22, 1
      %p211 = por %p209, %p210
      %p212 = scmp.ne.s32.totalorder %s204, %s207
      %p213 = scmp.eq.s32.totalorder %s22, 0
      %p214 = por %p212, %p213
      %p215 = scmp.ne.s32.totalorder %s204, %s207
      %p216 = scmp.eq.s32.totalorder %s27, 1
      %p217 = por %p215, %p216
      %p218 = scmp.ne.s32.totalorder %s207, %s208
      %p219 = scmp.eq.s32.totalorder %s27, 0
      %p220 = por %p218, %p219
      %p221 = scmp.ne.s32.totalorder %s207, %s208
      %p222 = scmp.eq.s32.totalorder %s28, 1
      %p223 = por %p221, %p222
      %p225 = scmp.ne.s32.totalorder %s208, %s224
      %p226 = scmp.eq.s32.totalorder %s28, 0
      %p227 = por %p225, %p226
      %p228 = scmp.le.s32.totalorder 1, %s22
      %p229 = scmp.lt.s32.totalorder %s22, 3
      %p230 = pnand %p228, %p229
      %p231 = pneg %p230
      // Predicated region
      $region9: #{weight_update_gru.1} parent=5 // pred_check
        _
      $region10: #{weight_update_gru.1} parent=5 // pred_check_branch
        %233 = sbr.rel (%p230) target = $region12
      $region11: #{weight_update_gru.1} parent=5 // pred_region
        %s234 = ssub.s32 %s22, 1
        // Predicated region
        $region13: #{weight_update_gru.1} parent=11 // pred_check
          %p235 = pneg %p43
        $region14: #{weight_update_gru.1} parent=11 // pred_check_branch
          %237 = sbr.rel (%p235) target = $region16
        $region15: #{weight_update_gru.1} parent=11 // pred_region
          _
        $region16: #{weight_update_gru.1} parent=11 // pred_fallthru
          _
        // Predicated region
        $region17: #{weight_update_gru.1} parent=11 // pred_check
          %p238 = pneg %p64
        $region18: #{weight_update_gru.1} parent=11 // pred_check_branch
          %240 = sbr.rel (%p238) target = $region20
        $region19: #{weight_update_gru.1} parent=11 // pred_region
          _
        $region20: #{weight_update_gru.1} parent=11 // pred_fallthru
          _
      $region12: #{weight_update_gru.1} parent=5 // pred_fallthru
        _
      %p241 = scmp.lt.s32.totalorder %s22, 2
      // Predicated region
      $region21: #{weight_update_gru.1} parent=5 // pred_check
        %p242 = pneg %p241
      $region22: #{weight_update_gru.1} parent=5 // pred_check_branch
        %244 = sbr.rel (%p242) target = $region24
      $region23: #{weight_update_gru.1} parent=5 // pred_region
        // Predicated region
        $region25: #{weight_update_gru.1} parent=23 // pred_check
          %p245 = pneg %p84
        $region26: #{weight_update_gru.1} parent=23 // pred_check_branch
          %247 = sbr.rel (%p245) target = $region28
        $region27: #{weight_update_gru.1} parent=23 // pred_region
          %s248 = smul.u32 4, %s22
          %p249 = scmp.lt.s32.totalorder %s248, 7
          %s250 = scalar_select %p249, %s248, 7
          %s251 = scalar_lea.vmem %s2, %s250
          %s252 = smul.u32 4, %s22
        $region28: #{weight_update_gru.1} parent=23 // pred_fallthru
          _
        // Predicated region
        $region29: #{weight_update_gru.1} parent=23 // pred_check
          %p253 = pneg %p110
        $region30: #{weight_update_gru.1} parent=23 // pred_check_branch
          %255 = sbr.rel (%p253) target = $region32
        $region31: #{weight_update_gru.1} parent=23 // pred_region
          %s256 = sand.u32 %s100, 1
          %s257 = scalar_lea.sflag [#allocation3], %s256
          %s258 = sand.u32 %s100, 1
          %s259 = smul.addr %s258, 192
          %s260 = scalar_lea.vmem [#allocation2], %s259
          %s261 = smul.u32 12, %s22
          %s263 = ssub.s32 3072, 3072
          %264 = vsyncadd %s257, %s263
          %s265 = smul.addr %s261, 64
          %s266 = scalar_lea.hbm %s3, %s265
          %s267 = sshll.u32 %s260, 4
          %s268 = int_to_ptr.vmem [resolvable:$true] %s267
          %273 = dma.hbm_to_vmem [thread:$0]  %s266, 3072, %s268, %s257, 1536, 768, 48
        $region32: #{weight_update_gru.1} parent=23 // pred_fallthru
          _
        // Predicated region
        $region33: #{weight_update_gru.1} parent=23 // pred_check
          %p274 = pneg %p136
        $region34: #{weight_update_gru.1} parent=23 // pred_check_branch
          %276 = sbr.rel (%p274) target = $region36
        $region35: #{weight_update_gru.1} parent=23 // pred_region
          %s277 = sand.u32 %s22, 1
          %s278 = scalar_lea.sflag [#allocation5], %s277
          %s279 = sand.u32 %s126, 1
          %s280 = smul.addr %s279, 6144
          %s281 = scalar_lea.vmem [#allocation4], %s280
          %s282 = smul.u32 12, %s22
          %s284 = ssub.s32 98304, 98304
          %285 = vsyncadd %s278, %s284
          %s286 = smul.addr %s282, 64
          %s287 = scalar_lea.hbm %s4, %s286
          %s288 = sshll.u32 %s281, 4
          %s289 = int_to_ptr.vmem [resolvable:$true] %s288
          %294 = dma.hbm_to_vmem [thread:$0]  %s287, 98304, %s289, %s278, 1536, 768, 48
        $region36: #{weight_update_gru.1} parent=23 // pred_fallthru
          _
        // Predicated region
        $region37: #{weight_update_gru.1} parent=23 // pred_check
          %p295 = pneg %p162
        $region38: #{weight_update_gru.1} parent=23 // pred_check_branch
          %297 = sbr.rel (%p295) target = $region40
        $region39: #{weight_update_gru.1} parent=23 // pred_region
          %s298 = sand.u32 %s22, 1
          %s299 = scalar_lea.sflag [#allocation5], %s298
          %s300 = sand.u32 %s152, 1
          %s301 = smul.addr %s300, 12
          %s302 = scalar_lea.vmem [#allocation6], %s301
          %s303 = smul.u32 12, %s22
          %s305 = ssub.s32 192, 192
          %306 = vsyncadd %s299, %s305
          %s307 = smul.addr %s303, 16
          %s308 = scalar_lea.hbm %s5, %s307
          %s310 = sshll.u32 %s302, 4
          %s311 = int_to_ptr.vmem [resolvable:$true] %s310
          %313 = dma.hbm_to_vmem [thread:$0]  %s308, 192, %s311, %s299
        $region40: #{weight_update_gru.1} parent=23 // pred_fallthru
          _
        // Predicated region
        $region41: #{weight_update_gru.1} parent=23 // pred_check
          %p314 = pneg %p188
        $region42: #{weight_update_gru.1} parent=23 // pred_check_branch
          %316 = sbr.rel (%p314) target = $region44
        $region43: #{weight_update_gru.1} parent=23 // pred_region
          %s317 = sand.u32 %s178, 1
          %s318 = scalar_lea.sflag [#allocation8], %s317
          %s319 = sand.u32 %s178, 1
          %s320 = smul.addr %s319, 12
          %s321 = scalar_lea.vmem [#allocation7], %s320
          %s322 = smul.u32 12, %s22
          %s324 = ssub.s32 192, 192
          %325 = vsyncadd %s318, %s324
          %s326 = smul.addr %s322, 16
          %s327 = scalar_lea.hbm %s6, %s326
          %s329 = sshll.u32 %s321, 4
          %s330 = int_to_ptr.vmem [resolvable:$true] %s329
          %332 = dma.hbm_to_vmem [thread:$0]  %s327, 192, %s330, %s318
        $region44: #{weight_update_gru.1} parent=23 // pred_fallthru
          _
      $region24: #{weight_update_gru.1} parent=5 // pred_fallthru
        _
      %p333 = scmp.le.s32.totalorder 1, %s22
      %p334 = scmp.lt.s32.totalorder %s22, 3
      %p335 = pnand %p333, %p334
      %p336 = pneg %p335
      // Predicated region
      $region45: #{weight_update_gru.1} parent=5 // pred_check
        _
      $region46: #{weight_update_gru.1} parent=5 // pred_check_branch
        %338 = sbr.rel (%p335) target = $region48
      $region47: #{weight_update_gru.1} parent=5 // pred_region
        %s339 = ssub.s32 %s22, 1
        %s340 = sand.u32 %s103, 1
        %s341 = scalar_lea.sflag [#allocation3], %s340
        %s342 = sand.u32 %s103, 1
        %s343 = smul.addr %s342, 192
        %s344 = scalar_lea.vmem [#allocation2], %s343
        // Predicated region
        $region49: #{weight_update_gru.1} parent=47 // pred_check
          %p345 = pneg %p116
        $region50: #{weight_update_gru.1} parent=47 // pred_check_branch
          %347 = sbr.rel (%p345) target = $region52
        $region51: #{weight_update_gru.1} parent=47 // pred_region
          %348 = dma.done %s341, 3072
        $region52: #{weight_update_gru.1} parent=47 // pred_fallthru
          _
        %s349 = sand.u32 %s27, 1
        %s350 = scalar_lea.sflag [#allocation5], %s349
        %s351 = sand.u32 %s129, 1
        %s352 = smul.addr %s351, 6144
        %s353 = scalar_lea.vmem [#allocation4], %s352
        // Predicated region
        $region53: #{weight_update_gru.1} parent=47 // pred_check
          %p354 = pneg %p142
        $region54: #{weight_update_gru.1} parent=47 // pred_check_branch
          %356 = sbr.rel (%p354) target = $region56
        $region55: #{weight_update_gru.1} parent=47 // pred_region
          %357 = dma.done %s350, 98304
        $region56: #{weight_update_gru.1} parent=47 // pred_fallthru
          _
        %s358 = sand.u32 %s27, 1
        %s359 = scalar_lea.sflag [#allocation5], %s358
        %s360 = sand.u32 %s155, 1
        %s361 = smul.addr %s360, 12
        %s362 = scalar_lea.vmem [#allocation6], %s361
        // Predicated region
        $region57: #{weight_update_gru.1} parent=47 // pred_check
          %p363 = pneg %p168
        $region58: #{weight_update_gru.1} parent=47 // pred_check_branch
          %365 = sbr.rel (%p363) target = $region60
        $region59: #{weight_update_gru.1} parent=47 // pred_region
          %366 = dma.done %s359, 192
        $region60: #{weight_update_gru.1} parent=47 // pred_fallthru
          _
        %s367 = sand.u32 %s181, 1
        %s368 = scalar_lea.sflag [#allocation8], %s367
        %s369 = sand.u32 %s181, 1
        %s370 = smul.addr %s369, 12
        %s371 = scalar_lea.vmem [#allocation7], %s370
        // Predicated region
        $region61: #{weight_update_gru.1} parent=47 // pred_check
          %p372 = pneg %p194
        $region62: #{weight_update_gru.1} parent=47 // pred_check_branch
          %374 = sbr.rel (%p372) target = $region64
        $region63: #{weight_update_gru.1} parent=47 // pred_region
          %375 = dma.done %s368, 192
        $region64: #{weight_update_gru.1} parent=47 // pred_fallthru
          _
        %p376 = pneg %p43
        %p377 = pneg %p40
        %p378 = pneg %p64
        %p379 = pneg %p61
        %s380 = smul.u32 4, %s27
        %p381 = scmp.lt.s32.totalorder %s380, 7
        %s382 = scalar_select %p381, %s380, 7
        %s383 = scalar_lea.vmem %s2, %s382
        %p384 = pneg %p90
        %p385 = pneg %p87
        %s386 = sand.u32 %s103, 1
        %s387 = scalar_lea.sflag [#allocation3], %s386
        %s388 = sand.u32 %s103, 1
        %s389 = smul.addr %s388, 192
        %s390 = scalar_lea.vmem [#allocation2], %s389
        %p391 = pneg %p116
        %p392 = pneg %p113
        %s393 = sand.u32 %s27, 1
        %s394 = scalar_lea.sflag [#allocation5], %s393
        %s395 = sand.u32 %s129, 1
        %s396 = smul.addr %s395, 6144
        %s397 = scalar_lea.vmem [#allocation4], %s396
        %p398 = pneg %p142
        %p399 = pneg %p139
        %s400 = sand.u32 %s27, 1
        %s401 = scalar_lea.sflag [#allocation5], %s400
        %s402 = sand.u32 %s155, 1
        %s403 = smul.addr %s402, 12
        %s404 = scalar_lea.vmem [#allocation6], %s403
        %p405 = pneg %p168
        %p406 = pneg %p165
        %s407 = sand.u32 %s181, 1
        %s408 = scalar_lea.sflag [#allocation8], %s407
        %s409 = sand.u32 %s181, 1
        %s410 = smul.addr %s409, 12
        %s411 = scalar_lea.vmem [#allocation7], %s410
        %p412 = pneg %p194
        %p413 = pneg %p191
        %p414 = pneg %p220
        %p415 = pneg %p217
        %s416 = smul.u32 4, %s27
        %p417 = scmp.lt.s32.totalorder %s416, 7
        %s418 = scalar_select %p417, %s416, 7
        %s419 = scalar_lea.vmem %s7, %s418
        %s420 = smul.u32 4, %s27
        %p421 = scmp.lt.s32.totalorder %s420, 7
        %s422 = scalar_select %p421, %s420, 7
        %s423 = scalar_lea.vmem %s2, %s422
        %s424 = smul.u32 4, %s27
        %s425 = smul.u32 12, %s27
        %s426 = smul.u32 12, %s27
        %s427 = smul.u32 12, %s27
        %s428 = smul.u32 12, %s27
        %s429 = smul.u32 4, %s27
        %p430 = scmp.lt.s32.totalorder %s429, 7
        %s431 = scalar_select %p430, %s429, 7
        %s432 = scalar_lea.vmem %s7, %s431
        %s433 = smul.u32 4, %s27
        %v435 = vld [vmem:[%s0] sm:$0x1]
        %v436 = vld [vmem:[%s344] sm:$0xff]
        %v437 = vld [vmem:[%s344 + $0x8] sm:$0xff]
        %v438 = vld [vmem:[%s344 + $0x10] sm:$0xff]
        %v439 = vld [vmem:[%s344 + $0x18] sm:$0xff]
        %v440 = vld [vmem:[%s344 + $0x20] sm:$0xff]
        %v441 = vld [vmem:[%s344 + $0x28] sm:$0xff]
        %v442 = vld [vmem:[%s344 + $0x30] sm:$0xff]
        %v443 = vld [vmem:[%s344 + $0x38] sm:$0xff]
        %v444 = vld [vmem:[%s344 + $0x40] sm:$0xff]
        %v445 = vld [vmem:[%s344 + $0x48] sm:$0xff]
        %v446 = vld [vmem:[%s344 + $0x50] sm:$0xff]
        %v447 = vld [vmem:[%s344 + $0x58] sm:$0xff]
        %v448 = vld [vmem:[%s344 + $0x60] sm:$0xff]
        %v449 = vld [vmem:[%s344 + $0x68] sm:$0xff]
        %v450 = vld [vmem:[%s344 + $0x70] sm:$0xff]
        %v451 = vld [vmem:[%s344 + $0x78] sm:$0xff]
        %v452 = vld [vmem:[%s344 + $0x80] sm:$0xff]
        %v453 = vld [vmem:[%s344 + $0x88] sm:$0xff]
        %v454 = vld [vmem:[%s344 + $0x90] sm:$0xff]
        %v455 = vld [vmem:[%s344 + $0x98] sm:$0xff]
        %v456 = vld [vmem:[%s344 + $0xa0] sm:$0xff]
        %v457 = vld [vmem:[%s344 + $0xa8] sm:$0xff]
        %v458 = vld [vmem:[%s344 + $0xb0] sm:$0xff]
        %v459 = vld [vmem:[%s344 + $0xb8] sm:$0xff]
        %v460 = vld [vmem:[%s362] sm:$0xff]
        %v461 = vld [vmem:[%s362 + $0x8] sm:$0xf]
        %v486 = vunpack.c.l.b16 %v436
        %v487 = vunpack.c.h.b16 %v436
        %v488 = vunpack.c.l.b16 %v437
        %v489 = vunpack.c.h.b16 %v437
        %v490 = vunpack.c.l.b16 %v438
        %v491 = vunpack.c.h.b16 %v438
        %v492 = vunpack.c.l.b16 %v439
        %v493 = vunpack.c.h.b16 %v439
        %v494 = vunpack.c.l.b16 %v440
        %v495 = vunpack.c.h.b16 %v440
        %v496 = vunpack.c.l.b16 %v441
        %v497 = vunpack.c.h.b16 %v441
        %v498 = vunpack.c.l.b16 %v442
        %v499 = vunpack.c.h.b16 %v442
        %v500 = vunpack.c.l.b16 %v443
        %v501 = vunpack.c.h.b16 %v443
        %v502 = vunpack.c.l.b16 %v444
        %v503 = vunpack.c.h.b16 %v444
        %v504 = vunpack.c.l.b16 %v445
        %v505 = vunpack.c.h.b16 %v445
        %v506 = vunpack.c.l.b16 %v446
        %v507 = vunpack.c.h.b16 %v446
        %v508 = vunpack.c.l.b16 %v447
        %v509 = vunpack.c.h.b16 %v447
        %v510 = vunpack.c.l.b16 %v448
        %v511 = vunpack.c.h.b16 %v448
        %v512 = vunpack.c.l.b16 %v449
        %v513 = vunpack.c.h.b16 %v449
        %v514 = vunpack.c.l.b16 %v450
        %v515 = vunpack.c.h.b16 %v450
        %v516 = vunpack.c.l.b16 %v451
        %v517 = vunpack.c.h.b16 %v451
        %v518 = vunpack.c.l.b16 %v452
        %v519 = vunpack.c.h.b16 %v452
        %v520 = vunpack.c.l.b16 %v453
        %v521 = vunpack.c.h.b16 %v453
        %v522 = vunpack.c.l.b16 %v454
        %v523 = vunpack.c.h.b16 %v454
        %v524 = vunpack.c.l.b16 %v455
        %v525 = vunpack.c.h.b16 %v455
        %v526 = vunpack.c.l.b16 %v456
        %v527 = vunpack.c.h.b16 %v456
        %v528 = vunpack.c.l.b16 %v457
        %v529 = vunpack.c.h.b16 %v457
        %v530 = vunpack.c.l.b16 %v458
        %v531 = vunpack.c.h.b16 %v458
        %v532 = vunpack.c.l.b16 %v459
        %v533 = vunpack.c.h.b16 %v459
        %v534 = vpack.c.b16 %v498, %v486
        %v535 = vpack.c.b16 %v499, %v487
        %v536 = vpack.c.b16 %v500, %v488
        %v537 = vpack.c.b16 %v501, %v489
        %v538 = vpack.c.b16 %v502, %v490
        %v539 = vpack.c.b16 %v503, %v491
        %v540 = vpack.c.b16 %v504, %v492
        %v541 = vpack.c.b16 %v505, %v493
        %v542 = vpack.c.b16 %v506, %v494
        %v543 = vpack.c.b16 %v507, %v495
        %v544 = vpack.c.b16 %v508, %v496
        %v545 = vpack.c.b16 %v509, %v497
        %v546 = vpack.c.b16 %v522, %v510
        %v547 = vpack.c.b16 %v523, %v511
        %v548 = vpack.c.b16 %v524, %v512
        %v549 = vpack.c.b16 %v525, %v513
        %v550 = vpack.c.b16 %v526, %v514
        %v551 = vpack.c.b16 %v527, %v515
        %v552 = vpack.c.b16 %v528, %v516
        %v553 = vpack.c.b16 %v529, %v517
        %v554 = vpack.c.b16 %v530, %v518
        %v555 = vpack.c.b16 %v531, %v519
        %v556 = vpack.c.b16 %v532, %v520
        %v557 = vpack.c.b16 %v533, %v521
        %v584 = vlaneseq
        %v585 = vshrl.u32 %v584, 7
        %v586 = vsub.s32 0, %v585
        %v587 = vrot.slane %v460, %v586
        %v588 = vlaneseq
        %v589 = vshrl.u32 %v588, 7
        %v590 = vsub.s32 1, %v589
        %v591 = vrot.slane %v460, %v590
        %v592 = vlaneseq
        %v593 = vshrl.u32 %v592, 7
        %v594 = vsub.s32 2, %v593
        %v595 = vrot.slane %v460, %v594
        %v596 = vlaneseq
        %v597 = vshrl.u32 %v596, 7
        %v598 = vsub.s32 3, %v597
        %v599 = vrot.slane %v460, %v598
        %v600 = vlaneseq
        %v601 = vshrl.u32 %v600, 7
        %v602 = vsub.s32 4, %v601
        %v603 = vrot.slane %v460, %v602
        %v604 = vlaneseq
        %v605 = vshrl.u32 %v604, 7
        %v606 = vsub.s32 5, %v605
        %v607 = vrot.slane %v460, %v606
        %v608 = vlaneseq
        %v609 = vshrl.u32 %v608, 7
        %v610 = vsub.s32 6, %v609
        %v611 = vrot.slane %v460, %v610
        %v612 = vlaneseq
        %v613 = vshrl.u32 %v612, 7
        %v614 = vsub.s32 7, %v613
        %v615 = vrot.slane %v460, %v614
        %v616 = vlaneseq
        %v617 = vshrl.u32 %v616, 7
        %v618 = vsub.s32 0, %v617
        %v619 = vrot.slane %v461, %v618
        %v620 = vlaneseq
        %v621 = vshrl.u32 %v620, 7
        %v622 = vsub.s32 1, %v621
        %v623 = vrot.slane %v461, %v622
        %v624 = vlaneseq
        %v625 = vshrl.u32 %v624, 7
        %v626 = vsub.s32 2, %v625
        %v627 = vrot.slane %v461, %v626
        %v628 = vlaneseq
        %v629 = vshrl.u32 %v628, 7
        %v630 = vsub.s32 3, %v629
        %v631 = vrot.slane %v461, %v630
        %vm644 = vcmask 261120
        %v646 = vsel %vm644, %v435, 0
        %648 = vmatprep.subr.bf16.mxu0 0
        %649 = vmatpush1.bf16.msra.mxu0 0
        %650 = vmatprep.subr.bf16.mxu0 0
        %651 = vmatpush1.bf16.msra.mxu0 0
        %652 = vmatprep.subr.bf16.mxu0 0
        %653 = vmatpush1.bf16.msra.mxu0 0
        %654 = vmatprep.subr.bf16.mxu0 0
        %655 = vmatpush1.bf16.msra.mxu0 0
        %656 = vmatprep.subr.bf16.mxu0 0
        %657 = vmatpush1.bf16.msra.mxu0 0
        %658 = vmatprep.subr.bf16.mxu0 0
        %659 = vmatpush1.bf16.msra.mxu0 0
        %660 = vmatprep.subr.bf16.mxu0 %v547
        %661 = vmatpush1.bf16.msra.mxu0 %v546
        %662 = vmatprep.subr.bf16.mxu0 %v535
        %663 = vmatpush1.bf16.msra.mxu0 %v534
        %664 = vmatprep.subr.bf16.mxu0 0
        %665 = vmatpush2.bf16.msra.mxu0 0
        %666 = vmatprep.subr.bf16.mxu0 0
        %667 = vmatpush2.bf16.msra.mxu0 0
        %668 = vmatprep.subr.bf16.mxu0 0
        %669 = vmatpush2.bf16.msra.mxu0 0
        %670 = vmatprep.subr.bf16.mxu0 0
        %671 = vmatpush2.bf16.msra.mxu0 0
        %672 = vmatprep.subr.bf16.mxu0 0
        %673 = vmatpush2.bf16.msra.mxu0 0
        %674 = vmatprep.subr.bf16.mxu0 0
        %675 = vmatpush2.bf16.msra.mxu0 0
        %676 = vmatprep.subr.bf16.mxu0 0
        %677 = vmatpush2.bf16.msra.mxu0 0
        %678 = vmatprep.subr.bf16.mxu0 0
        %679 = vmatpush2.bf16.msra.mxu0 0
        %680 = vmatprep.mubr.bf16.mxu0 0
        %681 = vmatmul.mubr.bf16.gmra.mxu0 %v646
        %v682 = vpop.f32.mrf.mxu0
        %v683 = vadd.f32 %v587, %v682
        %v684 = vpop.f32.mrf.mxu0
        %v685 = vadd.f32 %v591, %v684
        %v686 = vpop.f32.mrf.mxu0
        %v687 = vpop.f32.mrf.mxu0
        %688 = vdwg.mxu0
        %689 = vmatprep.subr.bf16.mxu0 0
        %690 = vmatpush1.bf16.msra.mxu0 0
        %691 = vmatprep.subr.bf16.mxu0 0
        %692 = vmatpush1.bf16.msra.mxu0 0
        %693 = vmatprep.subr.bf16.mxu0 0
        %694 = vmatpush1.bf16.msra.mxu0 0
        %695 = vmatprep.subr.bf16.mxu0 0
        %696 = vmatpush1.bf16.msra.mxu0 0
        %697 = vmatprep.subr.bf16.mxu0 0
        %698 = vmatpush1.bf16.msra.mxu0 0
        %699 = vmatprep.subr.bf16.mxu0 0
        %700 = vmatpush1.bf16.msra.mxu0 0
        %701 = vmatprep.subr.bf16.mxu0 %v549
        %702 = vmatpush1.bf16.msra.mxu0 %v548
        %703 = vmatprep.subr.bf16.mxu0 %v537
        %704 = vmatpush1.bf16.msra.mxu0 %v536
        %705 = vmatprep.subr.bf16.mxu0 0
        %706 = vmatpush2.bf16.msra.mxu0 0
        %707 = vmatprep.subr.bf16.mxu0 0
        %708 = vmatpush2.bf16.msra.mxu0 0
        %709 = vmatprep.subr.bf16.mxu0 0
        %710 = vmatpush2.bf16.msra.mxu0 0
        %711 = vmatprep.subr.bf16.mxu0 0
        %712 = vmatpush2.bf16.msra.mxu0 0
        %713 = vmatprep.subr.bf16.mxu0 0
        %714 = vmatpush2.bf16.msra.mxu0 0
        %715 = vmatprep.subr.bf16.mxu0 0
        %716 = vmatpush2.bf16.msra.mxu0 0
        %717 = vmatprep.subr.bf16.mxu0 0
        %718 = vmatpush2.bf16.msra.mxu0 0
        %719 = vmatprep.subr.bf16.mxu0 0
        %720 = vmatpush2.bf16.msra.mxu0 0
        %721 = vmatprep.mubr.bf16.mxu0 0
        %722 = vmatmul.mubr.bf16.gmra.mxu0 %v646
        %v723 = vpop.f32.mrf.mxu0
        %v724 = vadd.f32 %v595, %v723
        %v725 = vpop.f32.mrf.mxu0
        %v726 = vadd.f32 %v599, %v725
        %v727 = vpop.f32.mrf.mxu0
        %v728 = vpop.f32.mrf.mxu0
        %729 = vdwg.mxu0
        %730 = vmatprep.subr.bf16.mxu0 0
        %731 = vmatpush1.bf16.msra.mxu0 0
        %732 = vmatprep.subr.bf16.mxu0 0
        %733 = vmatpush1.bf16.msra.mxu0 0
        %734 = vmatprep.subr.bf16.mxu0 0
        %735 = vmatpush1.bf16.msra.mxu0 0
        %736 = vmatprep.subr.bf16.mxu0 0
        %737 = vmatpush1.bf16.msra.mxu0 0
        %738 = vmatprep.subr.bf16.mxu0 0
        %739 = vmatpush1.bf16.msra.mxu0 0
        %740 = vmatprep.subr.bf16.mxu0 0
        %741 = vmatpush1.bf16.msra.mxu0 0
        %742 = vmatprep.subr.bf16.mxu0 %v551
        %743 = vmatpush1.bf16.msra.mxu0 %v550
        %744 = vmatprep.subr.bf16.mxu0 %v539
        %745 = vmatpush1.bf16.msra.mxu0 %v538
        %746 = vmatprep.subr.bf16.mxu0 0
        %747 = vmatpush2.bf16.msra.mxu0 0
        %748 = vmatprep.subr.bf16.mxu0 0
        %749 = vmatpush2.bf16.msra.mxu0 0
        %750 = vmatprep.subr.bf16.mxu0 0
        %751 = vmatpush2.bf16.msra.mxu0 0
        %752 = vmatprep.subr.bf16.mxu0 0
        %753 = vmatpush2.bf16.msra.mxu0 0
        %754 = vmatprep.subr.bf16.mxu0 0
        %755 = vmatpush2.bf16.msra.mxu0 0
        %756 = vmatprep.subr.bf16.mxu0 0
        %757 = vmatpush2.bf16.msra.mxu0 0
        %758 = vmatprep.subr.bf16.mxu0 0
        %759 = vmatpush2.bf16.msra.mxu0 0
        %760 = vmatprep.subr.bf16.mxu0 0
        %761 = vmatpush2.bf16.msra.mxu0 0
        %762 = vmatprep.mubr.bf16.mxu0 0
        %763 = vmatmul.mubr.bf16.gmra.mxu0 %v646
        %v764 = vpop.f32.mrf.mxu0
        %v765 = vadd.f32 %v603, %v764
        %v766 = vpop.f32.mrf.mxu0
        %v767 = vadd.f32 %v607, %v766
        %v768 = vpop.f32.mrf.mxu0
        %v769 = vpop.f32.mrf.mxu0
        %770 = vdwg.mxu0
        %771 = vmatprep.subr.bf16.mxu0 0
        %772 = vmatpush1.bf16.msra.mxu0 0
        %773 = vmatprep.subr.bf16.mxu0 0
        %774 = vmatpush1.bf16.msra.mxu0 0
        %775 = vmatprep.subr.bf16.mxu0 0
        %776 = vmatpush1.bf16.msra.mxu0 0
        %777 = vmatprep.subr.bf16.mxu0 0
        %778 = vmatpush1.bf16.msra.mxu0 0
        %779 = vmatprep.subr.bf16.mxu0 0
        %780 = vmatpush1.bf16.msra.mxu0 0
        %781 = vmatprep.subr.bf16.mxu0 0
        %782 = vmatpush1.bf16.msra.mxu0 0
        %783 = vmatprep.subr.bf16.mxu0 %v553
        %784 = vmatpush1.bf16.msra.mxu0 %v552
        %785 = vmatprep.subr.bf16.mxu0 %v541
        %786 = vmatpush1.bf16.msra.mxu0 %v540
        %787 = vmatprep.subr.bf16.mxu0 0
        %788 = vmatpush2.bf16.msra.mxu0 0
        %789 = vmatprep.subr.bf16.mxu0 0
        %790 = vmatpush2.bf16.msra.mxu0 0
        %791 = vmatprep.subr.bf16.mxu0 0
        %792 = vmatpush2.bf16.msra.mxu0 0
        %793 = vmatprep.subr.bf16.mxu0 0
        %794 = vmatpush2.bf16.msra.mxu0 0
        %795 = vmatprep.subr.bf16.mxu0 0
        %796 = vmatpush2.bf16.msra.mxu0 0
        %797 = vmatprep.subr.bf16.mxu0 0
        %798 = vmatpush2.bf16.msra.mxu0 0
        %799 = vmatprep.subr.bf16.mxu0 0
        %800 = vmatpush2.bf16.msra.mxu0 0
        %801 = vmatprep.subr.bf16.mxu0 0
        %802 = vmatpush2.bf16.msra.mxu0 0
        %803 = vmatprep.mubr.bf16.mxu0 0
        %804 = vmatmul.mubr.bf16.gmra.mxu0 %v646
        %v805 = vpop.f32.mrf.mxu0
        %v806 = vadd.f32 %v611, %v805
        %v807 = vpop.f32.mrf.mxu0
        %v808 = vadd.f32 %v615, %v807
        %v809 = vpop.f32.mrf.mxu0
        %v810 = vpop.f32.mrf.mxu0
        %811 = vdwg.mxu0
        %812 = vmatprep.subr.bf16.mxu0 0
        %813 = vmatpush1.bf16.msra.mxu0 0
        %814 = vmatprep.subr.bf16.mxu0 0
        %815 = vmatpush1.bf16.msra.mxu0 0
        %816 = vmatprep.subr.bf16.mxu0 0
        %817 = vmatpush1.bf16.msra.mxu0 0
        %818 = vmatprep.subr.bf16.mxu0 0
        %819 = vmatpush1.bf16.msra.mxu0 0
        %820 = vmatprep.subr.bf16.mxu0 0
        %821 = vmatpush1.bf16.msra.mxu0 0
        %822 = vmatprep.subr.bf16.mxu0 0
        %823 = vmatpush1.bf16.msra.mxu0 0
        %824 = vmatprep.subr.bf16.mxu0 %v555
        %825 = vmatpush1.bf16.msra.mxu0 %v554
        %826 = vmatprep.subr.bf16.mxu0 %v543
        %827 = vmatpush1.bf16.msra.mxu0 %v542
        %828 = vmatprep.subr.bf16.mxu0 0
        %829 = vmatpush2.bf16.msra.mxu0 0
        %830 = vmatprep.subr.bf16.mxu0 0
        %831 = vmatpush2.bf16.msra.mxu0 0
        %832 = vmatprep.subr.bf16.mxu0 0
        %833 = vmatpush2.bf16.msra.mxu0 0
        %834 = vmatprep.subr.bf16.mxu0 0
        %835 = vmatpush2.bf16.msra.mxu0 0
        %836 = vmatprep.subr.bf16.mxu0 0
        %837 = vmatpush2.bf16.msra.mxu0 0
        %838 = vmatprep.subr.bf16.mxu0 0
        %839 = vmatpush2.bf16.msra.mxu0 0
        %840 = vmatprep.subr.bf16.mxu0 0
        %841 = vmatpush2.bf16.msra.mxu0 0
        %842 = vmatprep.subr.bf16.mxu0 0
        %843 = vmatpush2.bf16.msra.mxu0 0
        %844 = vmatprep.mubr.bf16.mxu0 0
        %845 = vmatmul.mubr.bf16.gmra.mxu0 %v646
        %v846 = vpop.f32.mrf.mxu0
        %v847 = vadd.f32 %v619, %v846
        %v848 = vpop.f32.mrf.mxu0
        %v849 = vadd.f32 %v623, %v848
        %v850 = vpop.f32.mrf.mxu0
        %v851 = vpop.f32.mrf.mxu0
        %852 = vdwg.mxu0
        %853 = vmatprep.subr.bf16.mxu0 0
        %854 = vmatpush1.bf16.msra.mxu0 0
        %855 = vmatprep.subr.bf16.mxu0 0
        %856 = vmatpush1.bf16.msra.mxu0 0
        %857 = vmatprep.subr.bf16.mxu0 0
        %858 = vmatpush1.bf16.msra.mxu0 0
        %859 = vmatprep.subr.bf16.mxu0 0
        %860 = vmatpush1.bf16.msra.mxu0 0
        %861 = vmatprep.subr.bf16.mxu0 0
        %862 = vmatpush1.bf16.msra.mxu0 0
        %863 = vmatprep.subr.bf16.mxu0 0
        %864 = vmatpush1.bf16.msra.mxu0 0
        %865 = vmatprep.subr.bf16.mxu0 %v557
        %866 = vmatpush1.bf16.msra.mxu0 %v556
        %867 = vmatprep.subr.bf16.mxu0 %v545
        %868 = vmatpush1.bf16.msra.mxu0 %v544
        %869 = vmatprep.subr.bf16.mxu0 0
        %870 = vmatpush2.bf16.msra.mxu0 0
        %871 = vmatprep.subr.bf16.mxu0 0
        %872 = vmatpush2.bf16.msra.mxu0 0
        %873 = vmatprep.subr.bf16.mxu0 0
        %874 = vmatpush2.bf16.msra.mxu0 0
        %875 = vmatprep.subr.bf16.mxu0 0
        %876 = vmatpush2.bf16.msra.mxu0 0
        %877 = vmatprep.subr.bf16.mxu0 0
        %878 = vmatpush2.bf16.msra.mxu0 0
        %879 = vmatprep.subr.bf16.mxu0 0
        %880 = vmatpush2.bf16.msra.mxu0 0
        %881 = vmatprep.subr.bf16.mxu0 0
        %882 = vmatpush2.bf16.msra.mxu0 0
        %883 = vmatprep.subr.bf16.mxu0 0
        %884 = vmatpush2.bf16.msra.mxu0 0
        %885 = vmatprep.mubr.bf16.mxu0 0
        %886 = vmatmul.mubr.bf16.gmra.mxu0 %v646
        %v887 = vpop.f32.mrf.mxu0
        %v888 = vadd.f32 %v627, %v887
        %v889 = vpop.f32.mrf.mxu0
        %v890 = vadd.f32 %v631, %v889
        %v891 = vpop.f32.mrf.mxu0
        %v892 = vpop.f32.mrf.mxu0
        %893 = vdwg.mxu0
        %v894 = vld [vmem:[%s1] sm:$0xff]
        %v895 = vld [vmem:[%s353] sm:$0xff]
        %v896 = vld [vmem:[%s353 + $0x8] sm:$0xff]
        %v897 = vld [vmem:[%s353 + $0x10] sm:$0xff]
        %v898 = vld [vmem:[%s353 + $0x18] sm:$0xff]
        %v899 = vld [vmem:[%s353 + $0x20] sm:$0xff]
        %v900 = vld [vmem:[%s353 + $0x28] sm:$0xff]
        %v901 = vld [vmem:[%s353 + $0x30] sm:$0xff]
        %v902 = vld [vmem:[%s353 + $0x38] sm:$0xff]
        %v903 = vld [vmem:[%s353 + $0x40] sm:$0xff]
        %v904 = vld [vmem:[%s353 + $0x48] sm:$0xff]
        %v905 = vld [vmem:[%s353 + $0x50] sm:$0xff]
        %v906 = vld [vmem:[%s353 + $0x58] sm:$0xff]
        %v907 = vld [vmem:[%s353 + $0x60] sm:$0xff]
        %v908 = vld [vmem:[%s353 + $0x68] sm:$0xff]
        %v909 = vld [vmem:[%s353 + $0x70] sm:$0xff]
        %v910 = vld [vmem:[%s353 + $0x78] sm:$0xff]
        %v911 = vld [vmem:[%s353 + $0x80] sm:$0xff]
        %v912 = vld [vmem:[%s353 + $0x88] sm:$0xff]
        %v913 = vld [vmem:[%s353 + $0x90] sm:$0xff]
        %v914 = vld [vmem:[%s353 + $0x98] sm:$0xff]
        %v915 = vld [vmem:[%s353 + $0xa0] sm:$0xff]
        %v916 = vld [vmem:[%s353 + $0xa8] sm:$0xff]
        %v917 = vld [vmem:[%s353 + $0xb0] sm:$0xff]
        %v918 = vld [vmem:[%s353 + $0xb8] sm:$0xff]
        %v919 = vld [vmem:[%s353 + $0xc0] sm:$0xff]
        %v920 = vld [vmem:[%s353 + $0xc8] sm:$0xff]
        %v921 = vld [vmem:[%s353 + $0xd0] sm:$0xff]
        %v922 = vld [vmem:[%s353 + $0xd8] sm:$0xff]
        %v923 = vld [vmem:[%s353 + $0xe0] sm:$0xff]
        %v924 = vld [vmem:[%s353 + $0xe8] sm:$0xff]
        %v925 = vld [vmem:[%s353 + $0xf0] sm:$0xff]
        %v926 = vld [vmem:[%s353 + $0xf8] sm:$0xff]
        %v927 = vld [vmem:[%s353 + $0x100] sm:$0xff]
        %v928 = vld [vmem:[%s353 + $0x108] sm:$0xff]
        %v929 = vld [vmem:[%s353 + $0x110] sm:$0xff]
        %v930 = vld [vmem:[%s353 + $0x118] sm:$0xff]
        %v931 = vld [vmem:[%s353 + $0x120] sm:$0xff]
        %v932 = vld [vmem:[%s353 + $0x128] sm:$0xff]
        %v933 = vld [vmem:[%s353 + $0x130] sm:$0xff]
        %v934 = vld [vmem:[%s353 + $0x138] sm:$0xff]
        %v935 = vld [vmem:[%s353 + $0x140] sm:$0xff]
        %v936 = vld [vmem:[%s353 + $0x148] sm:$0xff]
        %v937 = vld [vmem:[%s353 + $0x150] sm:$0xff]
        %v938 = vld [vmem:[%s353 + $0x158] sm:$0xff]
        %v939 = vld [vmem:[%s353 + $0x160] sm:$0xff]
        %v940 = vld [vmem:[%s353 + $0x168] sm:$0xff]
        %v941 = vld [vmem:[%s353 + $0x170] sm:$0xff]
        %v942 = vld [vmem:[%s353 + $0x178] sm:$0xff]
        %v943 = vld [vmem:[%s353 + $0x180] sm:$0xff]
        %v944 = vld [vmem:[%s353 + $0x188] sm:$0xff]
        %v945 = vld [vmem:[%s353 + $0x190] sm:$0xff]
        %v946 = vld [vmem:[%s353 + $0x198] sm:$0xff]
        %v947 = vld [vmem:[%s353 + $0x1a0] sm:$0xff]
        %v948 = vld [vmem:[%s353 + $0x1a8] sm:$0xff]
        %v949 = vld [vmem:[%s353 + $0x1b0] sm:$0xff]
        %v950 = vld [vmem:[%s353 + $0x1b8] sm:$0xff]
        %v951 = vld [vmem:[%s353 + $0x1c0] sm:$0xff]
        %v952 = vld [vmem:[%s353 + $0x1c8] sm:$0xff]
        %v953 = vld [vmem:[%s353 + $0x1d0] sm:$0xff]
        %v954 = vld [vmem:[%s353 + $0x1d8] sm:$0xff]
        %v955 = vld [vmem:[%s353 + $0x1e0] sm:$0xff]
        %v956 = vld [vmem:[%s353 + $0x1e8] sm:$0xff]
        %v957 = vld [vmem:[%s353 + $0x1f0] sm:$0xff]
        %v958 = vld [vmem:[%s353 + $0x1f8] sm:$0xff]
        %v959 = vld [vmem:[%s353 + $0x200] sm:$0xff]
        %v960 = vld [vmem:[%s353 + $0x208] sm:$0xff]
        %v961 = vld [vmem:[%s353 + $0x210] sm:$0xff]
        %v962 = vld [vmem:[%s353 + $0x218] sm:$0xff]
        %v963 = vld [vmem:[%s353 + $0x220] sm:$0xff]
        %v964 = vld [vmem:[%s353 + $0x228] sm:$0xff]
        %v965 = vld [vmem:[%s353 + $0x230] sm:$0xff]
        %v966 = vld [vmem:[%s353 + $0x238] sm:$0xff]
        %v967 = vld [vmem:[%s353 + $0x240] sm:$0xff]
        %v968 = vld [vmem:[%s353 + $0x248] sm:$0xff]
        %v969 = vld [vmem:[%s353 + $0x250] sm:$0xff]
        %v970 = vld [vmem:[%s353 + $0x258] sm:$0xff]
        %v971 = vld [vmem:[%s353 + $0x260] sm:$0xff]
        %v972 = vld [vmem:[%s353 + $0x268] sm:$0xff]
        %v973 = vld [vmem:[%s353 + $0x270] sm:$0xff]
        %v974 = vld [vmem:[%s353 + $0x278] sm:$0xff]
        %v975 = vld [vmem:[%s353 + $0x280] sm:$0xff]
        %v976 = vld [vmem:[%s353 + $0x288] sm:$0xff]
        %v977 = vld [vmem:[%s353 + $0x290] sm:$0xff]
        %v978 = vld [vmem:[%s353 + $0x298] sm:$0xff]
        %v979 = vld [vmem:[%s353 + $0x2a0] sm:$0xff]
        %v980 = vld [vmem:[%s353 + $0x2a8] sm:$0xff]
        %v981 = vld [vmem:[%s353 + $0x2b0] sm:$0xff]
        %v982 = vld [vmem:[%s353 + $0x2b8] sm:$0xff]
        %v983 = vld [vmem:[%s353 + $0x2c0] sm:$0xff]
        %v984 = vld [vmem:[%s353 + $0x2c8] sm:$0xff]
        %v985 = vld [vmem:[%s353 + $0x2d0] sm:$0xff]
        %v986 = vld [vmem:[%s353 + $0x2d8] sm:$0xff]
        %v987 = vld [vmem:[%s353 + $0x2e0] sm:$0xff]
        %v988 = vld [vmem:[%s353 + $0x2e8] sm:$0xff]
        %v989 = vld [vmem:[%s353 + $0x2f0] sm:$0xff]
        %v990 = vld [vmem:[%s353 + $0x2f8] sm:$0xff]
        %v991 = vld [vmem:[%s353 + $0x300] sm:$0xff]
        %v992 = vld [vmem:[%s353 + $0x308] sm:$0xff]
        %v993 = vld [vmem:[%s353 + $0x310] sm:$0xff]
        %v994 = vld [vmem:[%s353 + $0x318] sm:$0xff]
        %v995 = vld [vmem:[%s353 + $0x320] sm:$0xff]
        %v996 = vld [vmem:[%s353 + $0x328] sm:$0xff]
        %v997 = vld [vmem:[%s353 + $0x330] sm:$0xff]
        %v998 = vld [vmem:[%s353 + $0x338] sm:$0xff]
        %v999 = vld [vmem:[%s353 + $0x340] sm:$0xff]
        %v1000 = vld [vmem:[%s353 + $0x348] sm:$0xff]
        %v1001 = vld [vmem:[%s353 + $0x350] sm:$0xff]
        %v1002 = vld [vmem:[%s353 + $0x358] sm:$0xff]
        %v1003 = vld [vmem:[%s353 + $0x360] sm:$0xff]
        %v1004 = vld [vmem:[%s353 + $0x368] sm:$0xff]
        %v1005 = vld [vmem:[%s353 + $0x370] sm:$0xff]
        %v1006 = vld [vmem:[%s353 + $0x378] sm:$0xff]
        %v1007 = vld [vmem:[%s353 + $0x380] sm:$0xff]
        %v1008 = vld [vmem:[%s353 + $0x388] sm:$0xff]
        %v1009 = vld [vmem:[%s353 + $0x390] sm:$0xff]
        %v1010 = vld [vmem:[%s353 + $0x398] sm:$0xff]
        %v1011 = vld [vmem:[%s353 + $0x3a0] sm:$0xff]
        %v1012 = vld [vmem:[%s353 + $0x3a8] sm:$0xff]
        %v1013 = vld [vmem:[%s353 + $0x3b0] sm:$0xff]
        %v1014 = vld [vmem:[%s353 + $0x3b8] sm:$0xff]
        %v1015 = vld [vmem:[%s353 + $0x3c0] sm:$0xff]
        %v1016 = vld [vmem:[%s353 + $0x3c8] sm:$0xff]
        %v1017 = vld [vmem:[%s353 + $0x3d0] sm:$0xff]
        %v1018 = vld [vmem:[%s353 + $0x3d8] sm:$0xff]
        %v1019 = vld [vmem:[%s353 + $0x3e0] sm:$0xff]
        %v1020 = vld [vmem:[%s353 + $0x3e8] sm:$0xff]
        %v1021 = vld [vmem:[%s353 + $0x3f0] sm:$0xff]
        %v1022 = vld [vmem:[%s353 + $0x3f8] sm:$0xff]
        %v1023 = vld [vmem:[%s353 + $0x400] sm:$0xff]
        %v1024 = vld [vmem:[%s353 + $0x408] sm:$0xff]
        %v1025 = vld [vmem:[%s353 + $0x410] sm:$0xff]
        %v1026 = vld [vmem:[%s353 + $0x418] sm:$0xff]
        %v1027 = vld [vmem:[%s353 + $0x420] sm:$0xff]
        %v1028 = vld [vmem:[%s353 + $0x428] sm:$0xff]
        %v1029 = vld [vmem:[%s353 + $0x430] sm:$0xff]
        %v1030 = vld [vmem:[%s353 + $0x438] sm:$0xff]
        %v1031 = vld [vmem:[%s353 + $0x440] sm:$0xff]
        %v1032 = vld [vmem:[%s353 + $0x448] sm:$0xff]
        %v1033 = vld [vmem:[%s353 + $0x450] sm:$0xff]
        %v1034 = vld [vmem:[%s353 + $0x458] sm:$0xff]
        %v1035 = vld [vmem:[%s353 + $0x460] sm:$0xff]
        %v1036 = vld [vmem:[%s353 + $0x468] sm:$0xff]
        %v1037 = vld [vmem:[%s353 + $0x470] sm:$0xff]
        %v1038 = vld [vmem:[%s353 + $0x478] sm:$0xff]
        %v1039 = vld [vmem:[%s353 + $0x480] sm:$0xff]
        %v1040 = vld [vmem:[%s353 + $0x488] sm:$0xff]
        %v1041 = vld [vmem:[%s353 + $0x490] sm:$0xff]
        %v1042 = vld [vmem:[%s353 + $0x498] sm:$0xff]
        %v1043 = vld [vmem:[%s353 + $0x4a0] sm:$0xff]
        %v1044 = vld [vmem:[%s353 + $0x4a8] sm:$0xff]
        %v1045 = vld [vmem:[%s353 + $0x4b0] sm:$0xff]
        %v1046 = vld [vmem:[%s353 + $0x4b8] sm:$0xff]
        %v1047 = vld [vmem:[%s353 + $0x4c0] sm:$0xff]
        %v1048 = vld [vmem:[%s353 + $0x4c8] sm:$0xff]
        %v1049 = vld [vmem:[%s353 + $0x4d0] sm:$0xff]
        %v1050 = vld [vmem:[%s353 + $0x4d8] sm:$0xff]
        %v1051 = vld [vmem:[%s353 + $0x4e0] sm:$0xff]
        %v1052 = vld [vmem:[%s353 + $0x4e8] sm:$0xff]
        %v1053 = vld [vmem:[%s353 + $0x4f0] sm:$0xff]
        %v1054 = vld [vmem:[%s353 + $0x4f8] sm:$0xff]
        %v1055 = vld [vmem:[%s353 + $0x500] sm:$0xff]
        %v1056 = vld [vmem:[%s353 + $0x508] sm:$0xff]
        %v1057 = vld [vmem:[%s353 + $0x510] sm:$0xff]
        %v1058 = vld [vmem:[%s353 + $0x518] sm:$0xff]
        %v1059 = vld [vmem:[%s353 + $0x520] sm:$0xff]
        %v1060 = vld [vmem:[%s353 + $0x528] sm:$0xff]
        %v1061 = vld [vmem:[%s353 + $0x530] sm:$0xff]
        %v1062 = vld [vmem:[%s353 + $0x538] sm:$0xff]
        %v1063 = vld [vmem:[%s353 + $0x540] sm:$0xff]
        %v1064 = vld [vmem:[%s353 + $0x548] sm:$0xff]
        %v1065 = vld [vmem:[%s353 + $0x550] sm:$0xff]
        %v1066 = vld [vmem:[%s353 + $0x558] sm:$0xff]
        %v1067 = vld [vmem:[%s353 + $0x560] sm:$0xff]
        %v1068 = vld [vmem:[%s353 + $0x568] sm:$0xff]
        %v1069 = vld [vmem:[%s353 + $0x570] sm:$0xff]
        %v1070 = vld [vmem:[%s353 + $0x578] sm:$0xff]
        %v1071 = vld [vmem:[%s353 + $0x580] sm:$0xff]
        %v1072 = vld [vmem:[%s353 + $0x588] sm:$0xff]
        %v1073 = vld [vmem:[%s353 + $0x590] sm:$0xff]
        %v1074 = vld [vmem:[%s353 + $0x598] sm:$0xff]
        %v1075 = vld [vmem:[%s353 + $0x5a0] sm:$0xff]
        %v1076 = vld [vmem:[%s353 + $0x5a8] sm:$0xff]
        %v1077 = vld [vmem:[%s353 + $0x5b0] sm:$0xff]
        %v1078 = vld [vmem:[%s353 + $0x5b8] sm:$0xff]
        %v1079 = vld [vmem:[%s353 + $0x5c0] sm:$0xff]
        %v1080 = vld [vmem:[%s353 + $0x5c8] sm:$0xff]
        %v1081 = vld [vmem:[%s353 + $0x5d0] sm:$0xff]
        %v1082 = vld [vmem:[%s353 + $0x5d8] sm:$0xff]
        %v1083 = vld [vmem:[%s353 + $0x5e0] sm:$0xff]
        %v1084 = vld [vmem:[%s353 + $0x5e8] sm:$0xff]
        %v1085 = vld [vmem:[%s353 + $0x5f0] sm:$0xff]
        %v1086 = vld [vmem:[%s353 + $0x5f8] sm:$0xff]
        %v1087 = vld [vmem:[%s353 + $0x600] sm:$0xff]
        %v1088 = vld [vmem:[%s353 + $0x608] sm:$0xff]
        %v1089 = vld [vmem:[%s353 + $0x610] sm:$0xff]
        %v1090 = vld [vmem:[%s353 + $0x618] sm:$0xff]
        %v1091 = vld [vmem:[%s353 + $0x620] sm:$0xff]
        %v1092 = vld [vmem:[%s353 + $0x628] sm:$0xff]
        %v1093 = vld [vmem:[%s353 + $0x630] sm:$0xff]
        %v1094 = vld [vmem:[%s353 + $0x638] sm:$0xff]
        %v1095 = vld [vmem:[%s353 + $0x640] sm:$0xff]
        %v1096 = vld [vmem:[%s353 + $0x648] sm:$0xff]
        %v1097 = vld [vmem:[%s353 + $0x650] sm:$0xff]
        %v1098 = vld [vmem:[%s353 + $0x658] sm:$0xff]
        %v1099 = vld [vmem:[%s353 + $0x660] sm:$0xff]
        %v1100 = vld [vmem:[%s353 + $0x668] sm:$0xff]
        %v1101 = vld [vmem:[%s353 + $0x670] sm:$0xff]
        %v1102 = vld [vmem:[%s353 + $0x678] sm:$0xff]
        %v1103 = vld [vmem:[%s353 + $0x680] sm:$0xff]
        %v1104 = vld [vmem:[%s353 + $0x688] sm:$0xff]
        %v1105 = vld [vmem:[%s353 + $0x690] sm:$0xff]
        %v1106 = vld [vmem:[%s353 + $0x698] sm:$0xff]
        %v1107 = vld [vmem:[%s353 + $0x6a0] sm:$0xff]
        %v1108 = vld [vmem:[%s353 + $0x6a8] sm:$0xff]
        %v1109 = vld [vmem:[%s353 + $0x6b0] sm:$0xff]
        %v1110 = vld [vmem:[%s353 + $0x6b8] sm:$0xff]
        %v1111 = vld [vmem:[%s353 + $0x6c0] sm:$0xff]
        %v1112 = vld [vmem:[%s353 + $0x6c8] sm:$0xff]
        %v1113 = vld [vmem:[%s353 + $0x6d0] sm:$0xff]
        %v1114 = vld [vmem:[%s353 + $0x6d8] sm:$0xff]
        %v1115 = vld [vmem:[%s353 + $0x6e0] sm:$0xff]
        %v1116 = vld [vmem:[%s353 + $0x6e8] sm:$0xff]
        %v1117 = vld [vmem:[%s353 + $0x6f0] sm:$0xff]
        %v1118 = vld [vmem:[%s353 + $0x6f8] sm:$0xff]
        %v1119 = vld [vmem:[%s353 + $0x700] sm:$0xff]
        %v1120 = vld [vmem:[%s353 + $0x708] sm:$0xff]
        %v1121 = vld [vmem:[%s353 + $0x710] sm:$0xff]
        %v1122 = vld [vmem:[%s353 + $0x718] sm:$0xff]
        %v1123 = vld [vmem:[%s353 + $0x720] sm:$0xff]
        %v1124 = vld [vmem:[%s353 + $0x728] sm:$0xff]
        %v1125 = vld [vmem:[%s353 + $0x730] sm:$0xff]
        %v1126 = vld [vmem:[%s353 + $0x738] sm:$0xff]
        %v1127 = vld [vmem:[%s353 + $0x740] sm:$0xff]
        %v1128 = vld [vmem:[%s353 + $0x748] sm:$0xff]
        %v1129 = vld [vmem:[%s353 + $0x750] sm:$0xff]
        %v1130 = vld [vmem:[%s353 + $0x758] sm:$0xff]
        %v1131 = vld [vmem:[%s353 + $0x760] sm:$0xff]
        %v1132 = vld [vmem:[%s353 + $0x768] sm:$0xff]
        %v1133 = vld [vmem:[%s353 + $0x770] sm:$0xff]
        %v1134 = vld [vmem:[%s353 + $0x778] sm:$0xff]
        %v1135 = vld [vmem:[%s353 + $0x780] sm:$0xff]
        %v1136 = vld [vmem:[%s353 + $0x788] sm:$0xff]
        %v1137 = vld [vmem:[%s353 + $0x790] sm:$0xff]
        %v1138 = vld [vmem:[%s353 + $0x798] sm:$0xff]
        %v1139 = vld [vmem:[%s353 + $0x7a0] sm:$0xff]
        %v1140 = vld [vmem:[%s353 + $0x7a8] sm:$0xff]
        %v1141 = vld [vmem:[%s353 + $0x7b0] sm:$0xff]
        %v1142 = vld [vmem:[%s353 + $0x7b8] sm:$0xff]
        %v1143 = vld [vmem:[%s353 + $0x7c0] sm:$0xff]
        %v1144 = vld [vmem:[%s353 + $0x7c8] sm:$0xff]
        %v1145 = vld [vmem:[%s353 + $0x7d0] sm:$0xff]
        %v1146 = vld [vmem:[%s353 + $0x7d8] sm:$0xff]
        %v1147 = vld [vmem:[%s353 + $0x7e0] sm:$0xff]
        %v1148 = vld [vmem:[%s353 + $0x7e8] sm:$0xff]
        %v1149 = vld [vmem:[%s353 + $0x7f0] sm:$0xff]
        %v1150 = vld [vmem:[%s353 + $0x7f8] sm:$0xff]
        %v1151 = vld [vmem:[%s353 + $0x800] sm:$0xff]
        %v1152 = vld [vmem:[%s353 + $0x808] sm:$0xff]
        %v1153 = vld [vmem:[%s353 + $0x810] sm:$0xff]
        %v1154 = vld [vmem:[%s353 + $0x818] sm:$0xff]
        %v1155 = vld [vmem:[%s353 + $0x820] sm:$0xff]
        %v1156 = vld [vmem:[%s353 + $0x828] sm:$0xff]
        %v1157 = vld [vmem:[%s353 + $0x830] sm:$0xff]
        %v1158 = vld [vmem:[%s353 + $0x838] sm:$0xff]
        %v1159 = vld [vmem:[%s353 + $0x840] sm:$0xff]
        %v1160 = vld [vmem:[%s353 + $0x848] sm:$0xff]
        %v1161 = vld [vmem:[%s353 + $0x850] sm:$0xff]
        %v1162 = vld [vmem:[%s353 + $0x858] sm:$0xff]
        %v1163 = vld [vmem:[%s353 + $0x860] sm:$0xff]
        %v1164 = vld [vmem:[%s353 + $0x868] sm:$0xff]
        %v1165 = vld [vmem:[%s353 + $0x870] sm:$0xff]
        %v1166 = vld [vmem:[%s353 + $0x878] sm:$0xff]
        %v1167 = vld [vmem:[%s353 + $0x880] sm:$0xff]
        %v1168 = vld [vmem:[%s353 + $0x888] sm:$0xff]
        %v1169 = vld [vmem:[%s353 + $0x890] sm:$0xff]
        %v1170 = vld [vmem:[%s353 + $0x898] sm:$0xff]
        %v1171 = vld [vmem:[%s353 + $0x8a0] sm:$0xff]
        %v1172 = vld [vmem:[%s353 + $0x8a8] sm:$0xff]
        %v1173 = vld [vmem:[%s353 + $0x8b0] sm:$0xff]
        %v1174 = vld [vmem:[%s353 + $0x8b8] sm:$0xff]
        %v1175 = vld [vmem:[%s353 + $0x8c0] sm:$0xff]
        %v1176 = vld [vmem:[%s353 + $0x8c8] sm:$0xff]
        %v1177 = vld [vmem:[%s353 + $0x8d0] sm:$0xff]
        %v1178 = vld [vmem:[%s353 + $0x8d8] sm:$0xff]
        %v1179 = vld [vmem:[%s353 + $0x8e0] sm:$0xff]
        %v1180 = vld [vmem:[%s353 + $0x8e8] sm:$0xff]
        %v1181 = vld [vmem:[%s353 + $0x8f0] sm:$0xff]
        %v1182 = vld [vmem:[%s353 + $0x8f8] sm:$0xff]
        %v1183 = vld [vmem:[%s353 + $0x900] sm:$0xff]
        %v1184 = vld [vmem:[%s353 + $0x908] sm:$0xff]
        %v1185 = vld [vmem:[%s353 + $0x910] sm:$0xff]
        %v1186 = vld [vmem:[%s353 + $0x918] sm:$0xff]
        %v1187 = vld [vmem:[%s353 + $0x920] sm:$0xff]
        %v1188 = vld [vmem:[%s353 + $0x928] sm:$0xff]
        %v1189 = vld [vmem:[%s353 + $0x930] sm:$0xff]
        %v1190 = vld [vmem:[%s353 + $0x938] sm:$0xff]
        %v1191 = vld [vmem:[%s353 + $0x940] sm:$0xff]
        %v1192 = vld [vmem:[%s353 + $0x948] sm:$0xff]
        %v1193 = vld [vmem:[%s353 + $0x950] sm:$0xff]
        %v1194 = vld [vmem:[%s353 + $0x958] sm:$0xff]
        %v1195 = vld [vmem:[%s353 + $0x960] sm:$0xff]
        %v1196 = vld [vmem:[%s353 + $0x968] sm:$0xff]
        %v1197 = vld [vmem:[%s353 + $0x970] sm:$0xff]
        %v1198 = vld [vmem:[%s353 + $0x978] sm:$0xff]
        %v1199 = vld [vmem:[%s353 + $0x980] sm:$0xff]
        %v1200 = vld [vmem:[%s353 + $0x988] sm:$0xff]
        %v1201 = vld [vmem:[%s353 + $0x990] sm:$0xff]
        %v1202 = vld [vmem:[%s353 + $0x998] sm:$0xff]
        %v1203 = vld [vmem:[%s353 + $0x9a0] sm:$0xff]
        %v1204 = vld [vmem:[%s353 + $0x9a8] sm:$0xff]
        %v1205 = vld [vmem:[%s353 + $0x9b0] sm:$0xff]
        %v1206 = vld [vmem:[%s353 + $0x9b8] sm:$0xff]
        %v1207 = vld [vmem:[%s353 + $0x9c0] sm:$0xff]
        %v1208 = vld [vmem:[%s353 + $0x9c8] sm:$0xff]
        %v1209 = vld [vmem:[%s353 + $0x9d0] sm:$0xff]
        %v1210 = vld [vmem:[%s353 + $0x9d8] sm:$0xff]
        %v1211 = vld [vmem:[%s353 + $0x9e0] sm:$0xff]
        %v1212 = vld [vmem:[%s353 + $0x9e8] sm:$0xff]
        %v1213 = vld [vmem:[%s353 + $0x9f0] sm:$0xff]
        %v1214 = vld [vmem:[%s353 + $0x9f8] sm:$0xff]
        %v1215 = vld [vmem:[%s353 + $0xa00] sm:$0xff]
        %v1216 = vld [vmem:[%s353 + $0xa08] sm:$0xff]
        %v1217 = vld [vmem:[%s353 + $0xa10] sm:$0xff]
        %v1218 = vld [vmem:[%s353 + $0xa18] sm:$0xff]
        %v1219 = vld [vmem:[%s353 + $0xa20] sm:$0xff]
        %v1220 = vld [vmem:[%s353 + $0xa28] sm:$0xff]
        %v1221 = vld [vmem:[%s353 + $0xa30] sm:$0xff]
        %v1222 = vld [vmem:[%s353 + $0xa38] sm:$0xff]
        %v1223 = vld [vmem:[%s353 + $0xa40] sm:$0xff]
        %v1224 = vld [vmem:[%s353 + $0xa48] sm:$0xff]
        %v1225 = vld [vmem:[%s353 + $0xa50] sm:$0xff]
        %v1226 = vld [vmem:[%s353 + $0xa58] sm:$0xff]
        %v1227 = vld [vmem:[%s353 + $0xa60] sm:$0xff]
        %v1228 = vld [vmem:[%s353 + $0xa68] sm:$0xff]
        %v1229 = vld [vmem:[%s353 + $0xa70] sm:$0xff]
        %v1230 = vld [vmem:[%s353 + $0xa78] sm:$0xff]
        %v1231 = vld [vmem:[%s353 + $0xa80] sm:$0xff]
        %v1232 = vld [vmem:[%s353 + $0xa88] sm:$0xff]
        %v1233 = vld [vmem:[%s353 + $0xa90] sm:$0xff]
        %v1234 = vld [vmem:[%s353 + $0xa98] sm:$0xff]
        %v1235 = vld [vmem:[%s353 + $0xaa0] sm:$0xff]
        %v1236 = vld [vmem:[%s353 + $0xaa8] sm:$0xff]
        %v1237 = vld [vmem:[%s353 + $0xab0] sm:$0xff]
        %v1238 = vld [vmem:[%s353 + $0xab8] sm:$0xff]
        %v1239 = vld [vmem:[%s353 + $0xac0] sm:$0xff]
        %v1240 = vld [vmem:[%s353 + $0xac8] sm:$0xff]
        %v1241 = vld [vmem:[%s353 + $0xad0] sm:$0xff]
        %v1242 = vld [vmem:[%s353 + $0xad8] sm:$0xff]
        %v1243 = vld [vmem:[%s353 + $0xae0] sm:$0xff]
        %v1244 = vld [vmem:[%s353 + $0xae8] sm:$0xff]
        %v1245 = vld [vmem:[%s353 + $0xaf0] sm:$0xff]
        %v1246 = vld [vmem:[%s353 + $0xaf8] sm:$0xff]
        %v1247 = vld [vmem:[%s353 + $0xb00] sm:$0xff]
        %v1248 = vld [vmem:[%s353 + $0xb08] sm:$0xff]
        %v1249 = vld [vmem:[%s353 + $0xb10] sm:$0xff]
        %v1250 = vld [vmem:[%s353 + $0xb18] sm:$0xff]
        %v1251 = vld [vmem:[%s353 + $0xb20] sm:$0xff]
        %v1252 = vld [vmem:[%s353 + $0xb28] sm:$0xff]
        %v1253 = vld [vmem:[%s353 + $0xb30] sm:$0xff]
        %v1254 = vld [vmem:[%s353 + $0xb38] sm:$0xff]
        %v1255 = vld [vmem:[%s353 + $0xb40] sm:$0xff]
        %v1256 = vld [vmem:[%s353 + $0xb48] sm:$0xff]
        %v1257 = vld [vmem:[%s353 + $0xb50] sm:$0xff]
        %v1258 = vld [vmem:[%s353 + $0xb58] sm:$0xff]
        %v1259 = vld [vmem:[%s353 + $0xb60] sm:$0xff]
        %v1260 = vld [vmem:[%s353 + $0xb68] sm:$0xff]
        %v1261 = vld [vmem:[%s353 + $0xb70] sm:$0xff]
        %v1262 = vld [vmem:[%s353 + $0xb78] sm:$0xff]
        %v1263 = vld [vmem:[%s353 + $0xb80] sm:$0xff]
        %v1264 = vld [vmem:[%s353 + $0xb88] sm:$0xff]
        %v1265 = vld [vmem:[%s353 + $0xb90] sm:$0xff]
        %v1266 = vld [vmem:[%s353 + $0xb98] sm:$0xff]
        %v1267 = vld [vmem:[%s353 + $0xba0] sm:$0xff]
        %v1268 = vld [vmem:[%s353 + $0xba8] sm:$0xff]
        %v1269 = vld [vmem:[%s353 + $0xbb0] sm:$0xff]
        %v1270 = vld [vmem:[%s353 + $0xbb8] sm:$0xff]
        %v1271 = vld [vmem:[%s353 + $0xbc0] sm:$0xff]
        %v1272 = vld [vmem:[%s353 + $0xbc8] sm:$0xff]
        %v1273 = vld [vmem:[%s353 + $0xbd0] sm:$0xff]
        %v1274 = vld [vmem:[%s353 + $0xbd8] sm:$0xff]
        %v1275 = vld [vmem:[%s353 + $0xbe0] sm:$0xff]
        %v1276 = vld [vmem:[%s353 + $0xbe8] sm:$0xff]
        %v1277 = vld [vmem:[%s353 + $0xbf0] sm:$0xff]
        %v1278 = vld [vmem:[%s353 + $0xbf8] sm:$0xff]
        %v1279 = vld [vmem:[%s353 + $0xc00] sm:$0xff]
        %v1280 = vld [vmem:[%s353 + $0xc08] sm:$0xff]
        %v1281 = vld [vmem:[%s353 + $0xc10] sm:$0xff]
        %v1282 = vld [vmem:[%s353 + $0xc18] sm:$0xff]
        %v1283 = vld [vmem:[%s353 + $0xc20] sm:$0xff]
        %v1284 = vld [vmem:[%s353 + $0xc28] sm:$0xff]
        %v1285 = vld [vmem:[%s353 + $0xc30] sm:$0xff]
        %v1286 = vld [vmem:[%s353 + $0xc38] sm:$0xff]
        %v1287 = vld [vmem:[%s353 + $0xc40] sm:$0xff]
        %v1288 = vld [vmem:[%s353 + $0xc48] sm:$0xff]
        %v1289 = vld [vmem:[%s353 + $0xc50] sm:$0xff]
        %v1290 = vld [vmem:[%s353 + $0xc58] sm:$0xff]
        %v1291 = vld [vmem:[%s353 + $0xc60] sm:$0xff]
        %v1292 = vld [vmem:[%s353 + $0xc68] sm:$0xff]
        %v1293 = vld [vmem:[%s353 + $0xc70] sm:$0xff]
        %v1294 = vld [vmem:[%s353 + $0xc78] sm:$0xff]
        %v1295 = vld [vmem:[%s353 + $0xc80] sm:$0xff]
        %v1296 = vld [vmem:[%s353 + $0xc88] sm:$0xff]
        %v1297 = vld [vmem:[%s353 + $0xc90] sm:$0xff]
        %v1298 = vld [vmem:[%s353 + $0xc98] sm:$0xff]
        %v1299 = vld [vmem:[%s353 + $0xca0] sm:$0xff]
        %v1300 = vld [vmem:[%s353 + $0xca8] sm:$0xff]
        %v1301 = vld [vmem:[%s353 + $0xcb0] sm:$0xff]
        %v1302 = vld [vmem:[%s353 + $0xcb8] sm:$0xff]
        %v1303 = vld [vmem:[%s353 + $0xcc0] sm:$0xff]
        %v1304 = vld [vmem:[%s353 + $0xcc8] sm:$0xff]
        %v1305 = vld [vmem:[%s353 + $0xcd0] sm:$0xff]
        %v1306 = vld [vmem:[%s353 + $0xcd8] sm:$0xff]
        %v1307 = vld [vmem:[%s353 + $0xce0] sm:$0xff]
        %v1308 = vld [vmem:[%s353 + $0xce8] sm:$0xff]
        %v1309 = vld [vmem:[%s353 + $0xcf0] sm:$0xff]
        %v1310 = vld [vmem:[%s353 + $0xcf8] sm:$0xff]
        %v1311 = vld [vmem:[%s353 + $0xd00] sm:$0xff]
        %v1312 = vld [vmem:[%s353 + $0xd08] sm:$0xff]
        %v1313 = vld [vmem:[%s353 + $0xd10] sm:$0xff]
        %v1314 = vld [vmem:[%s353 + $0xd18] sm:$0xff]
        %v1315 = vld [vmem:[%s353 + $0xd20] sm:$0xff]
        %v1316 = vld [vmem:[%s353 + $0xd28] sm:$0xff]
        %v1317 = vld [vmem:[%s353 + $0xd30] sm:$0xff]
        %v1318 = vld [vmem:[%s353 + $0xd38] sm:$0xff]
        %v1319 = vld [vmem:[%s353 + $0xd40] sm:$0xff]
        %v1320 = vld [vmem:[%s353 + $0xd48] sm:$0xff]
        %v1321 = vld [vmem:[%s353 + $0xd50] sm:$0xff]
        %v1322 = vld [vmem:[%s353 + $0xd58] sm:$0xff]
        %v1323 = vld [vmem:[%s353 + $0xd60] sm:$0xff]
        %v1324 = vld [vmem:[%s353 + $0xd68] sm:$0xff]
        %v1325 = vld [vmem:[%s353 + $0xd70] sm:$0xff]
        %v1326 = vld [vmem:[%s353 + $0xd78] sm:$0xff]
        %v1327 = vld [vmem:[%s353 + $0xd80] sm:$0xff]
        %v1328 = vld [vmem:[%s353 + $0xd88] sm:$0xff]
        %v1329 = vld [vmem:[%s353 + $0xd90] sm:$0xff]
        %v1330 = vld [vmem:[%s353 + $0xd98] sm:$0xff]
        %v1331 = vld [vmem:[%s353 + $0xda0] sm:$0xff]
        %v1332 = vld [vmem:[%s353 + $0xda8] sm:$0xff]
        %v1333 = vld [vmem:[%s353 + $0xdb0] sm:$0xff]
        %v1334 = vld [vmem:[%s353 + $0xdb8] sm:$0xff]
        %v1335 = vld [vmem:[%s353 + $0xdc0] sm:$0xff]
        %v1336 = vld [vmem:[%s353 + $0xdc8] sm:$0xff]
        %v1337 = vld [vmem:[%s353 + $0xdd0] sm:$0xff]
        %v1338 = vld [vmem:[%s353 + $0xdd8] sm:$0xff]
        %v1339 = vld [vmem:[%s353 + $0xde0] sm:$0xff]
        %v1340 = vld [vmem:[%s353 + $0xde8] sm:$0xff]
        %v1341 = vld [vmem:[%s353 + $0xdf0] sm:$0xff]
        %v1342 = vld [vmem:[%s353 + $0xdf8] sm:$0xff]
        %v1343 = vld [vmem:[%s353 + $0xe00] sm:$0xff]
        %v1344 = vld [vmem:[%s353 + $0xe08] sm:$0xff]
        %v1345 = vld [vmem:[%s353 + $0xe10] sm:$0xff]
        %v1346 = vld [vmem:[%s353 + $0xe18] sm:$0xff]
        %v1347 = vld [vmem:[%s353 + $0xe20] sm:$0xff]
        %v1348 = vld [vmem:[%s353 + $0xe28] sm:$0xff]
        %v1349 = vld [vmem:[%s353 + $0xe30] sm:$0xff]
        %v1350 = vld [vmem:[%s353 + $0xe38] sm:$0xff]
        %v1351 = vld [vmem:[%s353 + $0xe40] sm:$0xff]
        %v1352 = vld [vmem:[%s353 + $0xe48] sm:$0xff]
        %v1353 = vld [vmem:[%s353 + $0xe50] sm:$0xff]
        %v1354 = vld [vmem:[%s353 + $0xe58] sm:$0xff]
        %v1355 = vld [vmem:[%s353 + $0xe60] sm:$0xff]
        %v1356 = vld [vmem:[%s353 + $0xe68] sm:$0xff]
        %v1357 = vld [vmem:[%s353 + $0xe70] sm:$0xff]
        %v1358 = vld [vmem:[%s353 + $0xe78] sm:$0xff]
        %v1359 = vld [vmem:[%s353 + $0xe80] sm:$0xff]
        %v1360 = vld [vmem:[%s353 + $0xe88] sm:$0xff]
        %v1361 = vld [vmem:[%s353 + $0xe90] sm:$0xff]
        %v1362 = vld [vmem:[%s353 + $0xe98] sm:$0xff]
        %v1363 = vld [vmem:[%s353 + $0xea0] sm:$0xff]
        %v1364 = vld [vmem:[%s353 + $0xea8] sm:$0xff]
        %v1365 = vld [vmem:[%s353 + $0xeb0] sm:$0xff]
        %v1366 = vld [vmem:[%s353 + $0xeb8] sm:$0xff]
        %v1367 = vld [vmem:[%s353 + $0xec0] sm:$0xff]
        %v1368 = vld [vmem:[%s353 + $0xec8] sm:$0xff]
        %v1369 = vld [vmem:[%s353 + $0xed0] sm:$0xff]
        %v1370 = vld [vmem:[%s353 + $0xed8] sm:$0xff]
        %v1371 = vld [vmem:[%s353 + $0xee0] sm:$0xff]
        %v1372 = vld [vmem:[%s353 + $0xee8] sm:$0xff]
        %v1373 = vld [vmem:[%s353 + $0xef0] sm:$0xff]
        %v1374 = vld [vmem:[%s353 + $0xef8] sm:$0xff]
        %v1375 = vld [vmem:[%s353 + $0xf00] sm:$0xff]
        %v1376 = vld [vmem:[%s353 + $0xf08] sm:$0xff]
        %v1377 = vld [vmem:[%s353 + $0xf10] sm:$0xff]
        %v1378 = vld [vmem:[%s353 + $0xf18] sm:$0xff]
        %v1379 = vld [vmem:[%s353 + $0xf20] sm:$0xff]
        %v1380 = vld [vmem:[%s353 + $0xf28] sm:$0xff]
        %v1381 = vld [vmem:[%s353 + $0xf30] sm:$0xff]
        %v1382 = vld [vmem:[%s353 + $0xf38] sm:$0xff]
        %v1383 = vld [vmem:[%s353 + $0xf40] sm:$0xff]
        %v1384 = vld [vmem:[%s353 + $0xf48] sm:$0xff]
        %v1385 = vld [vmem:[%s353 + $0xf50] sm:$0xff]
        %v1386 = vld [vmem:[%s353 + $0xf58] sm:$0xff]
        %v1387 = vld [vmem:[%s353 + $0xf60] sm:$0xff]
        %v1388 = vld [vmem:[%s353 + $0xf68] sm:$0xff]
        %v1389 = vld [vmem:[%s353 + $0xf70] sm:$0xff]
        %v1390 = vld [vmem:[%s353 + $0xf78] sm:$0xff]
        %v1391 = vld [vmem:[%s353 + $0xf80] sm:$0xff]
        %v1392 = vld [vmem:[%s353 + $0xf88] sm:$0xff]
        %v1393 = vld [vmem:[%s353 + $0xf90] sm:$0xff]
        %v1394 = vld [vmem:[%s353 + $0xf98] sm:$0xff]
        %v1395 = vld [vmem:[%s353 + $0xfa0] sm:$0xff]
        %v1396 = vld [vmem:[%s353 + $0xfa8] sm:$0xff]
        %v1397 = vld [vmem:[%s353 + $0xfb0] sm:$0xff]
        %v1398 = vld [vmem:[%s353 + $0xfb8] sm:$0xff]
        %v1399 = vld [vmem:[%s353 + $0xfc0] sm:$0xff]
        %v1400 = vld [vmem:[%s353 + $0xfc8] sm:$0xff]
        %v1401 = vld [vmem:[%s353 + $0xfd0] sm:$0xff]
        %v1402 = vld [vmem:[%s353 + $0xfd8] sm:$0xff]
        %v1403 = vld [vmem:[%s353 + $0xfe0] sm:$0xff]
        %v1404 = vld [vmem:[%s353 + $0xfe8] sm:$0xff]
        %v1405 = vld [vmem:[%s353 + $0xff0] sm:$0xff]
        %v1406 = vld [vmem:[%s353 + $0xff8] sm:$0xff]
        %v1407 = vld [vmem:[%s353 + $0x1000] sm:$0xff]
        %v1408 = vld [vmem:[%s353 + $0x1008] sm:$0xff]
        %v1409 = vld [vmem:[%s353 + $0x1010] sm:$0xff]
        %v1410 = vld [vmem:[%s353 + $0x1018] sm:$0xff]
        %v1411 = vld [vmem:[%s353 + $0x1020] sm:$0xff]
        %v1412 = vld [vmem:[%s353 + $0x1028] sm:$0xff]
        %v1413 = vld [vmem:[%s353 + $0x1030] sm:$0xff]
        %v1414 = vld [vmem:[%s353 + $0x1038] sm:$0xff]
        %v1415 = vld [vmem:[%s353 + $0x1040] sm:$0xff]
        %v1416 = vld [vmem:[%s353 + $0x1048] sm:$0xff]
        %v1417 = vld [vmem:[%s353 + $0x1050] sm:$0xff]
        %v1418 = vld [vmem:[%s353 + $0x1058] sm:$0xff]
        %v1419 = vld [vmem:[%s353 + $0x1060] sm:$0xff]
        %v1420 = vld [vmem:[%s353 + $0x1068] sm:$0xff]
        %v1421 = vld [vmem:[%s353 + $0x1070] sm:$0xff]
        %v1422 = vld [vmem:[%s353 + $0x1078] sm:$0xff]
        %v1423 = vld [vmem:[%s353 + $0x1080] sm:$0xff]
        %v1424 = vld [vmem:[%s353 + $0x1088] sm:$0xff]
        %v1425 = vld [vmem:[%s353 + $0x1090] sm:$0xff]
        %v1426 = vld [vmem:[%s353 + $0x1098] sm:$0xff]
        %v1427 = vld [vmem:[%s353 + $0x10a0] sm:$0xff]
        %v1428 = vld [vmem:[%s353 + $0x10a8] sm:$0xff]
        %v1429 = vld [vmem:[%s353 + $0x10b0] sm:$0xff]
        %v1430 = vld [vmem:[%s353 + $0x10b8] sm:$0xff]
        %v1431 = vld [vmem:[%s353 + $0x10c0] sm:$0xff]
        %v1432 = vld [vmem:[%s353 + $0x10c8] sm:$0xff]
        %v1433 = vld [vmem:[%s353 + $0x10d0] sm:$0xff]
        %v1434 = vld [vmem:[%s353 + $0x10d8] sm:$0xff]
        %v1435 = vld [vmem:[%s353 + $0x10e0] sm:$0xff]
        %v1436 = vld [vmem:[%s353 + $0x10e8] sm:$0xff]
        %v1437 = vld [vmem:[%s353 + $0x10f0] sm:$0xff]
        %v1438 = vld [vmem:[%s353 + $0x10f8] sm:$0xff]
        %v1439 = vld [vmem:[%s353 + $0x1100] sm:$0xff]
        %v1440 = vld [vmem:[%s353 + $0x1108] sm:$0xff]
        %v1441 = vld [vmem:[%s353 + $0x1110] sm:$0xff]
        %v1442 = vld [vmem:[%s353 + $0x1118] sm:$0xff]
        %v1443 = vld [vmem:[%s353 + $0x1120] sm:$0xff]
        %v1444 = vld [vmem:[%s353 + $0x1128] sm:$0xff]
        %v1445 = vld [vmem:[%s353 + $0x1130] sm:$0xff]
        %v1446 = vld [vmem:[%s353 + $0x1138] sm:$0xff]
        %v1447 = vld [vmem:[%s353 + $0x1140] sm:$0xff]
        %v1448 = vld [vmem:[%s353 + $0x1148] sm:$0xff]
        %v1449 = vld [vmem:[%s353 + $0x1150] sm:$0xff]
        %v1450 = vld [vmem:[%s353 + $0x1158] sm:$0xff]
        %v1451 = vld [vmem:[%s353 + $0x1160] sm:$0xff]
        %v1452 = vld [vmem:[%s353 + $0x1168] sm:$0xff]
        %v1453 = vld [vmem:[%s353 + $0x1170] sm:$0xff]
        %v1454 = vld [vmem:[%s353 + $0x1178] sm:$0xff]
        %v1455 = vld [vmem:[%s353 + $0x1180] sm:$0xff]
        %v1456 = vld [vmem:[%s353 + $0x1188] sm:$0xff]
        %v1457 = vld [vmem:[%s353 + $0x1190] sm:$0xff]
        %v1458 = vld [vmem:[%s353 + $0x1198] sm:$0xff]
        %v1459 = vld [vmem:[%s353 + $0x11a0] sm:$0xff]
        %v1460 = vld [vmem:[%s353 + $0x11a8] sm:$0xff]
        %v1461 = vld [vmem:[%s353 + $0x11b0] sm:$0xff]
        %v1462 = vld [vmem:[%s353 + $0x11b8] sm:$0xff]
        %v1463 = vld [vmem:[%s353 + $0x11c0] sm:$0xff]
        %v1464 = vld [vmem:[%s353 + $0x11c8] sm:$0xff]
        %v1465 = vld [vmem:[%s353 + $0x11d0] sm:$0xff]
        %v1466 = vld [vmem:[%s353 + $0x11d8] sm:$0xff]
        %v1467 = vld [vmem:[%s353 + $0x11e0] sm:$0xff]
        %v1468 = vld [vmem:[%s353 + $0x11e8] sm:$0xff]
        %v1469 = vld [vmem:[%s353 + $0x11f0] sm:$0xff]
        %v1470 = vld [vmem:[%s353 + $0x11f8] sm:$0xff]
        %v1471 = vld [vmem:[%s353 + $0x1200] sm:$0xff]
        %v1472 = vld [vmem:[%s353 + $0x1208] sm:$0xff]
        %v1473 = vld [vmem:[%s353 + $0x1210] sm:$0xff]
        %v1474 = vld [vmem:[%s353 + $0x1218] sm:$0xff]
        %v1475 = vld [vmem:[%s353 + $0x1220] sm:$0xff]
        %v1476 = vld [vmem:[%s353 + $0x1228] sm:$0xff]
        %v1477 = vld [vmem:[%s353 + $0x1230] sm:$0xff]
        %v1478 = vld [vmem:[%s353 + $0x1238] sm:$0xff]
        %v1479 = vld [vmem:[%s353 + $0x1240] sm:$0xff]
        %v1480 = vld [vmem:[%s353 + $0x1248] sm:$0xff]
        %v1481 = vld [vmem:[%s353 + $0x1250] sm:$0xff]
        %v1482 = vld [vmem:[%s353 + $0x1258] sm:$0xff]
        %v1483 = vld [vmem:[%s353 + $0x1260] sm:$0xff]
        %v1484 = vld [vmem:[%s353 + $0x1268] sm:$0xff]
        %v1485 = vld [vmem:[%s353 + $0x1270] sm:$0xff]
        %v1486 = vld [vmem:[%s353 + $0x1278] sm:$0xff]
        %v1487 = vld [vmem:[%s353 + $0x1280] sm:$0xff]
        %v1488 = vld [vmem:[%s353 + $0x1288] sm:$0xff]
        %v1489 = vld [vmem:[%s353 + $0x1290] sm:$0xff]
        %v1490 = vld [vmem:[%s353 + $0x1298] sm:$0xff]
        %v1491 = vld [vmem:[%s353 + $0x12a0] sm:$0xff]
        %v1492 = vld [vmem:[%s353 + $0x12a8] sm:$0xff]
        %v1493 = vld [vmem:[%s353 + $0x12b0] sm:$0xff]
        %v1494 = vld [vmem:[%s353 + $0x12b8] sm:$0xff]
        %v1495 = vld [vmem:[%s353 + $0x12c0] sm:$0xff]
        %v1496 = vld [vmem:[%s353 + $0x12c8] sm:$0xff]
        %v1497 = vld [vmem:[%s353 + $0x12d0] sm:$0xff]
        %v1498 = vld [vmem:[%s353 + $0x12d8] sm:$0xff]
        %v1499 = vld [vmem:[%s353 + $0x12e0] sm:$0xff]
        %v1500 = vld [vmem:[%s353 + $0x12e8] sm:$0xff]
        %v1501 = vld [vmem:[%s353 + $0x12f0] sm:$0xff]
        %v1502 = vld [vmem:[%s353 + $0x12f8] sm:$0xff]
        %v1503 = vld [vmem:[%s353 + $0x1300] sm:$0xff]
        %v1504 = vld [vmem:[%s353 + $0x1308] sm:$0xff]
        %v1505 = vld [vmem:[%s353 + $0x1310] sm:$0xff]
        %v1506 = vld [vmem:[%s353 + $0x1318] sm:$0xff]
        %v1507 = vld [vmem:[%s353 + $0x1320] sm:$0xff]
        %v1508 = vld [vmem:[%s353 + $0x1328] sm:$0xff]
        %v1509 = vld [vmem:[%s353 + $0x1330] sm:$0xff]
        %v1510 = vld [vmem:[%s353 + $0x1338] sm:$0xff]
        %v1511 = vld [vmem:[%s353 + $0x1340] sm:$0xff]
        %v1512 = vld [vmem:[%s353 + $0x1348] sm:$0xff]
        %v1513 = vld [vmem:[%s353 + $0x1350] sm:$0xff]
        %v1514 = vld [vmem:[%s353 + $0x1358] sm:$0xff]
        %v1515 = vld [vmem:[%s353 + $0x1360] sm:$0xff]
        %v1516 = vld [vmem:[%s353 + $0x1368] sm:$0xff]
        %v1517 = vld [vmem:[%s353 + $0x1370] sm:$0xff]
        %v1518 = vld [vmem:[%s353 + $0x1378] sm:$0xff]
        %v1519 = vld [vmem:[%s353 + $0x1380] sm:$0xff]
        %v1520 = vld [vmem:[%s353 + $0x1388] sm:$0xff]
        %v1521 = vld [vmem:[%s353 + $0x1390] sm:$0xff]
        %v1522 = vld [vmem:[%s353 + $0x1398] sm:$0xff]
        %v1523 = vld [vmem:[%s353 + $0x13a0] sm:$0xff]
        %v1524 = vld [vmem:[%s353 + $0x13a8] sm:$0xff]
        %v1525 = vld [vmem:[%s353 + $0x13b0] sm:$0xff]
        %v1526 = vld [vmem:[%s353 + $0x13b8] sm:$0xff]
        %v1527 = vld [vmem:[%s353 + $0x13c0] sm:$0xff]
        %v1528 = vld [vmem:[%s353 + $0x13c8] sm:$0xff]
        %v1529 = vld [vmem:[%s353 + $0x13d0] sm:$0xff]
        %v1530 = vld [vmem:[%s353 + $0x13d8] sm:$0xff]
        %v1531 = vld [vmem:[%s353 + $0x13e0] sm:$0xff]
        %v1532 = vld [vmem:[%s353 + $0x13e8] sm:$0xff]
        %v1533 = vld [vmem:[%s353 + $0x13f0] sm:$0xff]
        %v1534 = vld [vmem:[%s353 + $0x13f8] sm:$0xff]
        %v1535 = vld [vmem:[%s353 + $0x1400] sm:$0xff]
        %v1536 = vld [vmem:[%s353 + $0x1408] sm:$0xff]
        %v1537 = vld [vmem:[%s353 + $0x1410] sm:$0xff]
        %v1538 = vld [vmem:[%s353 + $0x1418] sm:$0xff]
        %v1539 = vld [vmem:[%s353 + $0x1420] sm:$0xff]
        %v1540 = vld [vmem:[%s353 + $0x1428] sm:$0xff]
        %v1541 = vld [vmem:[%s353 + $0x1430] sm:$0xff]
        %v1542 = vld [vmem:[%s353 + $0x1438] sm:$0xff]
        %v1543 = vld [vmem:[%s353 + $0x1440] sm:$0xff]
        %v1544 = vld [vmem:[%s353 + $0x1448] sm:$0xff]
        %v1545 = vld [vmem:[%s353 + $0x1450] sm:$0xff]
        %v1546 = vld [vmem:[%s353 + $0x1458] sm:$0xff]
        %v1547 = vld [vmem:[%s353 + $0x1460] sm:$0xff]
        %v1548 = vld [vmem:[%s353 + $0x1468] sm:$0xff]
        %v1549 = vld [vmem:[%s353 + $0x1470] sm:$0xff]
        %v1550 = vld [vmem:[%s353 + $0x1478] sm:$0xff]
        %v1551 = vld [vmem:[%s353 + $0x1480] sm:$0xff]
        %v1552 = vld [vmem:[%s353 + $0x1488] sm:$0xff]
        %v1553 = vld [vmem:[%s353 + $0x1490] sm:$0xff]
        %v1554 = vld [vmem:[%s353 + $0x1498] sm:$0xff]
        %v1555 = vld [vmem:[%s353 + $0x14a0] sm:$0xff]
        %v1556 = vld [vmem:[%s353 + $0x14a8] sm:$0xff]
        %v1557 = vld [vmem:[%s353 + $0x14b0] sm:$0xff]
        %v1558 = vld [vmem:[%s353 + $0x14b8] sm:$0xff]
        %v1559 = vld [vmem:[%s353 + $0x14c0] sm:$0xff]
        %v1560 = vld [vmem:[%s353 + $0x14c8] sm:$0xff]
        %v1561 = vld [vmem:[%s353 + $0x14d0] sm:$0xff]
        %v1562 = vld [vmem:[%s353 + $0x14d8] sm:$0xff]
        %v1563 = vld [vmem:[%s353 + $0x14e0] sm:$0xff]
        %v1564 = vld [vmem:[%s353 + $0x14e8] sm:$0xff]
        %v1565 = vld [vmem:[%s353 + $0x14f0] sm:$0xff]
        %v1566 = vld [vmem:[%s353 + $0x14f8] sm:$0xff]
        %v1567 = vld [vmem:[%s353 + $0x1500] sm:$0xff]
        %v1568 = vld [vmem:[%s353 + $0x1508] sm:$0xff]
        %v1569 = vld [vmem:[%s353 + $0x1510] sm:$0xff]
        %v1570 = vld [vmem:[%s353 + $0x1518] sm:$0xff]
        %v1571 = vld [vmem:[%s353 + $0x1520] sm:$0xff]
        %v1572 = vld [vmem:[%s353 + $0x1528] sm:$0xff]
        %v1573 = vld [vmem:[%s353 + $0x1530] sm:$0xff]
        %v1574 = vld [vmem:[%s353 + $0x1538] sm:$0xff]
        %v1575 = vld [vmem:[%s353 + $0x1540] sm:$0xff]
        %v1576 = vld [vmem:[%s353 + $0x1548] sm:$0xff]
        %v1577 = vld [vmem:[%s353 + $0x1550] sm:$0xff]
        %v1578 = vld [vmem:[%s353 + $0x1558] sm:$0xff]
        %v1579 = vld [vmem:[%s353 + $0x1560] sm:$0xff]
        %v1580 = vld [vmem:[%s353 + $0x1568] sm:$0xff]
        %v1581 = vld [vmem:[%s353 + $0x1570] sm:$0xff]
        %v1582 = vld [vmem:[%s353 + $0x1578] sm:$0xff]
        %v1583 = vld [vmem:[%s353 + $0x1580] sm:$0xff]
        %v1584 = vld [vmem:[%s353 + $0x1588] sm:$0xff]
        %v1585 = vld [vmem:[%s353 + $0x1590] sm:$0xff]
        %v1586 = vld [vmem:[%s353 + $0x1598] sm:$0xff]
        %v1587 = vld [vmem:[%s353 + $0x15a0] sm:$0xff]
        %v1588 = vld [vmem:[%s353 + $0x15a8] sm:$0xff]
        %v1589 = vld [vmem:[%s353 + $0x15b0] sm:$0xff]
        %v1590 = vld [vmem:[%s353 + $0x15b8] sm:$0xff]
        %v1591 = vld [vmem:[%s353 + $0x15c0] sm:$0xff]
        %v1592 = vld [vmem:[%s353 + $0x15c8] sm:$0xff]
        %v1593 = vld [vmem:[%s353 + $0x15d0] sm:$0xff]
        %v1594 = vld [vmem:[%s353 + $0x15d8] sm:$0xff]
        %v1595 = vld [vmem:[%s353 + $0x15e0] sm:$0xff]
        %v1596 = vld [vmem:[%s353 + $0x15e8] sm:$0xff]
        %v1597 = vld [vmem:[%s353 + $0x15f0] sm:$0xff]
        %v1598 = vld [vmem:[%s353 + $0x15f8] sm:$0xff]
        %v1599 = vld [vmem:[%s353 + $0x1600] sm:$0xff]
        %v1600 = vld [vmem:[%s353 + $0x1608] sm:$0xff]
        %v1601 = vld [vmem:[%s353 + $0x1610] sm:$0xff]
        %v1602 = vld [vmem:[%s353 + $0x1618] sm:$0xff]
        %v1603 = vld [vmem:[%s353 + $0x1620] sm:$0xff]
        %v1604 = vld [vmem:[%s353 + $0x1628] sm:$0xff]
        %v1605 = vld [vmem:[%s353 + $0x1630] sm:$0xff]
        %v1606 = vld [vmem:[%s353 + $0x1638] sm:$0xff]
        %v1607 = vld [vmem:[%s353 + $0x1640] sm:$0xff]
        %v1608 = vld [vmem:[%s353 + $0x1648] sm:$0xff]
        %v1609 = vld [vmem:[%s353 + $0x1650] sm:$0xff]
        %v1610 = vld [vmem:[%s353 + $0x1658] sm:$0xff]
        %v1611 = vld [vmem:[%s353 + $0x1660] sm:$0xff]
        %v1612 = vld [vmem:[%s353 + $0x1668] sm:$0xff]
        %v1613 = vld [vmem:[%s353 + $0x1670] sm:$0xff]
        %v1614 = vld [vmem:[%s353 + $0x1678] sm:$0xff]
        %v1615 = vld [vmem:[%s353 + $0x1680] sm:$0xff]
        %v1616 = vld [vmem:[%s353 + $0x1688] sm:$0xff]
        %v1617 = vld [vmem:[%s353 + $0x1690] sm:$0xff]
        %v1618 = vld [vmem:[%s353 + $0x1698] sm:$0xff]
        %v1619 = vld [vmem:[%s353 + $0x16a0] sm:$0xff]
        %v1620 = vld [vmem:[%s353 + $0x16a8] sm:$0xff]
        %v1621 = vld [vmem:[%s353 + $0x16b0] sm:$0xff]
        %v1622 = vld [vmem:[%s353 + $0x16b8] sm:$0xff]
        %v1623 = vld [vmem:[%s353 + $0x16c0] sm:$0xff]
        %v1624 = vld [vmem:[%s353 + $0x16c8] sm:$0xff]
        %v1625 = vld [vmem:[%s353 + $0x16d0] sm:$0xff]
        %v1626 = vld [vmem:[%s353 + $0x16d8] sm:$0xff]
        %v1627 = vld [vmem:[%s353 + $0x16e0] sm:$0xff]
        %v1628 = vld [vmem:[%s353 + $0x16e8] sm:$0xff]
        %v1629 = vld [vmem:[%s353 + $0x16f0] sm:$0xff]
        %v1630 = vld [vmem:[%s353 + $0x16f8] sm:$0xff]
        %v1631 = vld [vmem:[%s353 + $0x1700] sm:$0xff]
        %v1632 = vld [vmem:[%s353 + $0x1708] sm:$0xff]
        %v1633 = vld [vmem:[%s353 + $0x1710] sm:$0xff]
        %v1634 = vld [vmem:[%s353 + $0x1718] sm:$0xff]
        %v1635 = vld [vmem:[%s353 + $0x1720] sm:$0xff]
        %v1636 = vld [vmem:[%s353 + $0x1728] sm:$0xff]
        %v1637 = vld [vmem:[%s353 + $0x1730] sm:$0xff]
        %v1638 = vld [vmem:[%s353 + $0x1738] sm:$0xff]
        %v1639 = vld [vmem:[%s353 + $0x1740] sm:$0xff]
        %v1640 = vld [vmem:[%s353 + $0x1748] sm:$0xff]
        %v1641 = vld [vmem:[%s353 + $0x1750] sm:$0xff]
        %v1642 = vld [vmem:[%s353 + $0x1758] sm:$0xff]
        %v1643 = vld [vmem:[%s353 + $0x1760] sm:$0xff]
        %v1644 = vld [vmem:[%s353 + $0x1768] sm:$0xff]
        %v1645 = vld [vmem:[%s353 + $0x1770] sm:$0xff]
        %v1646 = vld [vmem:[%s353 + $0x1778] sm:$0xff]
        %v1647 = vld [vmem:[%s353 + $0x1780] sm:$0xff]
        %v1648 = vld [vmem:[%s353 + $0x1788] sm:$0xff]
        %v1649 = vld [vmem:[%s353 + $0x1790] sm:$0xff]
        %v1650 = vld [vmem:[%s353 + $0x1798] sm:$0xff]
        %v1651 = vld [vmem:[%s353 + $0x17a0] sm:$0xff]
        %v1652 = vld [vmem:[%s353 + $0x17a8] sm:$0xff]
        %v1653 = vld [vmem:[%s353 + $0x17b0] sm:$0xff]
        %v1654 = vld [vmem:[%s353 + $0x17b8] sm:$0xff]
        %v1655 = vld [vmem:[%s353 + $0x17c0] sm:$0xff]
        %v1656 = vld [vmem:[%s353 + $0x17c8] sm:$0xff]
        %v1657 = vld [vmem:[%s353 + $0x17d0] sm:$0xff]
        %v1658 = vld [vmem:[%s353 + $0x17d8] sm:$0xff]
        %v1659 = vld [vmem:[%s353 + $0x17e0] sm:$0xff]
        %v1660 = vld [vmem:[%s353 + $0x17e8] sm:$0xff]
        %v1661 = vld [vmem:[%s353 + $0x17f0] sm:$0xff]
        %v1662 = vld [vmem:[%s353 + $0x17f8] sm:$0xff]
        %v1663 = vld [vmem:[%s371] sm:$0xff]
        %v1664 = vld [vmem:[%s371 + $0x8] sm:$0xf]
        %v1666 = vcombine.high %v894, %v894
        %v1668 = vunpack.c.l.s4 1966171168
        %v1669 = vunpack.c.0.s8 %v1668
        %v1670 = vlaneseq
        %v1671 = vshrl.u32 %v1670, 7
        %v1672 = vsub.s32 %v1669, %v1671
        %v1673 = vrot.slane %v894, %v1672
        %v1675 = vunpack.c.l.s4 1966171168
        %v1676 = vunpack.c.0.s8 %v1675
        %v1677 = vlaneseq
        %v1678 = vshrl.u32 %v1677, 7
        %v1679 = vsub.s32 %v1676, %v1678
        %v1680 = vrot.slane %v1666, %v1679
        %v1681 = vcombine.high %v1673, %v1673
        %v1682 = vcombine.high %v1680, %v1680
        %v1684 = vunpack.c.l.s4 1966171168
        %v1685 = vunpack.c.0.s8 %v1684
        %v1686 = vlaneseq
        %v1687 = vshrl.u32 %v1686, 7
        %v1688 = vsub.s32 %v1685, %v1687
        %v1689 = vrot.slane %v1673, %v1688
        %v1691 = vunpack.c.l.s4 1966171168
        %v1692 = vunpack.c.0.s8 %v1691
        %v1693 = vlaneseq
        %v1694 = vshrl.u32 %v1693, 7
        %v1695 = vsub.s32 %v1692, %v1694
        %v1696 = vrot.slane %v1680, %v1695
        %v1698 = vunpack.c.l.s4 1966171168
        %v1699 = vunpack.c.0.s8 %v1698
        %v1700 = vlaneseq
        %v1701 = vshrl.u32 %v1700, 7
        %v1702 = vsub.s32 %v1699, %v1701
        %v1703 = vrot.slane %v1681, %v1702
        %v1705 = vunpack.c.l.s4 1966171168
        %v1706 = vunpack.c.0.s8 %v1705
        %v1707 = vlaneseq
        %v1708 = vshrl.u32 %v1707, 7
        %v1709 = vsub.s32 %v1706, %v1708
        %v1710 = vrot.slane %v1682, %v1709
        %v1711 = vcombine.high %v1689, %v1689
        %v1712 = vcombine.high %v1696, %v1696
        %v1713 = vcombine.high %v1703, %v1703
        %v1714 = vcombine.high %v1710, %v1710
        %v2491 = vunpack.c.l.b16 %v895
        %v2492 = vunpack.c.h.b16 %v895
        %v2493 = vunpack.c.l.b16 %v896
        %v2494 = vunpack.c.h.b16 %v896
        %v2495 = vunpack.c.l.b16 %v897
        %v2496 = vunpack.c.h.b16 %v897
        %v2497 = vunpack.c.l.b16 %v898
        %v2498 = vunpack.c.h.b16 %v898
        %v2499 = vunpack.c.l.b16 %v899
        %v2500 = vunpack.c.h.b16 %v899
        %v2501 = vunpack.c.l.b16 %v900
        %v2502 = vunpack.c.h.b16 %v900
        %v2503 = vunpack.c.l.b16 %v901
        %v2504 = vunpack.c.h.b16 %v901
        %v2505 = vunpack.c.l.b16 %v902
        %v2506 = vunpack.c.h.b16 %v902
        %v2507 = vunpack.c.l.b16 %v903
        %v2508 = vunpack.c.h.b16 %v903
        %v2509 = vunpack.c.l.b16 %v904
        %v2510 = vunpack.c.h.b16 %v904
        %v2511 = vunpack.c.l.b16 %v905
        %v2512 = vunpack.c.h.b16 %v905
        %v2513 = vunpack.c.l.b16 %v906
        %v2514 = vunpack.c.h.b16 %v906
        %v2515 = vunpack.c.l.b16 %v907
        %v2516 = vunpack.c.h.b16 %v907
        %v2517 = vunpack.c.l.b16 %v908
        %v2518 = vunpack.c.h.b16 %v908
        %v2519 = vunpack.c.l.b16 %v909
        %v2520 = vunpack.c.h.b16 %v909
        %v2521 = vunpack.c.l.b16 %v910
        %v2522 = vunpack.c.h.b16 %v910
        %v2523 = vunpack.c.l.b16 %v911
        %v2524 = vunpack.c.h.b16 %v911
        %v2525 = vunpack.c.l.b16 %v912
        %v2526 = vunpack.c.h.b16 %v912
        %v2527 = vunpack.c.l.b16 %v913
        %v2528 = vunpack.c.h.b16 %v913
        %v2529 = vunpack.c.l.b16 %v914
        %v2530 = vunpack.c.h.b16 %v914
        %v2531 = vunpack.c.l.b16 %v915
        %v2532 = vunpack.c.h.b16 %v915
        %v2533 = vunpack.c.l.b16 %v916
        %v2534 = vunpack.c.h.b16 %v916
        %v2535 = vunpack.c.l.b16 %v917
        %v2536 = vunpack.c.h.b16 %v917
        %v2537 = vunpack.c.l.b16 %v918
        %v2538 = vunpack.c.h.b16 %v918
        %v2539 = vunpack.c.l.b16 %v919
        %v2540 = vunpack.c.h.b16 %v919
        %v2541 = vunpack.c.l.b16 %v920
        %v2542 = vunpack.c.h.b16 %v920
        %v2543 = vunpack.c.l.b16 %v921
        %v2544 = vunpack.c.h.b16 %v921
        %v2545 = vunpack.c.l.b16 %v922
        %v2546 = vunpack.c.h.b16 %v922
        %v2547 = vunpack.c.l.b16 %v923
        %v2548 = vunpack.c.h.b16 %v923
        %v2549 = vunpack.c.l.b16 %v924
        %v2550 = vunpack.c.h.b16 %v924
        %v2551 = vunpack.c.l.b16 %v925
        %v2552 = vunpack.c.h.b16 %v925
        %v2553 = vunpack.c.l.b16 %v926
        %v2554 = vunpack.c.h.b16 %v926
        %v2555 = vunpack.c.l.b16 %v927
        %v2556 = vunpack.c.h.b16 %v927
        %v2557 = vunpack.c.l.b16 %v928
        %v2558 = vunpack.c.h.b16 %v928
        %v2559 = vunpack.c.l.b16 %v929
        %v2560 = vunpack.c.h.b16 %v929
        %v2561 = vunpack.c.l.b16 %v930
        %v2562 = vunpack.c.h.b16 %v930
        %v2563 = vunpack.c.l.b16 %v931
        %v2564 = vunpack.c.h.b16 %v931
        %v2565 = vunpack.c.l.b16 %v932
        %v2566 = vunpack.c.h.b16 %v932
        %v2567 = vunpack.c.l.b16 %v933
        %v2568 = vunpack.c.h.b16 %v933
        %v2569 = vunpack.c.l.b16 %v934
        %v2570 = vunpack.c.h.b16 %v934
        %v2571 = vunpack.c.l.b16 %v935
        %v2572 = vunpack.c.h.b16 %v935
        %v2573 = vunpack.c.l.b16 %v936
        %v2574 = vunpack.c.h.b16 %v936
        %v2575 = vunpack.c.l.b16 %v937
        %v2576 = vunpack.c.h.b16 %v937
        %v2577 = vunpack.c.l.b16 %v938
        %v2578 = vunpack.c.h.b16 %v938
        %v2579 = vunpack.c.l.b16 %v939
        %v2580 = vunpack.c.h.b16 %v939
        %v2581 = vunpack.c.l.b16 %v940
        %v2582 = vunpack.c.h.b16 %v940
        %v2583 = vunpack.c.l.b16 %v941
        %v2584 = vunpack.c.h.b16 %v941
        %v2585 = vunpack.c.l.b16 %v942
        %v2586 = vunpack.c.h.b16 %v942
        %v2587 = vunpack.c.l.b16 %v943
        %v2588 = vunpack.c.h.b16 %v943
        %v2589 = vunpack.c.l.b16 %v944
        %v2590 = vunpack.c.h.b16 %v944
        %v2591 = vunpack.c.l.b16 %v945
        %v2592 = vunpack.c.h.b16 %v945
        %v2593 = vunpack.c.l.b16 %v946
        %v2594 = vunpack.c.h.b16 %v946
        %v2595 = vunpack.c.l.b16 %v947
        %v2596 = vunpack.c.h.b16 %v947
        %v2597 = vunpack.c.l.b16 %v948
        %v2598 = vunpack.c.h.b16 %v948
        %v2599 = vunpack.c.l.b16 %v949
        %v2600 = vunpack.c.h.b16 %v949
        %v2601 = vunpack.c.l.b16 %v950
        %v2602 = vunpack.c.h.b16 %v950
        %v2603 = vunpack.c.l.b16 %v951
        %v2604 = vunpack.c.h.b16 %v951
        %v2605 = vunpack.c.l.b16 %v952
        %v2606 = vunpack.c.h.b16 %v952
        %v2607 = vunpack.c.l.b16 %v953
        %v2608 = vunpack.c.h.b16 %v953
        %v2609 = vunpack.c.l.b16 %v954
        %v2610 = vunpack.c.h.b16 %v954
        %v2611 = vunpack.c.l.b16 %v955
        %v2612 = vunpack.c.h.b16 %v955
        %v2613 = vunpack.c.l.b16 %v956
        %v2614 = vunpack.c.h.b16 %v956
        %v2615 = vunpack.c.l.b16 %v957
        %v2616 = vunpack.c.h.b16 %v957
        %v2617 = vunpack.c.l.b16 %v958
        %v2618 = vunpack.c.h.b16 %v958
        %v2619 = vunpack.c.l.b16 %v959
        %v2620 = vunpack.c.h.b16 %v959
        %v2621 = vunpack.c.l.b16 %v960
        %v2622 = vunpack.c.h.b16 %v960
        %v2623 = vunpack.c.l.b16 %v961
        %v2624 = vunpack.c.h.b16 %v961
        %v2625 = vunpack.c.l.b16 %v962
        %v2626 = vunpack.c.h.b16 %v962
        %v2627 = vunpack.c.l.b16 %v963
        %v2628 = vunpack.c.h.b16 %v963
        %v2629 = vunpack.c.l.b16 %v964
        %v2630 = vunpack.c.h.b16 %v964
        %v2631 = vunpack.c.l.b16 %v965
        %v2632 = vunpack.c.h.b16 %v965
        %v2633 = vunpack.c.l.b16 %v966
        %v2634 = vunpack.c.h.b16 %v966
        %v2635 = vunpack.c.l.b16 %v967
        %v2636 = vunpack.c.h.b16 %v967
        %v2637 = vunpack.c.l.b16 %v968
        %v2638 = vunpack.c.h.b16 %v968
        %v2639 = vunpack.c.l.b16 %v969
        %v2640 = vunpack.c.h.b16 %v969
        %v2641 = vunpack.c.l.b16 %v970
        %v2642 = vunpack.c.h.b16 %v970
        %v2643 = vunpack.c.l.b16 %v971
        %v2644 = vunpack.c.h.b16 %v971
        %v2645 = vunpack.c.l.b16 %v972
        %v2646 = vunpack.c.h.b16 %v972
        %v2647 = vunpack.c.l.b16 %v973
        %v2648 = vunpack.c.h.b16 %v973
        %v2649 = vunpack.c.l.b16 %v974
        %v2650 = vunpack.c.h.b16 %v974
        %v2651 = vunpack.c.l.b16 %v975
        %v2652 = vunpack.c.h.b16 %v975
        %v2653 = vunpack.c.l.b16 %v976
        %v2654 = vunpack.c.h.b16 %v976
        %v2655 = vunpack.c.l.b16 %v977
        %v2656 = vunpack.c.h.b16 %v977
        %v2657 = vunpack.c.l.b16 %v978
        %v2658 = vunpack.c.h.b16 %v978
        %v2659 = vunpack.c.l.b16 %v979
        %v2660 = vunpack.c.h.b16 %v979
        %v2661 = vunpack.c.l.b16 %v980
        %v2662 = vunpack.c.h.b16 %v980
        %v2663 = vunpack.c.l.b16 %v981
        %v2664 = vunpack.c.h.b16 %v981
        %v2665 = vunpack.c.l.b16 %v982
        %v2666 = vunpack.c.h.b16 %v982
        %v2667 = vunpack.c.l.b16 %v983
        %v2668 = vunpack.c.h.b16 %v983
        %v2669 = vunpack.c.l.b16 %v984
        %v2670 = vunpack.c.h.b16 %v984
        %v2671 = vunpack.c.l.b16 %v985
        %v2672 = vunpack.c.h.b16 %v985
        %v2673 = vunpack.c.l.b16 %v986
        %v2674 = vunpack.c.h.b16 %v986
        %v2675 = vunpack.c.l.b16 %v987
        %v2676 = vunpack.c.h.b16 %v987
        %v2677 = vunpack.c.l.b16 %v988
        %v2678 = vunpack.c.h.b16 %v988
        %v2679 = vunpack.c.l.b16 %v989
        %v2680 = vunpack.c.h.b16 %v989
        %v2681 = vunpack.c.l.b16 %v990
        %v2682 = vunpack.c.h.b16 %v990
        %v2683 = vunpack.c.l.b16 %v991
        %v2684 = vunpack.c.h.b16 %v991
        %v2685 = vunpack.c.l.b16 %v992
        %v2686 = vunpack.c.h.b16 %v992
        %v2687 = vunpack.c.l.b16 %v993
        %v2688 = vunpack.c.h.b16 %v993
        %v2689 = vunpack.c.l.b16 %v994
        %v2690 = vunpack.c.h.b16 %v994
        %v2691 = vunpack.c.l.b16 %v995
        %v2692 = vunpack.c.h.b16 %v995
        %v2693 = vunpack.c.l.b16 %v996
        %v2694 = vunpack.c.h.b16 %v996
        %v2695 = vunpack.c.l.b16 %v997
        %v2696 = vunpack.c.h.b16 %v997
        %v2697 = vunpack.c.l.b16 %v998
        %v2698 = vunpack.c.h.b16 %v998
        %v2699 = vunpack.c.l.b16 %v999
        %v2700 = vunpack.c.h.b16 %v999
        %v2701 = vunpack.c.l.b16 %v1000
        %v2702 = vunpack.c.h.b16 %v1000
        %v2703 = vunpack.c.l.b16 %v1001
        %v2704 = vunpack.c.h.b16 %v1001
        %v2705 = vunpack.c.l.b16 %v1002
        %v2706 = vunpack.c.h.b16 %v1002
        %v2707 = vunpack.c.l.b16 %v1003
        %v2708 = vunpack.c.h.b16 %v1003
        %v2709 = vunpack.c.l.b16 %v1004
        %v2710 = vunpack.c.h.b16 %v1004
        %v2711 = vunpack.c.l.b16 %v1005
        %v2712 = vunpack.c.h.b16 %v1005
        %v2713 = vunpack.c.l.b16 %v1006
        %v2714 = vunpack.c.h.b16 %v1006
        %v2715 = vunpack.c.l.b16 %v1007
        %v2716 = vunpack.c.h.b16 %v1007
        %v2717 = vunpack.c.l.b16 %v1008
        %v2718 = vunpack.c.h.b16 %v1008
        %v2719 = vunpack.c.l.b16 %v1009
        %v2720 = vunpack.c.h.b16 %v1009
        %v2721 = vunpack.c.l.b16 %v1010
        %v2722 = vunpack.c.h.b16 %v1010
        %v2723 = vunpack.c.l.b16 %v1011
        %v2724 = vunpack.c.h.b16 %v1011
        %v2725 = vunpack.c.l.b16 %v1012
        %v2726 = vunpack.c.h.b16 %v1012
        %v2727 = vunpack.c.l.b16 %v1013
        %v2728 = vunpack.c.h.b16 %v1013
        %v2729 = vunpack.c.l.b16 %v1014
        %v2730 = vunpack.c.h.b16 %v1014
        %v2731 = vunpack.c.l.b16 %v1015
        %v2732 = vunpack.c.h.b16 %v1015
        %v2733 = vunpack.c.l.b16 %v1016
        %v2734 = vunpack.c.h.b16 %v1016
        %v2735 = vunpack.c.l.b16 %v1017
        %v2736 = vunpack.c.h.b16 %v1017
        %v2737 = vunpack.c.l.b16 %v1018
        %v2738 = vunpack.c.h.b16 %v1018
        %v2739 = vunpack.c.l.b16 %v1019
        %v2740 = vunpack.c.h.b16 %v1019
        %v2741 = vunpack.c.l.b16 %v1020
        %v2742 = vunpack.c.h.b16 %v1020
        %v2743 = vunpack.c.l.b16 %v1021
        %v2744 = vunpack.c.h.b16 %v1021
        %v2745 = vunpack.c.l.b16 %v1022
        %v2746 = vunpack.c.h.b16 %v1022
        %v2747 = vunpack.c.l.b16 %v1023
        %v2748 = vunpack.c.h.b16 %v1023
        %v2749 = vunpack.c.l.b16 %v1024
        %v2750 = vunpack.c.h.b16 %v1024
        %v2751 = vunpack.c.l.b16 %v1025
        %v2752 = vunpack.c.h.b16 %v1025
        %v2753 = vunpack.c.l.b16 %v1026
        %v2754 = vunpack.c.h.b16 %v1026
        %v2755 = vunpack.c.l.b16 %v1027
        %v2756 = vunpack.c.h.b16 %v1027
        %v2757 = vunpack.c.l.b16 %v1028
        %v2758 = vunpack.c.h.b16 %v1028
        %v2759 = vunpack.c.l.b16 %v1029
        %v2760 = vunpack.c.h.b16 %v1029
        %v2761 = vunpack.c.l.b16 %v1030
        %v2762 = vunpack.c.h.b16 %v1030
        %v2763 = vunpack.c.l.b16 %v1031
        %v2764 = vunpack.c.h.b16 %v1031
        %v2765 = vunpack.c.l.b16 %v1032
        %v2766 = vunpack.c.h.b16 %v1032
        %v2767 = vunpack.c.l.b16 %v1033
        %v2768 = vunpack.c.h.b16 %v1033
        %v2769 = vunpack.c.l.b16 %v1034
        %v2770 = vunpack.c.h.b16 %v1034
        %v2771 = vunpack.c.l.b16 %v1035
        %v2772 = vunpack.c.h.b16 %v1035
        %v2773 = vunpack.c.l.b16 %v1036
        %v2774 = vunpack.c.h.b16 %v1036
        %v2775 = vunpack.c.l.b16 %v1037
        %v2776 = vunpack.c.h.b16 %v1037
        %v2777 = vunpack.c.l.b16 %v1038
        %v2778 = vunpack.c.h.b16 %v1038
        %v2779 = vunpack.c.l.b16 %v1039
        %v2780 = vunpack.c.h.b16 %v1039
        %v2781 = vunpack.c.l.b16 %v1040
        %v2782 = vunpack.c.h.b16 %v1040
        %v2783 = vunpack.c.l.b16 %v1041
        %v2784 = vunpack.c.h.b16 %v1041
        %v2785 = vunpack.c.l.b16 %v1042
        %v2786 = vunpack.c.h.b16 %v1042
        %v2787 = vunpack.c.l.b16 %v1043
        %v2788 = vunpack.c.h.b16 %v1043
        %v2789 = vunpack.c.l.b16 %v1044
        %v2790 = vunpack.c.h.b16 %v1044
        %v2791 = vunpack.c.l.b16 %v1045
        %v2792 = vunpack.c.h.b16 %v1045
        %v2793 = vunpack.c.l.b16 %v1046
        %v2794 = vunpack.c.h.b16 %v1046
        %v2795 = vunpack.c.l.b16 %v1047
        %v2796 = vunpack.c.h.b16 %v1047
        %v2797 = vunpack.c.l.b16 %v1048
        %v2798 = vunpack.c.h.b16 %v1048
        %v2799 = vunpack.c.l.b16 %v1049
        %v2800 = vunpack.c.h.b16 %v1049
        %v2801 = vunpack.c.l.b16 %v1050
        %v2802 = vunpack.c.h.b16 %v1050
        %v2803 = vunpack.c.l.b16 %v1051
        %v2804 = vunpack.c.h.b16 %v1051
        %v2805 = vunpack.c.l.b16 %v1052
        %v2806 = vunpack.c.h.b16 %v1052
        %v2807 = vunpack.c.l.b16 %v1053
        %v2808 = vunpack.c.h.b16 %v1053
        %v2809 = vunpack.c.l.b16 %v1054
        %v2810 = vunpack.c.h.b16 %v1054
        %v2811 = vunpack.c.l.b16 %v1055
        %v2812 = vunpack.c.h.b16 %v1055
        %v2813 = vunpack.c.l.b16 %v1056
        %v2814 = vunpack.c.h.b16 %v1056
        %v2815 = vunpack.c.l.b16 %v1057
        %v2816 = vunpack.c.h.b16 %v1057
        %v2817 = vunpack.c.l.b16 %v1058
        %v2818 = vunpack.c.h.b16 %v1058
        %v2819 = vunpack.c.l.b16 %v1059
        %v2820 = vunpack.c.h.b16 %v1059
        %v2821 = vunpack.c.l.b16 %v1060
        %v2822 = vunpack.c.h.b16 %v1060
        %v2823 = vunpack.c.l.b16 %v1061
        %v2824 = vunpack.c.h.b16 %v1061
        %v2825 = vunpack.c.l.b16 %v1062
        %v2826 = vunpack.c.h.b16 %v1062
        %v2827 = vunpack.c.l.b16 %v1063
        %v2828 = vunpack.c.h.b16 %v1063
        %v2829 = vunpack.c.l.b16 %v1064
        %v2830 = vunpack.c.h.b16 %v1064
        %v2831 = vunpack.c.l.b16 %v1065
        %v2832 = vunpack.c.h.b16 %v1065
        %v2833 = vunpack.c.l.b16 %v1066
        %v2834 = vunpack.c.h.b16 %v1066
        %v2835 = vunpack.c.l.b16 %v1067
        %v2836 = vunpack.c.h.b16 %v1067
        %v2837 = vunpack.c.l.b16 %v1068
        %v2838 = vunpack.c.h.b16 %v1068
        %v2839 = vunpack.c.l.b16 %v1069
        %v2840 = vunpack.c.h.b16 %v1069
        %v2841 = vunpack.c.l.b16 %v1070
        %v2842 = vunpack.c.h.b16 %v1070
        %v2843 = vunpack.c.l.b16 %v1071
        %v2844 = vunpack.c.h.b16 %v1071
        %v2845 = vunpack.c.l.b16 %v1072
        %v2846 = vunpack.c.h.b16 %v1072
        %v2847 = vunpack.c.l.b16 %v1073
        %v2848 = vunpack.c.h.b16 %v1073
        %v2849 = vunpack.c.l.b16 %v1074
        %v2850 = vunpack.c.h.b16 %v1074
        %v2851 = vunpack.c.l.b16 %v1075
        %v2852 = vunpack.c.h.b16 %v1075
        %v2853 = vunpack.c.l.b16 %v1076
        %v2854 = vunpack.c.h.b16 %v1076
        %v2855 = vunpack.c.l.b16 %v1077
        %v2856 = vunpack.c.h.b16 %v1077
        %v2857 = vunpack.c.l.b16 %v1078
        %v2858 = vunpack.c.h.b16 %v1078
        %v2859 = vunpack.c.l.b16 %v1079
        %v2860 = vunpack.c.h.b16 %v1079
        %v2861 = vunpack.c.l.b16 %v1080
        %v2862 = vunpack.c.h.b16 %v1080
        %v2863 = vunpack.c.l.b16 %v1081
        %v2864 = vunpack.c.h.b16 %v1081
        %v2865 = vunpack.c.l.b16 %v1082
        %v2866 = vunpack.c.h.b16 %v1082
        %v2867 = vunpack.c.l.b16 %v1083
        %v2868 = vunpack.c.h.b16 %v1083
        %v2869 = vunpack.c.l.b16 %v1084
        %v2870 = vunpack.c.h.b16 %v1084
        %v2871 = vunpack.c.l.b16 %v1085
        %v2872 = vunpack.c.h.b16 %v1085
        %v2873 = vunpack.c.l.b16 %v1086
        %v2874 = vunpack.c.h.b16 %v1086
        %v2875 = vunpack.c.l.b16 %v1087
        %v2876 = vunpack.c.h.b16 %v1087
        %v2877 = vunpack.c.l.b16 %v1088
        %v2878 = vunpack.c.h.b16 %v1088
        %v2879 = vunpack.c.l.b16 %v1089
        %v2880 = vunpack.c.h.b16 %v1089
        %v2881 = vunpack.c.l.b16 %v1090
        %v2882 = vunpack.c.h.b16 %v1090
        %v2883 = vunpack.c.l.b16 %v1091
        %v2884 = vunpack.c.h.b16 %v1091
        %v2885 = vunpack.c.l.b16 %v1092
        %v2886 = vunpack.c.h.b16 %v1092
        %v2887 = vunpack.c.l.b16 %v1093
        %v2888 = vunpack.c.h.b16 %v1093
        %v2889 = vunpack.c.l.b16 %v1094
        %v2890 = vunpack.c.h.b16 %v1094
        %v2891 = vunpack.c.l.b16 %v1095
        %v2892 = vunpack.c.h.b16 %v1095
        %v2893 = vunpack.c.l.b16 %v1096
        %v2894 = vunpack.c.h.b16 %v1096
        %v2895 = vunpack.c.l.b16 %v1097
        %v2896 = vunpack.c.h.b16 %v1097
        %v2897 = vunpack.c.l.b16 %v1098
        %v2898 = vunpack.c.h.b16 %v1098
        %v2899 = vunpack.c.l.b16 %v1099
        %v2900 = vunpack.c.h.b16 %v1099
        %v2901 = vunpack.c.l.b16 %v1100
        %v2902 = vunpack.c.h.b16 %v1100
        %v2903 = vunpack.c.l.b16 %v1101
        %v2904 = vunpack.c.h.b16 %v1101
        %v2905 = vunpack.c.l.b16 %v1102
        %v2906 = vunpack.c.h.b16 %v1102
        %v2907 = vunpack.c.l.b16 %v1103
        %v2908 = vunpack.c.h.b16 %v1103
        %v2909 = vunpack.c.l.b16 %v1104
        %v2910 = vunpack.c.h.b16 %v1104
        %v2911 = vunpack.c.l.b16 %v1105
        %v2912 = vunpack.c.h.b16 %v1105
        %v2913 = vunpack.c.l.b16 %v1106
        %v2914 = vunpack.c.h.b16 %v1106
        %v2915 = vunpack.c.l.b16 %v1107
        %v2916 = vunpack.c.h.b16 %v1107
        %v2917 = vunpack.c.l.b16 %v1108
        %v2918 = vunpack.c.h.b16 %v1108
        %v2919 = vunpack.c.l.b16 %v1109
        %v2920 = vunpack.c.h.b16 %v1109
        %v2921 = vunpack.c.l.b16 %v1110
        %v2922 = vunpack.c.h.b16 %v1110
        %v2923 = vunpack.c.l.b16 %v1111
        %v2924 = vunpack.c.h.b16 %v1111
        %v2925 = vunpack.c.l.b16 %v1112
        %v2926 = vunpack.c.h.b16 %v1112
        %v2927 = vunpack.c.l.b16 %v1113
        %v2928 = vunpack.c.h.b16 %v1113
        %v2929 = vunpack.c.l.b16 %v1114
        %v2930 = vunpack.c.h.b16 %v1114
        %v2931 = vunpack.c.l.b16 %v1115
        %v2932 = vunpack.c.h.b16 %v1115
        %v2933 = vunpack.c.l.b16 %v1116
        %v2934 = vunpack.c.h.b16 %v1116
        %v2935 = vunpack.c.l.b16 %v1117
        %v2936 = vunpack.c.h.b16 %v1117
        %v2937 = vunpack.c.l.b16 %v1118
        %v2938 = vunpack.c.h.b16 %v1118
        %v2939 = vunpack.c.l.b16 %v1119
        %v2940 = vunpack.c.h.b16 %v1119
        %v2941 = vunpack.c.l.b16 %v1120
        %v2942 = vunpack.c.h.b16 %v1120
        %v2943 = vunpack.c.l.b16 %v1121
        %v2944 = vunpack.c.h.b16 %v1121
        %v2945 = vunpack.c.l.b16 %v1122
        %v2946 = vunpack.c.h.b16 %v1122
        %v2947 = vunpack.c.l.b16 %v1123
        %v2948 = vunpack.c.h.b16 %v1123
        %v2949 = vunpack.c.l.b16 %v1124
        %v2950 = vunpack.c.h.b16 %v1124
        %v2951 = vunpack.c.l.b16 %v1125
        %v2952 = vunpack.c.h.b16 %v1125
        %v2953 = vunpack.c.l.b16 %v1126
        %v2954 = vunpack.c.h.b16 %v1126
        %v2955 = vunpack.c.l.b16 %v1127
        %v2956 = vunpack.c.h.b16 %v1127
        %v2957 = vunpack.c.l.b16 %v1128
        %v2958 = vunpack.c.h.b16 %v1128
        %v2959 = vunpack.c.l.b16 %v1129
        %v2960 = vunpack.c.h.b16 %v1129
        %v2961 = vunpack.c.l.b16 %v1130
        %v2962 = vunpack.c.h.b16 %v1130
        %v2963 = vunpack.c.l.b16 %v1131
        %v2964 = vunpack.c.h.b16 %v1131
        %v2965 = vunpack.c.l.b16 %v1132
        %v2966 = vunpack.c.h.b16 %v1132
        %v2967 = vunpack.c.l.b16 %v1133
        %v2968 = vunpack.c.h.b16 %v1133
        %v2969 = vunpack.c.l.b16 %v1134
        %v2970 = vunpack.c.h.b16 %v1134
        %v2971 = vunpack.c.l.b16 %v1135
        %v2972 = vunpack.c.h.b16 %v1135
        %v2973 = vunpack.c.l.b16 %v1136
        %v2974 = vunpack.c.h.b16 %v1136
        %v2975 = vunpack.c.l.b16 %v1137
        %v2976 = vunpack.c.h.b16 %v1137
        %v2977 = vunpack.c.l.b16 %v1138
        %v2978 = vunpack.c.h.b16 %v1138
        %v2979 = vunpack.c.l.b16 %v1139
        %v2980 = vunpack.c.h.b16 %v1139
        %v2981 = vunpack.c.l.b16 %v1140
        %v2982 = vunpack.c.h.b16 %v1140
        %v2983 = vunpack.c.l.b16 %v1141
        %v2984 = vunpack.c.h.b16 %v1141
        %v2985 = vunpack.c.l.b16 %v1142
        %v2986 = vunpack.c.h.b16 %v1142
        %v2987 = vunpack.c.l.b16 %v1143
        %v2988 = vunpack.c.h.b16 %v1143
        %v2989 = vunpack.c.l.b16 %v1144
        %v2990 = vunpack.c.h.b16 %v1144
        %v2991 = vunpack.c.l.b16 %v1145
        %v2992 = vunpack.c.h.b16 %v1145
        %v2993 = vunpack.c.l.b16 %v1146
        %v2994 = vunpack.c.h.b16 %v1146
        %v2995 = vunpack.c.l.b16 %v1147
        %v2996 = vunpack.c.h.b16 %v1147
        %v2997 = vunpack.c.l.b16 %v1148
        %v2998 = vunpack.c.h.b16 %v1148
        %v2999 = vunpack.c.l.b16 %v1149
        %v3000 = vunpack.c.h.b16 %v1149
        %v3001 = vunpack.c.l.b16 %v1150
        %v3002 = vunpack.c.h.b16 %v1150
        %v3003 = vunpack.c.l.b16 %v1151
        %v3004 = vunpack.c.h.b16 %v1151
        %v3005 = vunpack.c.l.b16 %v1152
        %v3006 = vunpack.c.h.b16 %v1152
        %v3007 = vunpack.c.l.b16 %v1153
        %v3008 = vunpack.c.h.b16 %v1153
        %v3009 = vunpack.c.l.b16 %v1154
        %v3010 = vunpack.c.h.b16 %v1154
        %v3011 = vunpack.c.l.b16 %v1155
        %v3012 = vunpack.c.h.b16 %v1155
        %v3013 = vunpack.c.l.b16 %v1156
        %v3014 = vunpack.c.h.b16 %v1156
        %v3015 = vunpack.c.l.b16 %v1157
        %v3016 = vunpack.c.h.b16 %v1157
        %v3017 = vunpack.c.l.b16 %v1158
        %v3018 = vunpack.c.h.b16 %v1158
        %v3019 = vunpack.c.l.b16 %v1159
        %v3020 = vunpack.c.h.b16 %v1159
        %v3021 = vunpack.c.l.b16 %v1160
        %v3022 = vunpack.c.h.b16 %v1160
        %v3023 = vunpack.c.l.b16 %v1161
        %v3024 = vunpack.c.h.b16 %v1161
        %v3025 = vunpack.c.l.b16 %v1162
        %v3026 = vunpack.c.h.b16 %v1162
        %v3027 = vunpack.c.l.b16 %v1163
        %v3028 = vunpack.c.h.b16 %v1163
        %v3029 = vunpack.c.l.b16 %v1164
        %v3030 = vunpack.c.h.b16 %v1164
        %v3031 = vunpack.c.l.b16 %v1165
        %v3032 = vunpack.c.h.b16 %v1165
        %v3033 = vunpack.c.l.b16 %v1166
        %v3034 = vunpack.c.h.b16 %v1166
        %v3035 = vunpack.c.l.b16 %v1167
        %v3036 = vunpack.c.h.b16 %v1167
        %v3037 = vunpack.c.l.b16 %v1168
        %v3038 = vunpack.c.h.b16 %v1168
        %v3039 = vunpack.c.l.b16 %v1169
        %v3040 = vunpack.c.h.b16 %v1169
        %v3041 = vunpack.c.l.b16 %v1170
        %v3042 = vunpack.c.h.b16 %v1170
        %v3043 = vunpack.c.l.b16 %v1171
        %v3044 = vunpack.c.h.b16 %v1171
        %v3045 = vunpack.c.l.b16 %v1172
        %v3046 = vunpack.c.h.b16 %v1172
        %v3047 = vunpack.c.l.b16 %v1173
        %v3048 = vunpack.c.h.b16 %v1173
        %v3049 = vunpack.c.l.b16 %v1174
        %v3050 = vunpack.c.h.b16 %v1174
        %v3051 = vunpack.c.l.b16 %v1175
        %v3052 = vunpack.c.h.b16 %v1175
        %v3053 = vunpack.c.l.b16 %v1176
        %v3054 = vunpack.c.h.b16 %v1176
        %v3055 = vunpack.c.l.b16 %v1177
        %v3056 = vunpack.c.h.b16 %v1177
        %v3057 = vunpack.c.l.b16 %v1178
        %v3058 = vunpack.c.h.b16 %v1178
        %v3059 = vunpack.c.l.b16 %v1179
        %v3060 = vunpack.c.h.b16 %v1179
        %v3061 = vunpack.c.l.b16 %v1180
        %v3062 = vunpack.c.h.b16 %v1180
        %v3063 = vunpack.c.l.b16 %v1181
        %v3064 = vunpack.c.h.b16 %v1181
        %v3065 = vunpack.c.l.b16 %v1182
        %v3066 = vunpack.c.h.b16 %v1182
        %v3067 = vunpack.c.l.b16 %v1183
        %v3068 = vunpack.c.h.b16 %v1183
        %v3069 = vunpack.c.l.b16 %v1184
        %v3070 = vunpack.c.h.b16 %v1184
        %v3071 = vunpack.c.l.b16 %v1185
        %v3072 = vunpack.c.h.b16 %v1185
        %v3073 = vunpack.c.l.b16 %v1186
        %v3074 = vunpack.c.h.b16 %v1186
        %v3075 = vunpack.c.l.b16 %v1187
        %v3076 = vunpack.c.h.b16 %v1187
        %v3077 = vunpack.c.l.b16 %v1188
        %v3078 = vunpack.c.h.b16 %v1188
        %v3079 = vunpack.c.l.b16 %v1189
        %v3080 = vunpack.c.h.b16 %v1189
        %v3081 = vunpack.c.l.b16 %v1190
        %v3082 = vunpack.c.h.b16 %v1190
        %v3083 = vunpack.c.l.b16 %v1191
        %v3084 = vunpack.c.h.b16 %v1191
        %v3085 = vunpack.c.l.b16 %v1192
        %v3086 = vunpack.c.h.b16 %v1192
        %v3087 = vunpack.c.l.b16 %v1193
        %v3088 = vunpack.c.h.b16 %v1193
        %v3089 = vunpack.c.l.b16 %v1194
        %v3090 = vunpack.c.h.b16 %v1194
        %v3091 = vunpack.c.l.b16 %v1195
        %v3092 = vunpack.c.h.b16 %v1195
        %v3093 = vunpack.c.l.b16 %v1196
        %v3094 = vunpack.c.h.b16 %v1196
        %v3095 = vunpack.c.l.b16 %v1197
        %v3096 = vunpack.c.h.b16 %v1197
        %v3097 = vunpack.c.l.b16 %v1198
        %v3098 = vunpack.c.h.b16 %v1198
        %v3099 = vunpack.c.l.b16 %v1199
        %v3100 = vunpack.c.h.b16 %v1199
        %v3101 = vunpack.c.l.b16 %v1200
        %v3102 = vunpack.c.h.b16 %v1200
        %v3103 = vunpack.c.l.b16 %v1201
        %v3104 = vunpack.c.h.b16 %v1201
        %v3105 = vunpack.c.l.b16 %v1202
        %v3106 = vunpack.c.h.b16 %v1202
        %v3107 = vunpack.c.l.b16 %v1203
        %v3108 = vunpack.c.h.b16 %v1203
        %v3109 = vunpack.c.l.b16 %v1204
        %v3110 = vunpack.c.h.b16 %v1204
        %v3111 = vunpack.c.l.b16 %v1205
        %v3112 = vunpack.c.h.b16 %v1205
        %v3113 = vunpack.c.l.b16 %v1206
        %v3114 = vunpack.c.h.b16 %v1206
        %v3115 = vunpack.c.l.b16 %v1207
        %v3116 = vunpack.c.h.b16 %v1207
        %v3117 = vunpack.c.l.b16 %v1208
        %v3118 = vunpack.c.h.b16 %v1208
        %v3119 = vunpack.c.l.b16 %v1209
        %v3120 = vunpack.c.h.b16 %v1209
        %v3121 = vunpack.c.l.b16 %v1210
        %v3122 = vunpack.c.h.b16 %v1210
        %v3123 = vunpack.c.l.b16 %v1211
        %v3124 = vunpack.c.h.b16 %v1211
        %v3125 = vunpack.c.l.b16 %v1212
        %v3126 = vunpack.c.h.b16 %v1212
        %v3127 = vunpack.c.l.b16 %v1213
        %v3128 = vunpack.c.h.b16 %v1213
        %v3129 = vunpack.c.l.b16 %v1214
        %v3130 = vunpack.c.h.b16 %v1214
        %v3131 = vunpack.c.l.b16 %v1215
        %v3132 = vunpack.c.h.b16 %v1215
        %v3133 = vunpack.c.l.b16 %v1216
        %v3134 = vunpack.c.h.b16 %v1216
        %v3135 = vunpack.c.l.b16 %v1217
        %v3136 = vunpack.c.h.b16 %v1217
        %v3137 = vunpack.c.l.b16 %v1218
        %v3138 = vunpack.c.h.b16 %v1218
        %v3139 = vunpack.c.l.b16 %v1219
        %v3140 = vunpack.c.h.b16 %v1219
        %v3141 = vunpack.c.l.b16 %v1220
        %v3142 = vunpack.c.h.b16 %v1220
        %v3143 = vunpack.c.l.b16 %v1221
        %v3144 = vunpack.c.h.b16 %v1221
        %v3145 = vunpack.c.l.b16 %v1222
        %v3146 = vunpack.c.h.b16 %v1222
        %v3147 = vunpack.c.l.b16 %v1223
        %v3148 = vunpack.c.h.b16 %v1223
        %v3149 = vunpack.c.l.b16 %v1224
        %v3150 = vunpack.c.h.b16 %v1224
        %v3151 = vunpack.c.l.b16 %v1225
        %v3152 = vunpack.c.h.b16 %v1225
        %v3153 = vunpack.c.l.b16 %v1226
        %v3154 = vunpack.c.h.b16 %v1226
        %v3155 = vunpack.c.l.b16 %v1227
        %v3156 = vunpack.c.h.b16 %v1227
        %v3157 = vunpack.c.l.b16 %v1228
        %v3158 = vunpack.c.h.b16 %v1228
        %v3159 = vunpack.c.l.b16 %v1229
        %v3160 = vunpack.c.h.b16 %v1229
        %v3161 = vunpack.c.l.b16 %v1230
        %v3162 = vunpack.c.h.b16 %v1230
        %v3163 = vunpack.c.l.b16 %v1231
        %v3164 = vunpack.c.h.b16 %v1231
        %v3165 = vunpack.c.l.b16 %v1232
        %v3166 = vunpack.c.h.b16 %v1232
        %v3167 = vunpack.c.l.b16 %v1233
        %v3168 = vunpack.c.h.b16 %v1233
        %v3169 = vunpack.c.l.b16 %v1234
        %v3170 = vunpack.c.h.b16 %v1234
        %v3171 = vunpack.c.l.b16 %v1235
        %v3172 = vunpack.c.h.b16 %v1235
        %v3173 = vunpack.c.l.b16 %v1236
        %v3174 = vunpack.c.h.b16 %v1236
        %v3175 = vunpack.c.l.b16 %v1237
        %v3176 = vunpack.c.h.b16 %v1237
        %v3177 = vunpack.c.l.b16 %v1238
        %v3178 = vunpack.c.h.b16 %v1238
        %v3179 = vunpack.c.l.b16 %v1239
        %v3180 = vunpack.c.h.b16 %v1239
        %v3181 = vunpack.c.l.b16 %v1240
        %v3182 = vunpack.c.h.b16 %v1240
        %v3183 = vunpack.c.l.b16 %v1241
        %v3184 = vunpack.c.h.b16 %v1241
        %v3185 = vunpack.c.l.b16 %v1242
        %v3186 = vunpack.c.h.b16 %v1242
        %v3187 = vunpack.c.l.b16 %v1243
        %v3188 = vunpack.c.h.b16 %v1243
        %v3189 = vunpack.c.l.b16 %v1244
        %v3190 = vunpack.c.h.b16 %v1244
        %v3191 = vunpack.c.l.b16 %v1245
        %v3192 = vunpack.c.h.b16 %v1245
        %v3193 = vunpack.c.l.b16 %v1246
        %v3194 = vunpack.c.h.b16 %v1246
        %v3195 = vunpack.c.l.b16 %v1247
        %v3196 = vunpack.c.h.b16 %v1247
        %v3197 = vunpack.c.l.b16 %v1248
        %v3198 = vunpack.c.h.b16 %v1248
        %v3199 = vunpack.c.l.b16 %v1249
        %v3200 = vunpack.c.h.b16 %v1249
        %v3201 = vunpack.c.l.b16 %v1250
        %v3202 = vunpack.c.h.b16 %v1250
        %v3203 = vunpack.c.l.b16 %v1251
        %v3204 = vunpack.c.h.b16 %v1251
        %v3205 = vunpack.c.l.b16 %v1252
        %v3206 = vunpack.c.h.b16 %v1252
        %v3207 = vunpack.c.l.b16 %v1253
        %v3208 = vunpack.c.h.b16 %v1253
        %v3209 = vunpack.c.l.b16 %v1254
        %v3210 = vunpack.c.h.b16 %v1254
        %v3211 = vunpack.c.l.b16 %v1255
        %v3212 = vunpack.c.h.b16 %v1255
        %v3213 = vunpack.c.l.b16 %v1256
        %v3214 = vunpack.c.h.b16 %v1256
        %v3215 = vunpack.c.l.b16 %v1257
        %v3216 = vunpack.c.h.b16 %v1257
        %v3217 = vunpack.c.l.b16 %v1258
        %v3218 = vunpack.c.h.b16 %v1258
        %v3219 = vunpack.c.l.b16 %v1259
        %v3220 = vunpack.c.h.b16 %v1259
        %v3221 = vunpack.c.l.b16 %v1260
        %v3222 = vunpack.c.h.b16 %v1260
        %v3223 = vunpack.c.l.b16 %v1261
        %v3224 = vunpack.c.h.b16 %v1261
        %v3225 = vunpack.c.l.b16 %v1262
        %v3226 = vunpack.c.h.b16 %v1262
        %v3227 = vunpack.c.l.b16 %v1263
        %v3228 = vunpack.c.h.b16 %v1263
        %v3229 = vunpack.c.l.b16 %v1264
        %v3230 = vunpack.c.h.b16 %v1264
        %v3231 = vunpack.c.l.b16 %v1265
        %v3232 = vunpack.c.h.b16 %v1265
        %v3233 = vunpack.c.l.b16 %v1266
        %v3234 = vunpack.c.h.b16 %v1266
        %v3235 = vunpack.c.l.b16 %v1267
        %v3236 = vunpack.c.h.b16 %v1267
        %v3237 = vunpack.c.l.b16 %v1268
        %v3238 = vunpack.c.h.b16 %v1268
        %v3239 = vunpack.c.l.b16 %v1269
        %v3240 = vunpack.c.h.b16 %v1269
        %v3241 = vunpack.c.l.b16 %v1270
        %v3242 = vunpack.c.h.b16 %v1270
        %v3243 = vunpack.c.l.b16 %v1271
        %v3244 = vunpack.c.h.b16 %v1271
        %v3245 = vunpack.c.l.b16 %v1272
        %v3246 = vunpack.c.h.b16 %v1272
        %v3247 = vunpack.c.l.b16 %v1273
        %v3248 = vunpack.c.h.b16 %v1273
        %v3249 = vunpack.c.l.b16 %v1274
        %v3250 = vunpack.c.h.b16 %v1274
        %v3251 = vunpack.c.l.b16 %v1275
        %v3252 = vunpack.c.h.b16 %v1275
        %v3253 = vunpack.c.l.b16 %v1276
        %v3254 = vunpack.c.h.b16 %v1276
        %v3255 = vunpack.c.l.b16 %v1277
        %v3256 = vunpack.c.h.b16 %v1277
        %v3257 = vunpack.c.l.b16 %v1278
        %v3258 = vunpack.c.h.b16 %v1278
        %v3259 = vunpack.c.l.b16 %v1279
        %v3260 = vunpack.c.h.b16 %v1279
        %v3261 = vunpack.c.l.b16 %v1280
        %v3262 = vunpack.c.h.b16 %v1280
        %v3263 = vunpack.c.l.b16 %v1281
        %v3264 = vunpack.c.h.b16 %v1281
        %v3265 = vunpack.c.l.b16 %v1282
        %v3266 = vunpack.c.h.b16 %v1282
        %v3267 = vunpack.c.l.b16 %v1283
        %v3268 = vunpack.c.h.b16 %v1283
        %v3269 = vunpack.c.l.b16 %v1284
        %v3270 = vunpack.c.h.b16 %v1284
        %v3271 = vunpack.c.l.b16 %v1285
        %v3272 = vunpack.c.h.b16 %v1285
        %v3273 = vunpack.c.l.b16 %v1286
        %v3274 = vunpack.c.h.b16 %v1286
        %v3275 = vunpack.c.l.b16 %v1287
        %v3276 = vunpack.c.h.b16 %v1287
        %v3277 = vunpack.c.l.b16 %v1288
        %v3278 = vunpack.c.h.b16 %v1288
        %v3279 = vunpack.c.l.b16 %v1289
        %v3280 = vunpack.c.h.b16 %v1289
        %v3281 = vunpack.c.l.b16 %v1290
        %v3282 = vunpack.c.h.b16 %v1290
        %v3283 = vunpack.c.l.b16 %v1291
        %v3284 = vunpack.c.h.b16 %v1291
        %v3285 = vunpack.c.l.b16 %v1292
        %v3286 = vunpack.c.h.b16 %v1292
        %v3287 = vunpack.c.l.b16 %v1293
        %v3288 = vunpack.c.h.b16 %v1293
        %v3289 = vunpack.c.l.b16 %v1294
        %v3290 = vunpack.c.h.b16 %v1294
        %v3291 = vunpack.c.l.b16 %v1295
        %v3292 = vunpack.c.h.b16 %v1295
        %v3293 = vunpack.c.l.b16 %v1296
        %v3294 = vunpack.c.h.b16 %v1296
        %v3295 = vunpack.c.l.b16 %v1297
        %v3296 = vunpack.c.h.b16 %v1297
        %v3297 = vunpack.c.l.b16 %v1298
        %v3298 = vunpack.c.h.b16 %v1298
        %v3299 = vunpack.c.l.b16 %v1299
        %v3300 = vunpack.c.h.b16 %v1299
        %v3301 = vunpack.c.l.b16 %v1300
        %v3302 = vunpack.c.h.b16 %v1300
        %v3303 = vunpack.c.l.b16 %v1301
        %v3304 = vunpack.c.h.b16 %v1301
        %v3305 = vunpack.c.l.b16 %v1302
        %v3306 = vunpack.c.h.b16 %v1302
        %v3307 = vunpack.c.l.b16 %v1303
        %v3308 = vunpack.c.h.b16 %v1303
        %v3309 = vunpack.c.l.b16 %v1304
        %v3310 = vunpack.c.h.b16 %v1304
        %v3311 = vunpack.c.l.b16 %v1305
        %v3312 = vunpack.c.h.b16 %v1305
        %v3313 = vunpack.c.l.b16 %v1306
        %v3314 = vunpack.c.h.b16 %v1306
        %v3315 = vunpack.c.l.b16 %v1307
        %v3316 = vunpack.c.h.b16 %v1307
        %v3317 = vunpack.c.l.b16 %v1308
        %v3318 = vunpack.c.h.b16 %v1308
        %v3319 = vunpack.c.l.b16 %v1309
        %v3320 = vunpack.c.h.b16 %v1309
        %v3321 = vunpack.c.l.b16 %v1310
        %v3322 = vunpack.c.h.b16 %v1310
        %v3323 = vunpack.c.l.b16 %v1311
        %v3324 = vunpack.c.h.b16 %v1311
        %v3325 = vunpack.c.l.b16 %v1312
        %v3326 = vunpack.c.h.b16 %v1312
        %v3327 = vunpack.c.l.b16 %v1313
        %v3328 = vunpack.c.h.b16 %v1313
        %v3329 = vunpack.c.l.b16 %v1314
        %v3330 = vunpack.c.h.b16 %v1314
        %v3331 = vunpack.c.l.b16 %v1315
        %v3332 = vunpack.c.h.b16 %v1315
        %v3333 = vunpack.c.l.b16 %v1316
        %v3334 = vunpack.c.h.b16 %v1316
        %v3335 = vunpack.c.l.b16 %v1317
        %v3336 = vunpack.c.h.b16 %v1317
        %v3337 = vunpack.c.l.b16 %v1318
        %v3338 = vunpack.c.h.b16 %v1318
        %v3339 = vunpack.c.l.b16 %v1319
        %v3340 = vunpack.c.h.b16 %v1319
        %v3341 = vunpack.c.l.b16 %v1320
        %v3342 = vunpack.c.h.b16 %v1320
        %v3343 = vunpack.c.l.b16 %v1321
        %v3344 = vunpack.c.h.b16 %v1321
        %v3345 = vunpack.c.l.b16 %v1322
        %v3346 = vunpack.c.h.b16 %v1322
        %v3347 = vunpack.c.l.b16 %v1323
        %v3348 = vunpack.c.h.b16 %v1323
        %v3349 = vunpack.c.l.b16 %v1324
        %v3350 = vunpack.c.h.b16 %v1324
        %v3351 = vunpack.c.l.b16 %v1325
        %v3352 = vunpack.c.h.b16 %v1325
        %v3353 = vunpack.c.l.b16 %v1326
        %v3354 = vunpack.c.h.b16 %v1326
        %v3355 = vunpack.c.l.b16 %v1327
        %v3356 = vunpack.c.h.b16 %v1327
        %v3357 = vunpack.c.l.b16 %v1328
        %v3358 = vunpack.c.h.b16 %v1328
        %v3359 = vunpack.c.l.b16 %v1329
        %v3360 = vunpack.c.h.b16 %v1329
        %v3361 = vunpack.c.l.b16 %v1330
        %v3362 = vunpack.c.h.b16 %v1330
        %v3363 = vunpack.c.l.b16 %v1331
        %v3364 = vunpack.c.h.b16 %v1331
        %v3365 = vunpack.c.l.b16 %v1332
        %v3366 = vunpack.c.h.b16 %v1332
        %v3367 = vunpack.c.l.b16 %v1333
        %v3368 = vunpack.c.h.b16 %v1333
        %v3369 = vunpack.c.l.b16 %v1334
        %v3370 = vunpack.c.h.b16 %v1334
        %v3371 = vunpack.c.l.b16 %v1335
        %v3372 = vunpack.c.h.b16 %v1335
        %v3373 = vunpack.c.l.b16 %v1336
        %v3374 = vunpack.c.h.b16 %v1336
        %v3375 = vunpack.c.l.b16 %v1337
        %v3376 = vunpack.c.h.b16 %v1337
        %v3377 = vunpack.c.l.b16 %v1338
        %v3378 = vunpack.c.h.b16 %v1338
        %v3379 = vunpack.c.l.b16 %v1339
        %v3380 = vunpack.c.h.b16 %v1339
        %v3381 = vunpack.c.l.b16 %v1340
        %v3382 = vunpack.c.h.b16 %v1340
        %v3383 = vunpack.c.l.b16 %v1341
        %v3384 = vunpack.c.h.b16 %v1341
        %v3385 = vunpack.c.l.b16 %v1342
        %v3386 = vunpack.c.h.b16 %v1342
        %v3387 = vunpack.c.l.b16 %v1343
        %v3388 = vunpack.c.h.b16 %v1343
        %v3389 = vunpack.c.l.b16 %v1344
        %v3390 = vunpack.c.h.b16 %v1344
        %v3391 = vunpack.c.l.b16 %v1345
        %v3392 = vunpack.c.h.b16 %v1345
        %v3393 = vunpack.c.l.b16 %v1346
        %v3394 = vunpack.c.h.b16 %v1346
        %v3395 = vunpack.c.l.b16 %v1347
        %v3396 = vunpack.c.h.b16 %v1347
        %v3397 = vunpack.c.l.b16 %v1348
        %v3398 = vunpack.c.h.b16 %v1348
        %v3399 = vunpack.c.l.b16 %v1349
        %v3400 = vunpack.c.h.b16 %v1349
        %v3401 = vunpack.c.l.b16 %v1350
        %v3402 = vunpack.c.h.b16 %v1350
        %v3403 = vunpack.c.l.b16 %v1351
        %v3404 = vunpack.c.h.b16 %v1351
        %v3405 = vunpack.c.l.b16 %v1352
        %v3406 = vunpack.c.h.b16 %v1352
        %v3407 = vunpack.c.l.b16 %v1353
        %v3408 = vunpack.c.h.b16 %v1353
        %v3409 = vunpack.c.l.b16 %v1354
        %v3410 = vunpack.c.h.b16 %v1354
        %v3411 = vunpack.c.l.b16 %v1355
        %v3412 = vunpack.c.h.b16 %v1355
        %v3413 = vunpack.c.l.b16 %v1356
        %v3414 = vunpack.c.h.b16 %v1356
        %v3415 = vunpack.c.l.b16 %v1357
        %v3416 = vunpack.c.h.b16 %v1357
        %v3417 = vunpack.c.l.b16 %v1358
        %v3418 = vunpack.c.h.b16 %v1358
        %v3419 = vunpack.c.l.b16 %v1359
        %v3420 = vunpack.c.h.b16 %v1359
        %v3421 = vunpack.c.l.b16 %v1360
        %v3422 = vunpack.c.h.b16 %v1360
        %v3423 = vunpack.c.l.b16 %v1361
        %v3424 = vunpack.c.h.b16 %v1361
        %v3425 = vunpack.c.l.b16 %v1362
        %v3426 = vunpack.c.h.b16 %v1362
        %v3427 = vunpack.c.l.b16 %v1363
        %v3428 = vunpack.c.h.b16 %v1363
        %v3429 = vunpack.c.l.b16 %v1364
        %v3430 = vunpack.c.h.b16 %v1364
        %v3431 = vunpack.c.l.b16 %v1365
        %v3432 = vunpack.c.h.b16 %v1365
        %v3433 = vunpack.c.l.b16 %v1366
        %v3434 = vunpack.c.h.b16 %v1366
        %v3435 = vunpack.c.l.b16 %v1367
        %v3436 = vunpack.c.h.b16 %v1367
        %v3437 = vunpack.c.l.b16 %v1368
        %v3438 = vunpack.c.h.b16 %v1368
        %v3439 = vunpack.c.l.b16 %v1369
        %v3440 = vunpack.c.h.b16 %v1369
        %v3441 = vunpack.c.l.b16 %v1370
        %v3442 = vunpack.c.h.b16 %v1370
        %v3443 = vunpack.c.l.b16 %v1371
        %v3444 = vunpack.c.h.b16 %v1371
        %v3445 = vunpack.c.l.b16 %v1372
        %v3446 = vunpack.c.h.b16 %v1372
        %v3447 = vunpack.c.l.b16 %v1373
        %v3448 = vunpack.c.h.b16 %v1373
        %v3449 = vunpack.c.l.b16 %v1374
        %v3450 = vunpack.c.h.b16 %v1374
        %v3451 = vunpack.c.l.b16 %v1375
        %v3452 = vunpack.c.h.b16 %v1375
        %v3453 = vunpack.c.l.b16 %v1376
        %v3454 = vunpack.c.h.b16 %v1376
        %v3455 = vunpack.c.l.b16 %v1377
        %v3456 = vunpack.c.h.b16 %v1377
        %v3457 = vunpack.c.l.b16 %v1378
        %v3458 = vunpack.c.h.b16 %v1378
        %v3459 = vunpack.c.l.b16 %v1379
        %v3460 = vunpack.c.h.b16 %v1379
        %v3461 = vunpack.c.l.b16 %v1380
        %v3462 = vunpack.c.h.b16 %v1380
        %v3463 = vunpack.c.l.b16 %v1381
        %v3464 = vunpack.c.h.b16 %v1381
        %v3465 = vunpack.c.l.b16 %v1382
        %v3466 = vunpack.c.h.b16 %v1382
        %v3467 = vunpack.c.l.b16 %v1383
        %v3468 = vunpack.c.h.b16 %v1383
        %v3469 = vunpack.c.l.b16 %v1384
        %v3470 = vunpack.c.h.b16 %v1384
        %v3471 = vunpack.c.l.b16 %v1385
        %v3472 = vunpack.c.h.b16 %v1385
        %v3473 = vunpack.c.l.b16 %v1386
        %v3474 = vunpack.c.h.b16 %v1386
        %v3475 = vunpack.c.l.b16 %v1387
        %v3476 = vunpack.c.h.b16 %v1387
        %v3477 = vunpack.c.l.b16 %v1388
        %v3478 = vunpack.c.h.b16 %v1388
        %v3479 = vunpack.c.l.b16 %v1389
        %v3480 = vunpack.c.h.b16 %v1389
        %v3481 = vunpack.c.l.b16 %v1390
        %v3482 = vunpack.c.h.b16 %v1390
        %v3483 = vunpack.c.l.b16 %v1391
        %v3484 = vunpack.c.h.b16 %v1391
        %v3485 = vunpack.c.l.b16 %v1392
        %v3486 = vunpack.c.h.b16 %v1392
        %v3487 = vunpack.c.l.b16 %v1393
        %v3488 = vunpack.c.h.b16 %v1393
        %v3489 = vunpack.c.l.b16 %v1394
        %v3490 = vunpack.c.h.b16 %v1394
        %v3491 = vunpack.c.l.b16 %v1395
        %v3492 = vunpack.c.h.b16 %v1395
        %v3493 = vunpack.c.l.b16 %v1396
        %v3494 = vunpack.c.h.b16 %v1396
        %v3495 = vunpack.c.l.b16 %v1397
        %v3496 = vunpack.c.h.b16 %v1397
        %v3497 = vunpack.c.l.b16 %v1398
        %v3498 = vunpack.c.h.b16 %v1398
        %v3499 = vunpack.c.l.b16 %v1399
        %v3500 = vunpack.c.h.b16 %v1399
        %v3501 = vunpack.c.l.b16 %v1400
        %v3502 = vunpack.c.h.b16 %v1400
        %v3503 = vunpack.c.l.b16 %v1401
        %v3504 = vunpack.c.h.b16 %v1401
        %v3505 = vunpack.c.l.b16 %v1402
        %v3506 = vunpack.c.h.b16 %v1402
        %v3507 = vunpack.c.l.b16 %v1403
        %v3508 = vunpack.c.h.b16 %v1403
        %v3509 = vunpack.c.l.b16 %v1404
        %v3510 = vunpack.c.h.b16 %v1404
        %v3511 = vunpack.c.l.b16 %v1405
        %v3512 = vunpack.c.h.b16 %v1405
        %v3513 = vunpack.c.l.b16 %v1406
        %v3514 = vunpack.c.h.b16 %v1406
        %v3515 = vunpack.c.l.b16 %v1407
        %v3516 = vunpack.c.h.b16 %v1407
        %v3517 = vunpack.c.l.b16 %v1408
        %v3518 = vunpack.c.h.b16 %v1408
        %v3519 = vunpack.c.l.b16 %v1409
        %v3520 = vunpack.c.h.b16 %v1409
        %v3521 = vunpack.c.l.b16 %v1410
        %v3522 = vunpack.c.h.b16 %v1410
        %v3523 = vunpack.c.l.b16 %v1411
        %v3524 = vunpack.c.h.b16 %v1411
        %v3525 = vunpack.c.l.b16 %v1412
        %v3526 = vunpack.c.h.b16 %v1412
        %v3527 = vunpack.c.l.b16 %v1413
        %v3528 = vunpack.c.h.b16 %v1413
        %v3529 = vunpack.c.l.b16 %v1414
        %v3530 = vunpack.c.h.b16 %v1414
        %v3531 = vunpack.c.l.b16 %v1415
        %v3532 = vunpack.c.h.b16 %v1415
        %v3533 = vunpack.c.l.b16 %v1416
        %v3534 = vunpack.c.h.b16 %v1416
        %v3535 = vunpack.c.l.b16 %v1417
        %v3536 = vunpack.c.h.b16 %v1417
        %v3537 = vunpack.c.l.b16 %v1418
        %v3538 = vunpack.c.h.b16 %v1418
        %v3539 = vunpack.c.l.b16 %v1419
        %v3540 = vunpack.c.h.b16 %v1419
        %v3541 = vunpack.c.l.b16 %v1420
        %v3542 = vunpack.c.h.b16 %v1420
        %v3543 = vunpack.c.l.b16 %v1421
        %v3544 = vunpack.c.h.b16 %v1421
        %v3545 = vunpack.c.l.b16 %v1422
        %v3546 = vunpack.c.h.b16 %v1422
        %v3547 = vunpack.c.l.b16 %v1423
        %v3548 = vunpack.c.h.b16 %v1423
        %v3549 = vunpack.c.l.b16 %v1424
        %v3550 = vunpack.c.h.b16 %v1424
        %v3551 = vunpack.c.l.b16 %v1425
        %v3552 = vunpack.c.h.b16 %v1425
        %v3553 = vunpack.c.l.b16 %v1426
        %v3554 = vunpack.c.h.b16 %v1426
        %v3555 = vunpack.c.l.b16 %v1427
        %v3556 = vunpack.c.h.b16 %v1427
        %v3557 = vunpack.c.l.b16 %v1428
        %v3558 = vunpack.c.h.b16 %v1428
        %v3559 = vunpack.c.l.b16 %v1429
        %v3560 = vunpack.c.h.b16 %v1429
        %v3561 = vunpack.c.l.b16 %v1430
        %v3562 = vunpack.c.h.b16 %v1430
        %v3563 = vunpack.c.l.b16 %v1431
        %v3564 = vunpack.c.h.b16 %v1431
        %v3565 = vunpack.c.l.b16 %v1432
        %v3566 = vunpack.c.h.b16 %v1432
        %v3567 = vunpack.c.l.b16 %v1433
        %v3568 = vunpack.c.h.b16 %v1433
        %v3569 = vunpack.c.l.b16 %v1434
        %v3570 = vunpack.c.h.b16 %v1434
        %v3571 = vunpack.c.l.b16 %v1435
        %v3572 = vunpack.c.h.b16 %v1435
        %v3573 = vunpack.c.l.b16 %v1436
        %v3574 = vunpack.c.h.b16 %v1436
        %v3575 = vunpack.c.l.b16 %v1437
        %v3576 = vunpack.c.h.b16 %v1437
        %v3577 = vunpack.c.l.b16 %v1438
        %v3578 = vunpack.c.h.b16 %v1438
        %v3579 = vunpack.c.l.b16 %v1439
        %v3580 = vunpack.c.h.b16 %v1439
        %v3581 = vunpack.c.l.b16 %v1440
        %v3582 = vunpack.c.h.b16 %v1440
        %v3583 = vunpack.c.l.b16 %v1441
        %v3584 = vunpack.c.h.b16 %v1441
        %v3585 = vunpack.c.l.b16 %v1442
        %v3586 = vunpack.c.h.b16 %v1442
        %v3587 = vunpack.c.l.b16 %v1443
        %v3588 = vunpack.c.h.b16 %v1443
        %v3589 = vunpack.c.l.b16 %v1444
        %v3590 = vunpack.c.h.b16 %v1444
        %v3591 = vunpack.c.l.b16 %v1445
        %v3592 = vunpack.c.h.b16 %v1445
        %v3593 = vunpack.c.l.b16 %v1446
        %v3594 = vunpack.c.h.b16 %v1446
        %v3595 = vunpack.c.l.b16 %v1447
        %v3596 = vunpack.c.h.b16 %v1447
        %v3597 = vunpack.c.l.b16 %v1448
        %v3598 = vunpack.c.h.b16 %v1448
        %v3599 = vunpack.c.l.b16 %v1449
        %v3600 = vunpack.c.h.b16 %v1449
        %v3601 = vunpack.c.l.b16 %v1450
        %v3602 = vunpack.c.h.b16 %v1450
        %v3603 = vunpack.c.l.b16 %v1451
        %v3604 = vunpack.c.h.b16 %v1451
        %v3605 = vunpack.c.l.b16 %v1452
        %v3606 = vunpack.c.h.b16 %v1452
        %v3607 = vunpack.c.l.b16 %v1453
        %v3608 = vunpack.c.h.b16 %v1453
        %v3609 = vunpack.c.l.b16 %v1454
        %v3610 = vunpack.c.h.b16 %v1454
        %v3611 = vunpack.c.l.b16 %v1455
        %v3612 = vunpack.c.h.b16 %v1455
        %v3613 = vunpack.c.l.b16 %v1456
        %v3614 = vunpack.c.h.b16 %v1456
        %v3615 = vunpack.c.l.b16 %v1457
        %v3616 = vunpack.c.h.b16 %v1457
        %v3617 = vunpack.c.l.b16 %v1458
        %v3618 = vunpack.c.h.b16 %v1458
        %v3619 = vunpack.c.l.b16 %v1459
        %v3620 = vunpack.c.h.b16 %v1459
        %v3621 = vunpack.c.l.b16 %v1460
        %v3622 = vunpack.c.h.b16 %v1460
        %v3623 = vunpack.c.l.b16 %v1461
        %v3624 = vunpack.c.h.b16 %v1461
        %v3625 = vunpack.c.l.b16 %v1462
        %v3626 = vunpack.c.h.b16 %v1462
        %v3627 = vunpack.c.l.b16 %v1463
        %v3628 = vunpack.c.h.b16 %v1463
        %v3629 = vunpack.c.l.b16 %v1464
        %v3630 = vunpack.c.h.b16 %v1464
        %v3631 = vunpack.c.l.b16 %v1465
        %v3632 = vunpack.c.h.b16 %v1465
        %v3633 = vunpack.c.l.b16 %v1466
        %v3634 = vunpack.c.h.b16 %v1466
        %v3635 = vunpack.c.l.b16 %v1467
        %v3636 = vunpack.c.h.b16 %v1467
        %v3637 = vunpack.c.l.b16 %v1468
        %v3638 = vunpack.c.h.b16 %v1468
        %v3639 = vunpack.c.l.b16 %v1469
        %v3640 = vunpack.c.h.b16 %v1469
        %v3641 = vunpack.c.l.b16 %v1470
        %v3642 = vunpack.c.h.b16 %v1470
        %v3643 = vunpack.c.l.b16 %v1471
        %v3644 = vunpack.c.h.b16 %v1471
        %v3645 = vunpack.c.l.b16 %v1472
        %v3646 = vunpack.c.h.b16 %v1472
        %v3647 = vunpack.c.l.b16 %v1473
        %v3648 = vunpack.c.h.b16 %v1473
        %v3649 = vunpack.c.l.b16 %v1474
        %v3650 = vunpack.c.h.b16 %v1474
        %v3651 = vunpack.c.l.b16 %v1475
        %v3652 = vunpack.c.h.b16 %v1475
        %v3653 = vunpack.c.l.b16 %v1476
        %v3654 = vunpack.c.h.b16 %v1476
        %v3655 = vunpack.c.l.b16 %v1477
        %v3656 = vunpack.c.h.b16 %v1477
        %v3657 = vunpack.c.l.b16 %v1478
        %v3658 = vunpack.c.h.b16 %v1478
        %v3659 = vunpack.c.l.b16 %v1479
        %v3660 = vunpack.c.h.b16 %v1479
        %v3661 = vunpack.c.l.b16 %v1480
        %v3662 = vunpack.c.h.b16 %v1480
        %v3663 = vunpack.c.l.b16 %v1481
        %v3664 = vunpack.c.h.b16 %v1481
        %v3665 = vunpack.c.l.b16 %v1482
        %v3666 = vunpack.c.h.b16 %v1482
        %v3667 = vunpack.c.l.b16 %v1483
        %v3668 = vunpack.c.h.b16 %v1483
        %v3669 = vunpack.c.l.b16 %v1484
        %v3670 = vunpack.c.h.b16 %v1484
        %v3671 = vunpack.c.l.b16 %v1485
        %v3672 = vunpack.c.h.b16 %v1485
        %v3673 = vunpack.c.l.b16 %v1486
        %v3674 = vunpack.c.h.b16 %v1486
        %v3675 = vunpack.c.l.b16 %v1487
        %v3676 = vunpack.c.h.b16 %v1487
        %v3677 = vunpack.c.l.b16 %v1488
        %v3678 = vunpack.c.h.b16 %v1488
        %v3679 = vunpack.c.l.b16 %v1489
        %v3680 = vunpack.c.h.b16 %v1489
        %v3681 = vunpack.c.l.b16 %v1490
        %v3682 = vunpack.c.h.b16 %v1490
        %v3683 = vunpack.c.l.b16 %v1491
        %v3684 = vunpack.c.h.b16 %v1491
        %v3685 = vunpack.c.l.b16 %v1492
        %v3686 = vunpack.c.h.b16 %v1492
        %v3687 = vunpack.c.l.b16 %v1493
        %v3688 = vunpack.c.h.b16 %v1493
        %v3689 = vunpack.c.l.b16 %v1494
        %v3690 = vunpack.c.h.b16 %v1494
        %v3691 = vunpack.c.l.b16 %v1495
        %v3692 = vunpack.c.h.b16 %v1495
        %v3693 = vunpack.c.l.b16 %v1496
        %v3694 = vunpack.c.h.b16 %v1496
        %v3695 = vunpack.c.l.b16 %v1497
        %v3696 = vunpack.c.h.b16 %v1497
        %v3697 = vunpack.c.l.b16 %v1498
        %v3698 = vunpack.c.h.b16 %v1498
        %v3699 = vunpack.c.l.b16 %v1499
        %v3700 = vunpack.c.h.b16 %v1499
        %v3701 = vunpack.c.l.b16 %v1500
        %v3702 = vunpack.c.h.b16 %v1500
        %v3703 = vunpack.c.l.b16 %v1501
        %v3704 = vunpack.c.h.b16 %v1501
        %v3705 = vunpack.c.l.b16 %v1502
        %v3706 = vunpack.c.h.b16 %v1502
        %v3707 = vunpack.c.l.b16 %v1503
        %v3708 = vunpack.c.h.b16 %v1503
        %v3709 = vunpack.c.l.b16 %v1504
        %v3710 = vunpack.c.h.b16 %v1504
        %v3711 = vunpack.c.l.b16 %v1505
        %v3712 = vunpack.c.h.b16 %v1505
        %v3713 = vunpack.c.l.b16 %v1506
        %v3714 = vunpack.c.h.b16 %v1506
        %v3715 = vunpack.c.l.b16 %v1507
        %v3716 = vunpack.c.h.b16 %v1507
        %v3717 = vunpack.c.l.b16 %v1508
        %v3718 = vunpack.c.h.b16 %v1508
        %v3719 = vunpack.c.l.b16 %v1509
        %v3720 = vunpack.c.h.b16 %v1509
        %v3721 = vunpack.c.l.b16 %v1510
        %v3722 = vunpack.c.h.b16 %v1510
        %v3723 = vunpack.c.l.b16 %v1511
        %v3724 = vunpack.c.h.b16 %v1511
        %v3725 = vunpack.c.l.b16 %v1512
        %v3726 = vunpack.c.h.b16 %v1512
        %v3727 = vunpack.c.l.b16 %v1513
        %v3728 = vunpack.c.h.b16 %v1513
        %v3729 = vunpack.c.l.b16 %v1514
        %v3730 = vunpack.c.h.b16 %v1514
        %v3731 = vunpack.c.l.b16 %v1515
        %v3732 = vunpack.c.h.b16 %v1515
        %v3733 = vunpack.c.l.b16 %v1516
        %v3734 = vunpack.c.h.b16 %v1516
        %v3735 = vunpack.c.l.b16 %v1517
        %v3736 = vunpack.c.h.b16 %v1517
        %v3737 = vunpack.c.l.b16 %v1518
        %v3738 = vunpack.c.h.b16 %v1518
        %v3739 = vunpack.c.l.b16 %v1519
        %v3740 = vunpack.c.h.b16 %v1519
        %v3741 = vunpack.c.l.b16 %v1520
        %v3742 = vunpack.c.h.b16 %v1520
        %v3743 = vunpack.c.l.b16 %v1521
        %v3744 = vunpack.c.h.b16 %v1521
        %v3745 = vunpack.c.l.b16 %v1522
        %v3746 = vunpack.c.h.b16 %v1522
        %v3747 = vunpack.c.l.b16 %v1523
        %v3748 = vunpack.c.h.b16 %v1523
        %v3749 = vunpack.c.l.b16 %v1524
        %v3750 = vunpack.c.h.b16 %v1524
        %v3751 = vunpack.c.l.b16 %v1525
        %v3752 = vunpack.c.h.b16 %v1525
        %v3753 = vunpack.c.l.b16 %v1526
        %v3754 = vunpack.c.h.b16 %v1526
        %v3755 = vunpack.c.l.b16 %v1527
        %v3756 = vunpack.c.h.b16 %v1527
        %v3757 = vunpack.c.l.b16 %v1528
        %v3758 = vunpack.c.h.b16 %v1528
        %v3759 = vunpack.c.l.b16 %v1529
        %v3760 = vunpack.c.h.b16 %v1529
        %v3761 = vunpack.c.l.b16 %v1530
        %v3762 = vunpack.c.h.b16 %v1530
        %v3763 = vunpack.c.l.b16 %v1531
        %v3764 = vunpack.c.h.b16 %v1531
        %v3765 = vunpack.c.l.b16 %v1532
        %v3766 = vunpack.c.h.b16 %v1532
        %v3767 = vunpack.c.l.b16 %v1533
        %v3768 = vunpack.c.h.b16 %v1533
        %v3769 = vunpack.c.l.b16 %v1534
        %v3770 = vunpack.c.h.b16 %v1534
        %v3771 = vunpack.c.l.b16 %v1535
        %v3772 = vunpack.c.h.b16 %v1535
        %v3773 = vunpack.c.l.b16 %v1536
        %v3774 = vunpack.c.h.b16 %v1536
        %v3775 = vunpack.c.l.b16 %v1537
        %v3776 = vunpack.c.h.b16 %v1537
        %v3777 = vunpack.c.l.b16 %v1538
        %v3778 = vunpack.c.h.b16 %v1538
        %v3779 = vunpack.c.l.b16 %v1539
        %v3780 = vunpack.c.h.b16 %v1539
        %v3781 = vunpack.c.l.b16 %v1540
        %v3782 = vunpack.c.h.b16 %v1540
        %v3783 = vunpack.c.l.b16 %v1541
        %v3784 = vunpack.c.h.b16 %v1541
        %v3785 = vunpack.c.l.b16 %v1542
        %v3786 = vunpack.c.h.b16 %v1542
        %v3787 = vunpack.c.l.b16 %v1543
        %v3788 = vunpack.c.h.b16 %v1543
        %v3789 = vunpack.c.l.b16 %v1544
        %v3790 = vunpack.c.h.b16 %v1544
        %v3791 = vunpack.c.l.b16 %v1545
        %v3792 = vunpack.c.h.b16 %v1545
        %v3793 = vunpack.c.l.b16 %v1546
        %v3794 = vunpack.c.h.b16 %v1546
        %v3795 = vunpack.c.l.b16 %v1547
        %v3796 = vunpack.c.h.b16 %v1547
        %v3797 = vunpack.c.l.b16 %v1548
        %v3798 = vunpack.c.h.b16 %v1548
        %v3799 = vunpack.c.l.b16 %v1549
        %v3800 = vunpack.c.h.b16 %v1549
        %v3801 = vunpack.c.l.b16 %v1550
        %v3802 = vunpack.c.h.b16 %v1550
        %v3803 = vunpack.c.l.b16 %v1551
        %v3804 = vunpack.c.h.b16 %v1551
        %v3805 = vunpack.c.l.b16 %v1552
        %v3806 = vunpack.c.h.b16 %v1552
        %v3807 = vunpack.c.l.b16 %v1553
        %v3808 = vunpack.c.h.b16 %v1553
        %v3809 = vunpack.c.l.b16 %v1554
        %v3810 = vunpack.c.h.b16 %v1554
        %v3811 = vunpack.c.l.b16 %v1555
        %v3812 = vunpack.c.h.b16 %v1555
        %v3813 = vunpack.c.l.b16 %v1556
        %v3814 = vunpack.c.h.b16 %v1556
        %v3815 = vunpack.c.l.b16 %v1557
        %v3816 = vunpack.c.h.b16 %v1557
        %v3817 = vunpack.c.l.b16 %v1558
        %v3818 = vunpack.c.h.b16 %v1558
        %v3819 = vunpack.c.l.b16 %v1559
        %v3820 = vunpack.c.h.b16 %v1559
        %v3821 = vunpack.c.l.b16 %v1560
        %v3822 = vunpack.c.h.b16 %v1560
        %v3823 = vunpack.c.l.b16 %v1561
        %v3824 = vunpack.c.h.b16 %v1561
        %v3825 = vunpack.c.l.b16 %v1562
        %v3826 = vunpack.c.h.b16 %v1562
        %v3827 = vunpack.c.l.b16 %v1563
        %v3828 = vunpack.c.h.b16 %v1563
        %v3829 = vunpack.c.l.b16 %v1564
        %v3830 = vunpack.c.h.b16 %v1564
        %v3831 = vunpack.c.l.b16 %v1565
        %v3832 = vunpack.c.h.b16 %v1565
        %v3833 = vunpack.c.l.b16 %v1566
        %v3834 = vunpack.c.h.b16 %v1566
        %v3835 = vunpack.c.l.b16 %v1567
        %v3836 = vunpack.c.h.b16 %v1567
        %v3837 = vunpack.c.l.b16 %v1568
        %v3838 = vunpack.c.h.b16 %v1568
        %v3839 = vunpack.c.l.b16 %v1569
        %v3840 = vunpack.c.h.b16 %v1569
        %v3841 = vunpack.c.l.b16 %v1570
        %v3842 = vunpack.c.h.b16 %v1570
        %v3843 = vunpack.c.l.b16 %v1571
        %v3844 = vunpack.c.h.b16 %v1571
        %v3845 = vunpack.c.l.b16 %v1572
        %v3846 = vunpack.c.h.b16 %v1572
        %v3847 = vunpack.c.l.b16 %v1573
        %v3848 = vunpack.c.h.b16 %v1573
        %v3849 = vunpack.c.l.b16 %v1574
        %v3850 = vunpack.c.h.b16 %v1574
        %v3851 = vunpack.c.l.b16 %v1575
        %v3852 = vunpack.c.h.b16 %v1575
        %v3853 = vunpack.c.l.b16 %v1576
        %v3854 = vunpack.c.h.b16 %v1576
        %v3855 = vunpack.c.l.b16 %v1577
        %v3856 = vunpack.c.h.b16 %v1577
        %v3857 = vunpack.c.l.b16 %v1578
        %v3858 = vunpack.c.h.b16 %v1578
        %v3859 = vunpack.c.l.b16 %v1579
        %v3860 = vunpack.c.h.b16 %v1579
        %v3861 = vunpack.c.l.b16 %v1580
        %v3862 = vunpack.c.h.b16 %v1580
        %v3863 = vunpack.c.l.b16 %v1581
        %v3864 = vunpack.c.h.b16 %v1581
        %v3865 = vunpack.c.l.b16 %v1582
        %v3866 = vunpack.c.h.b16 %v1582
        %v3867 = vunpack.c.l.b16 %v1583
        %v3868 = vunpack.c.h.b16 %v1583
        %v3869 = vunpack.c.l.b16 %v1584
        %v3870 = vunpack.c.h.b16 %v1584
        %v3871 = vunpack.c.l.b16 %v1585
        %v3872 = vunpack.c.h.b16 %v1585
        %v3873 = vunpack.c.l.b16 %v1586
        %v3874 = vunpack.c.h.b16 %v1586
        %v3875 = vunpack.c.l.b16 %v1587
        %v3876 = vunpack.c.h.b16 %v1587
        %v3877 = vunpack.c.l.b16 %v1588
        %v3878 = vunpack.c.h.b16 %v1588
        %v3879 = vunpack.c.l.b16 %v1589
        %v3880 = vunpack.c.h.b16 %v1589
        %v3881 = vunpack.c.l.b16 %v1590
        %v3882 = vunpack.c.h.b16 %v1590
        %v3883 = vunpack.c.l.b16 %v1591
        %v3884 = vunpack.c.h.b16 %v1591
        %v3885 = vunpack.c.l.b16 %v1592
        %v3886 = vunpack.c.h.b16 %v1592
        %v3887 = vunpack.c.l.b16 %v1593
        %v3888 = vunpack.c.h.b16 %v1593
        %v3889 = vunpack.c.l.b16 %v1594
        %v3890 = vunpack.c.h.b16 %v1594
        %v3891 = vunpack.c.l.b16 %v1595
        %v3892 = vunpack.c.h.b16 %v1595
        %v3893 = vunpack.c.l.b16 %v1596
        %v3894 = vunpack.c.h.b16 %v1596
        %v3895 = vunpack.c.l.b16 %v1597
        %v3896 = vunpack.c.h.b16 %v1597
        %v3897 = vunpack.c.l.b16 %v1598
        %v3898 = vunpack.c.h.b16 %v1598
        %v3899 = vunpack.c.l.b16 %v1599
        %v3900 = vunpack.c.h.b16 %v1599
        %v3901 = vunpack.c.l.b16 %v1600
        %v3902 = vunpack.c.h.b16 %v1600
        %v3903 = vunpack.c.l.b16 %v1601
        %v3904 = vunpack.c.h.b16 %v1601
        %v3905 = vunpack.c.l.b16 %v1602
        %v3906 = vunpack.c.h.b16 %v1602
        %v3907 = vunpack.c.l.b16 %v1603
        %v3908 = vunpack.c.h.b16 %v1603
        %v3909 = vunpack.c.l.b16 %v1604
        %v3910 = vunpack.c.h.b16 %v1604
        %v3911 = vunpack.c.l.b16 %v1605
        %v3912 = vunpack.c.h.b16 %v1605
        %v3913 = vunpack.c.l.b16 %v1606
        %v3914 = vunpack.c.h.b16 %v1606
        %v3915 = vunpack.c.l.b16 %v1607
        %v3916 = vunpack.c.h.b16 %v1607
        %v3917 = vunpack.c.l.b16 %v1608
        %v3918 = vunpack.c.h.b16 %v1608
        %v3919 = vunpack.c.l.b16 %v1609
        %v3920 = vunpack.c.h.b16 %v1609
        %v3921 = vunpack.c.l.b16 %v1610
        %v3922 = vunpack.c.h.b16 %v1610
        %v3923 = vunpack.c.l.b16 %v1611
        %v3924 = vunpack.c.h.b16 %v1611
        %v3925 = vunpack.c.l.b16 %v1612
        %v3926 = vunpack.c.h.b16 %v1612
        %v3927 = vunpack.c.l.b16 %v1613
        %v3928 = vunpack.c.h.b16 %v1613
        %v3929 = vunpack.c.l.b16 %v1614
        %v3930 = vunpack.c.h.b16 %v1614
        %v3931 = vunpack.c.l.b16 %v1615
        %v3932 = vunpack.c.h.b16 %v1615
        %v3933 = vunpack.c.l.b16 %v1616
        %v3934 = vunpack.c.h.b16 %v1616
        %v3935 = vunpack.c.l.b16 %v1617
        %v3936 = vunpack.c.h.b16 %v1617
        %v3937 = vunpack.c.l.b16 %v1618
        %v3938 = vunpack.c.h.b16 %v1618
        %v3939 = vunpack.c.l.b16 %v1619
        %v3940 = vunpack.c.h.b16 %v1619
        %v3941 = vunpack.c.l.b16 %v1620
        %v3942 = vunpack.c.h.b16 %v1620
        %v3943 = vunpack.c.l.b16 %v1621
        %v3944 = vunpack.c.h.b16 %v1621
        %v3945 = vunpack.c.l.b16 %v1622
        %v3946 = vunpack.c.h.b16 %v1622
        %v3947 = vunpack.c.l.b16 %v1623
        %v3948 = vunpack.c.h.b16 %v1623
        %v3949 = vunpack.c.l.b16 %v1624
        %v3950 = vunpack.c.h.b16 %v1624
        %v3951 = vunpack.c.l.b16 %v1625
        %v3952 = vunpack.c.h.b16 %v1625
        %v3953 = vunpack.c.l.b16 %v1626
        %v3954 = vunpack.c.h.b16 %v1626
        %v3955 = vunpack.c.l.b16 %v1627
        %v3956 = vunpack.c.h.b16 %v1627
        %v3957 = vunpack.c.l.b16 %v1628
        %v3958 = vunpack.c.h.b16 %v1628
        %v3959 = vunpack.c.l.b16 %v1629
        %v3960 = vunpack.c.h.b16 %v1629
        %v3961 = vunpack.c.l.b16 %v1630
        %v3962 = vunpack.c.h.b16 %v1630
        %v3963 = vunpack.c.l.b16 %v1631
        %v3964 = vunpack.c.h.b16 %v1631
        %v3965 = vunpack.c.l.b16 %v1632
        %v3966 = vunpack.c.h.b16 %v1632
        %v3967 = vunpack.c.l.b16 %v1633
        %v3968 = vunpack.c.h.b16 %v1633
        %v3969 = vunpack.c.l.b16 %v1634
        %v3970 = vunpack.c.h.b16 %v1634
        %v3971 = vunpack.c.l.b16 %v1635
        %v3972 = vunpack.c.h.b16 %v1635
        %v3973 = vunpack.c.l.b16 %v1636
        %v3974 = vunpack.c.h.b16 %v1636
        %v3975 = vunpack.c.l.b16 %v1637
        %v3976 = vunpack.c.h.b16 %v1637
        %v3977 = vunpack.c.l.b16 %v1638
        %v3978 = vunpack.c.h.b16 %v1638
        %v3979 = vunpack.c.l.b16 %v1639
        %v3980 = vunpack.c.h.b16 %v1639
        %v3981 = vunpack.c.l.b16 %v1640
        %v3982 = vunpack.c.h.b16 %v1640
        %v3983 = vunpack.c.l.b16 %v1641
        %v3984 = vunpack.c.h.b16 %v1641
        %v3985 = vunpack.c.l.b16 %v1642
        %v3986 = vunpack.c.h.b16 %v1642
        %v3987 = vunpack.c.l.b16 %v1643
        %v3988 = vunpack.c.h.b16 %v1643
        %v3989 = vunpack.c.l.b16 %v1644
        %v3990 = vunpack.c.h.b16 %v1644
        %v3991 = vunpack.c.l.b16 %v1645
        %v3992 = vunpack.c.h.b16 %v1645
        %v3993 = vunpack.c.l.b16 %v1646
        %v3994 = vunpack.c.h.b16 %v1646
        %v3995 = vunpack.c.l.b16 %v1647
        %v3996 = vunpack.c.h.b16 %v1647
        %v3997 = vunpack.c.l.b16 %v1648
        %v3998 = vunpack.c.h.b16 %v1648
        %v3999 = vunpack.c.l.b16 %v1649
        %v4000 = vunpack.c.h.b16 %v1649
        %v4001 = vunpack.c.l.b16 %v1650
        %v4002 = vunpack.c.h.b16 %v1650
        %v4003 = vunpack.c.l.b16 %v1651
        %v4004 = vunpack.c.h.b16 %v1651
        %v4005 = vunpack.c.l.b16 %v1652
        %v4006 = vunpack.c.h.b16 %v1652
        %v4007 = vunpack.c.l.b16 %v1653
        %v4008 = vunpack.c.h.b16 %v1653
        %v4009 = vunpack.c.l.b16 %v1654
        %v4010 = vunpack.c.h.b16 %v1654
        %v4011 = vunpack.c.l.b16 %v1655
        %v4012 = vunpack.c.h.b16 %v1655
        %v4013 = vunpack.c.l.b16 %v1656
        %v4014 = vunpack.c.h.b16 %v1656
        %v4015 = vunpack.c.l.b16 %v1657
        %v4016 = vunpack.c.h.b16 %v1657
        %v4017 = vunpack.c.l.b16 %v1658
        %v4018 = vunpack.c.h.b16 %v1658
        %v4019 = vunpack.c.l.b16 %v1659
        %v4020 = vunpack.c.h.b16 %v1659
        %v4021 = vunpack.c.l.b16 %v1660
        %v4022 = vunpack.c.h.b16 %v1660
        %v4023 = vunpack.c.l.b16 %v1661
        %v4024 = vunpack.c.h.b16 %v1661
        %v4025 = vunpack.c.l.b16 %v1662
        %v4026 = vunpack.c.h.b16 %v1662
        %v4027 = vpack.c.b16 %v2503, %v2491
        %v4028 = vpack.c.b16 %v2504, %v2492
        %v4029 = vpack.c.b16 %v2505, %v2493
        %v4030 = vpack.c.b16 %v2506, %v2494
        %v4031 = vpack.c.b16 %v2507, %v2495
        %v4032 = vpack.c.b16 %v2508, %v2496
        %v4033 = vpack.c.b16 %v2509, %v2497
        %v4034 = vpack.c.b16 %v2510, %v2498
        %v4035 = vpack.c.b16 %v2511, %v2499
        %v4036 = vpack.c.b16 %v2512, %v2500
        %v4037 = vpack.c.b16 %v2513, %v2501
        %v4038 = vpack.c.b16 %v2514, %v2502
        %v4039 = vpack.c.b16 %v2527, %v2515
        %v4040 = vpack.c.b16 %v2528, %v2516
        %v4041 = vpack.c.b16 %v2529, %v2517
        %v4042 = vpack.c.b16 %v2530, %v2518
        %v4043 = vpack.c.b16 %v2531, %v2519
        %v4044 = vpack.c.b16 %v2532, %v2520
        %v4045 = vpack.c.b16 %v2533, %v2521
        %v4046 = vpack.c.b16 %v2534, %v2522
        %v4047 = vpack.c.b16 %v2535, %v2523
        %v4048 = vpack.c.b16 %v2536, %v2524
        %v4049 = vpack.c.b16 %v2537, %v2525
        %v4050 = vpack.c.b16 %v2538, %v2526
        %v4051 = vpack.c.b16 %v2551, %v2539
        %v4052 = vpack.c.b16 %v2552, %v2540
        %v4053 = vpack.c.b16 %v2553, %v2541
        %v4054 = vpack.c.b16 %v2554, %v2542
        %v4055 = vpack.c.b16 %v2555, %v2543
        %v4056 = vpack.c.b16 %v2556, %v2544
        %v4057 = vpack.c.b16 %v2557, %v2545
        %v4058 = vpack.c.b16 %v2558, %v2546
        %v4059 = vpack.c.b16 %v2559, %v2547
        %v4060 = vpack.c.b16 %v2560, %v2548
        %v4061 = vpack.c.b16 %v2561, %v2549
        %v4062 = vpack.c.b16 %v2562, %v2550
        %v4063 = vpack.c.b16 %v2575, %v2563
        %v4064 = vpack.c.b16 %v2576, %v2564
        %v4065 = vpack.c.b16 %v2577, %v2565
        %v4066 = vpack.c.b16 %v2578, %v2566
        %v4067 = vpack.c.b16 %v2579, %v2567
        %v4068 = vpack.c.b16 %v2580, %v2568
        %v4069 = vpack.c.b16 %v2581, %v2569
        %v4070 = vpack.c.b16 %v2582, %v2570
        %v4071 = vpack.c.b16 %v2583, %v2571
        %v4072 = vpack.c.b16 %v2584, %v2572
        %v4073 = vpack.c.b16 %v2585, %v2573
        %v4074 = vpack.c.b16 %v2586, %v2574
        %v4075 = vpack.c.b16 %v2599, %v2587
        %v4076 = vpack.c.b16 %v2600, %v2588
        %v4077 = vpack.c.b16 %v2601, %v2589
        %v4078 = vpack.c.b16 %v2602, %v2590
        %v4079 = vpack.c.b16 %v2603, %v2591
        %v4080 = vpack.c.b16 %v2604, %v2592
        %v4081 = vpack.c.b16 %v2605, %v2593
        %v4082 = vpack.c.b16 %v2606, %v2594
        %v4083 = vpack.c.b16 %v2607, %v2595
        %v4084 = vpack.c.b16 %v2608, %v2596
        %v4085 = vpack.c.b16 %v2609, %v2597
        %v4086 = vpack.c.b16 %v2610, %v2598
        %v4087 = vpack.c.b16 %v2623, %v2611
        %v4088 = vpack.c.b16 %v2624, %v2612
        %v4089 = vpack.c.b16 %v2625, %v2613
        %v4090 = vpack.c.b16 %v2626, %v2614
        %v4091 = vpack.c.b16 %v2627, %v2615
        %v4092 = vpack.c.b16 %v2628, %v2616
        %v4093 = vpack.c.b16 %v2629, %v2617
        %v4094 = vpack.c.b16 %v2630, %v2618
        %v4095 = vpack.c.b16 %v2631, %v2619
        %v4096 = vpack.c.b16 %v2632, %v2620
        %v4097 = vpack.c.b16 %v2633, %v2621
        %v4098 = vpack.c.b16 %v2634, %v2622
        %v4099 = vpack.c.b16 %v2647, %v2635
        %v4100 = vpack.c.b16 %v2648, %v2636
        %v4101 = vpack.c.b16 %v2649, %v2637
        %v4102 = vpack.c.b16 %v2650, %v2638
        %v4103 = vpack.c.b16 %v2651, %v2639
        %v4104 = vpack.c.b16 %v2652, %v2640
        %v4105 = vpack.c.b16 %v2653, %v2641
        %v4106 = vpack.c.b16 %v2654, %v2642
        %v4107 = vpack.c.b16 %v2655, %v2643
        %v4108 = vpack.c.b16 %v2656, %v2644
        %v4109 = vpack.c.b16 %v2657, %v2645
        %v4110 = vpack.c.b16 %v2658, %v2646
        %v4111 = vpack.c.b16 %v2671, %v2659
        %v4112 = vpack.c.b16 %v2672, %v2660
        %v4113 = vpack.c.b16 %v2673, %v2661
        %v4114 = vpack.c.b16 %v2674, %v2662
        %v4115 = vpack.c.b16 %v2675, %v2663
        %v4116 = vpack.c.b16 %v2676, %v2664
        %v4117 = vpack.c.b16 %v2677, %v2665
        %v4118 = vpack.c.b16 %v2678, %v2666
        %v4119 = vpack.c.b16 %v2679, %v2667
        %v4120 = vpack.c.b16 %v2680, %v2668
        %v4121 = vpack.c.b16 %v2681, %v2669
        %v4122 = vpack.c.b16 %v2682, %v2670
        %v4123 = vpack.c.b16 %v2695, %v2683
        %v4124 = vpack.c.b16 %v2696, %v2684
        %v4125 = vpack.c.b16 %v2697, %v2685
        %v4126 = vpack.c.b16 %v2698, %v2686
        %v4127 = vpack.c.b16 %v2699, %v2687
        %v4128 = vpack.c.b16 %v2700, %v2688
        %v4129 = vpack.c.b16 %v2701, %v2689
        %v4130 = vpack.c.b16 %v2702, %v2690
        %v4131 = vpack.c.b16 %v2703, %v2691
        %v4132 = vpack.c.b16 %v2704, %v2692
        %v4133 = vpack.c.b16 %v2705, %v2693
        %v4134 = vpack.c.b16 %v2706, %v2694
        %v4135 = vpack.c.b16 %v2719, %v2707
        %v4136 = vpack.c.b16 %v2720, %v2708
        %v4137 = vpack.c.b16 %v2721, %v2709
        %v4138 = vpack.c.b16 %v2722, %v2710
        %v4139 = vpack.c.b16 %v2723, %v2711
        %v4140 = vpack.c.b16 %v2724, %v2712
        %v4141 = vpack.c.b16 %v2725, %v2713
        %v4142 = vpack.c.b16 %v2726, %v2714
        %v4143 = vpack.c.b16 %v2727, %v2715
        %v4144 = vpack.c.b16 %v2728, %v2716
        %v4145 = vpack.c.b16 %v2729, %v2717
        %v4146 = vpack.c.b16 %v2730, %v2718
        %v4147 = vpack.c.b16 %v2743, %v2731
        %v4148 = vpack.c.b16 %v2744, %v2732
        %v4149 = vpack.c.b16 %v2745, %v2733
        %v4150 = vpack.c.b16 %v2746, %v2734
        %v4151 = vpack.c.b16 %v2747, %v2735
        %v4152 = vpack.c.b16 %v2748, %v2736
        %v4153 = vpack.c.b16 %v2749, %v2737
        %v4154 = vpack.c.b16 %v2750, %v2738
        %v4155 = vpack.c.b16 %v2751, %v2739
        %v4156 = vpack.c.b16 %v2752, %v2740
        %v4157 = vpack.c.b16 %v2753, %v2741
        %v4158 = vpack.c.b16 %v2754, %v2742
        %v4159 = vpack.c.b16 %v2767, %v2755
        %v4160 = vpack.c.b16 %v2768, %v2756
        %v4161 = vpack.c.b16 %v2769, %v2757
        %v4162 = vpack.c.b16 %v2770, %v2758
        %v4163 = vpack.c.b16 %v2771, %v2759
        %v4164 = vpack.c.b16 %v2772, %v2760
        %v4165 = vpack.c.b16 %v2773, %v2761
        %v4166 = vpack.c.b16 %v2774, %v2762
        %v4167 = vpack.c.b16 %v2775, %v2763
        %v4168 = vpack.c.b16 %v2776, %v2764
        %v4169 = vpack.c.b16 %v2777, %v2765
        %v4170 = vpack.c.b16 %v2778, %v2766
        %v4171 = vpack.c.b16 %v2791, %v2779
        %v4172 = vpack.c.b16 %v2792, %v2780
        %v4173 = vpack.c.b16 %v2793, %v2781
        %v4174 = vpack.c.b16 %v2794, %v2782
        %v4175 = vpack.c.b16 %v2795, %v2783
        %v4176 = vpack.c.b16 %v2796, %v2784
        %v4177 = vpack.c.b16 %v2797, %v2785
        %v4178 = vpack.c.b16 %v2798, %v2786
        %v4179 = vpack.c.b16 %v2799, %v2787
        %v4180 = vpack.c.b16 %v2800, %v2788
        %v4181 = vpack.c.b16 %v2801, %v2789
        %v4182 = vpack.c.b16 %v2802, %v2790
        %v4183 = vpack.c.b16 %v2815, %v2803
        %v4184 = vpack.c.b16 %v2816, %v2804
        %v4185 = vpack.c.b16 %v2817, %v2805
        %v4186 = vpack.c.b16 %v2818, %v2806
        %v4187 = vpack.c.b16 %v2819, %v2807
        %v4188 = vpack.c.b16 %v2820, %v2808
        %v4189 = vpack.c.b16 %v2821, %v2809
        %v4190 = vpack.c.b16 %v2822, %v2810
        %v4191 = vpack.c.b16 %v2823, %v2811
        %v4192 = vpack.c.b16 %v2824, %v2812
        %v4193 = vpack.c.b16 %v2825, %v2813
        %v4194 = vpack.c.b16 %v2826, %v2814
        %v4195 = vpack.c.b16 %v2839, %v2827
        %v4196 = vpack.c.b16 %v2840, %v2828
        %v4197 = vpack.c.b16 %v2841, %v2829
        %v4198 = vpack.c.b16 %v2842, %v2830
        %v4199 = vpack.c.b16 %v2843, %v2831
        %v4200 = vpack.c.b16 %v2844, %v2832
        %v4201 = vpack.c.b16 %v2845, %v2833
        %v4202 = vpack.c.b16 %v2846, %v2834
        %v4203 = vpack.c.b16 %v2847, %v2835
        %v4204 = vpack.c.b16 %v2848, %v2836
        %v4205 = vpack.c.b16 %v2849, %v2837
        %v4206 = vpack.c.b16 %v2850, %v2838
        %v4207 = vpack.c.b16 %v2863, %v2851
        %v4208 = vpack.c.b16 %v2864, %v2852
        %v4209 = vpack.c.b16 %v2865, %v2853
        %v4210 = vpack.c.b16 %v2866, %v2854
        %v4211 = vpack.c.b16 %v2867, %v2855
        %v4212 = vpack.c.b16 %v2868, %v2856
        %v4213 = vpack.c.b16 %v2869, %v2857
        %v4214 = vpack.c.b16 %v2870, %v2858
        %v4215 = vpack.c.b16 %v2871, %v2859
        %v4216 = vpack.c.b16 %v2872, %v2860
        %v4217 = vpack.c.b16 %v2873, %v2861
        %v4218 = vpack.c.b16 %v2874, %v2862
        %v4219 = vpack.c.b16 %v2887, %v2875
        %v4220 = vpack.c.b16 %v2888, %v2876
        %v4221 = vpack.c.b16 %v2889, %v2877
        %v4222 = vpack.c.b16 %v2890, %v2878
        %v4223 = vpack.c.b16 %v2891, %v2879
        %v4224 = vpack.c.b16 %v2892, %v2880
        %v4225 = vpack.c.b16 %v2893, %v2881
        %v4226 = vpack.c.b16 %v2894, %v2882
        %v4227 = vpack.c.b16 %v2895, %v2883
        %v4228 = vpack.c.b16 %v2896, %v2884
        %v4229 = vpack.c.b16 %v2897, %v2885
        %v4230 = vpack.c.b16 %v2898, %v2886
        %v4231 = vpack.c.b16 %v2911, %v2899
        %v4232 = vpack.c.b16 %v2912, %v2900
        %v4233 = vpack.c.b16 %v2913, %v2901
        %v4234 = vpack.c.b16 %v2914, %v2902
        %v4235 = vpack.c.b16 %v2915, %v2903
        %v4236 = vpack.c.b16 %v2916, %v2904
        %v4237 = vpack.c.b16 %v2917, %v2905
        %v4238 = vpack.c.b16 %v2918, %v2906
        %v4239 = vpack.c.b16 %v2919, %v2907
        %v4240 = vpack.c.b16 %v2920, %v2908
        %v4241 = vpack.c.b16 %v2921, %v2909
        %v4242 = vpack.c.b16 %v2922, %v2910
        %v4243 = vpack.c.b16 %v2935, %v2923
        %v4244 = vpack.c.b16 %v2936, %v2924
        %v4245 = vpack.c.b16 %v2937, %v2925
        %v4246 = vpack.c.b16 %v2938, %v2926
        %v4247 = vpack.c.b16 %v2939, %v2927
        %v4248 = vpack.c.b16 %v2940, %v2928
        %v4249 = vpack.c.b16 %v2941, %v2929
        %v4250 = vpack.c.b16 %v2942, %v2930
        %v4251 = vpack.c.b16 %v2943, %v2931
        %v4252 = vpack.c.b16 %v2944, %v2932
        %v4253 = vpack.c.b16 %v2945, %v2933
        %v4254 = vpack.c.b16 %v2946, %v2934
        %v4255 = vpack.c.b16 %v2959, %v2947
        %v4256 = vpack.c.b16 %v2960, %v2948
        %v4257 = vpack.c.b16 %v2961, %v2949
        %v4258 = vpack.c.b16 %v2962, %v2950
        %v4259 = vpack.c.b16 %v2963, %v2951
        %v4260 = vpack.c.b16 %v2964, %v2952
        %v4261 = vpack.c.b16 %v2965, %v2953
        %v4262 = vpack.c.b16 %v2966, %v2954
        %v4263 = vpack.c.b16 %v2967, %v2955
        %v4264 = vpack.c.b16 %v2968, %v2956
        %v4265 = vpack.c.b16 %v2969, %v2957
        %v4266 = vpack.c.b16 %v2970, %v2958
        %v4267 = vpack.c.b16 %v2983, %v2971
        %v4268 = vpack.c.b16 %v2984, %v2972
        %v4269 = vpack.c.b16 %v2985, %v2973
        %v4270 = vpack.c.b16 %v2986, %v2974
        %v4271 = vpack.c.b16 %v2987, %v2975
        %v4272 = vpack.c.b16 %v2988, %v2976
        %v4273 = vpack.c.b16 %v2989, %v2977
        %v4274 = vpack.c.b16 %v2990, %v2978
        %v4275 = vpack.c.b16 %v2991, %v2979
        %v4276 = vpack.c.b16 %v2992, %v2980
        %v4277 = vpack.c.b16 %v2993, %v2981
        %v4278 = vpack.c.b16 %v2994, %v2982
        %v4279 = vpack.c.b16 %v3007, %v2995
        %v4280 = vpack.c.b16 %v3008, %v2996
        %v4281 = vpack.c.b16 %v3009, %v2997
        %v4282 = vpack.c.b16 %v3010, %v2998
        %v4283 = vpack.c.b16 %v3011, %v2999
        %v4284 = vpack.c.b16 %v3012, %v3000
        %v4285 = vpack.c.b16 %v3013, %v3001
        %v4286 = vpack.c.b16 %v3014, %v3002
        %v4287 = vpack.c.b16 %v3015, %v3003
        %v4288 = vpack.c.b16 %v3016, %v3004
        %v4289 = vpack.c.b16 %v3017, %v3005
        %v4290 = vpack.c.b16 %v3018, %v3006
        %v4291 = vpack.c.b16 %v3031, %v3019
        %v4292 = vpack.c.b16 %v3032, %v3020
        %v4293 = vpack.c.b16 %v3033, %v3021
        %v4294 = vpack.c.b16 %v3034, %v3022
        %v4295 = vpack.c.b16 %v3035, %v3023
        %v4296 = vpack.c.b16 %v3036, %v3024
        %v4297 = vpack.c.b16 %v3037, %v3025
        %v4298 = vpack.c.b16 %v3038, %v3026
        %v4299 = vpack.c.b16 %v3039, %v3027
        %v4300 = vpack.c.b16 %v3040, %v3028
        %v4301 = vpack.c.b16 %v3041, %v3029
        %v4302 = vpack.c.b16 %v3042, %v3030
        %v4303 = vpack.c.b16 %v3055, %v3043
        %v4304 = vpack.c.b16 %v3056, %v3044
        %v4305 = vpack.c.b16 %v3057, %v3045
        %v4306 = vpack.c.b16 %v3058, %v3046
        %v4307 = vpack.c.b16 %v3059, %v3047
        %v4308 = vpack.c.b16 %v3060, %v3048
        %v4309 = vpack.c.b16 %v3061, %v3049
        %v4310 = vpack.c.b16 %v3062, %v3050
        %v4311 = vpack.c.b16 %v3063, %v3051
        %v4312 = vpack.c.b16 %v3064, %v3052
        %v4313 = vpack.c.b16 %v3065, %v3053
        %v4314 = vpack.c.b16 %v3066, %v3054
        %v4315 = vpack.c.b16 %v3079, %v3067
        %v4316 = vpack.c.b16 %v3080, %v3068
        %v4317 = vpack.c.b16 %v3081, %v3069
        %v4318 = vpack.c.b16 %v3082, %v3070
        %v4319 = vpack.c.b16 %v3083, %v3071
        %v4320 = vpack.c.b16 %v3084, %v3072
        %v4321 = vpack.c.b16 %v3085, %v3073
        %v4322 = vpack.c.b16 %v3086, %v3074
        %v4323 = vpack.c.b16 %v3087, %v3075
        %v4324 = vpack.c.b16 %v3088, %v3076
        %v4325 = vpack.c.b16 %v3089, %v3077
        %v4326 = vpack.c.b16 %v3090, %v3078
        %v4327 = vpack.c.b16 %v3103, %v3091
        %v4328 = vpack.c.b16 %v3104, %v3092
        %v4329 = vpack.c.b16 %v3105, %v3093
        %v4330 = vpack.c.b16 %v3106, %v3094
        %v4331 = vpack.c.b16 %v3107, %v3095
        %v4332 = vpack.c.b16 %v3108, %v3096
        %v4333 = vpack.c.b16 %v3109, %v3097
        %v4334 = vpack.c.b16 %v3110, %v3098
        %v4335 = vpack.c.b16 %v3111, %v3099
        %v4336 = vpack.c.b16 %v3112, %v3100
        %v4337 = vpack.c.b16 %v3113, %v3101
        %v4338 = vpack.c.b16 %v3114, %v3102
        %v4339 = vpack.c.b16 %v3127, %v3115
        %v4340 = vpack.c.b16 %v3128, %v3116
        %v4341 = vpack.c.b16 %v3129, %v3117
        %v4342 = vpack.c.b16 %v3130, %v3118
        %v4343 = vpack.c.b16 %v3131, %v3119
        %v4344 = vpack.c.b16 %v3132, %v3120
        %v4345 = vpack.c.b16 %v3133, %v3121
        %v4346 = vpack.c.b16 %v3134, %v3122
        %v4347 = vpack.c.b16 %v3135, %v3123
        %v4348 = vpack.c.b16 %v3136, %v3124
        %v4349 = vpack.c.b16 %v3137, %v3125
        %v4350 = vpack.c.b16 %v3138, %v3126
        %v4351 = vpack.c.b16 %v3151, %v3139
        %v4352 = vpack.c.b16 %v3152, %v3140
        %v4353 = vpack.c.b16 %v3153, %v3141
        %v4354 = vpack.c.b16 %v3154, %v3142
        %v4355 = vpack.c.b16 %v3155, %v3143
        %v4356 = vpack.c.b16 %v3156, %v3144
        %v4357 = vpack.c.b16 %v3157, %v3145
        %v4358 = vpack.c.b16 %v3158, %v3146
        %v4359 = vpack.c.b16 %v3159, %v3147
        %v4360 = vpack.c.b16 %v3160, %v3148
        %v4361 = vpack.c.b16 %v3161, %v3149
        %v4362 = vpack.c.b16 %v3162, %v3150
        %v4363 = vpack.c.b16 %v3175, %v3163
        %v4364 = vpack.c.b16 %v3176, %v3164
        %v4365 = vpack.c.b16 %v3177, %v3165
        %v4366 = vpack.c.b16 %v3178, %v3166
        %v4367 = vpack.c.b16 %v3179, %v3167
        %v4368 = vpack.c.b16 %v3180, %v3168
        %v4369 = vpack.c.b16 %v3181, %v3169
        %v4370 = vpack.c.b16 %v3182, %v3170
        %v4371 = vpack.c.b16 %v3183, %v3171
        %v4372 = vpack.c.b16 %v3184, %v3172
        %v4373 = vpack.c.b16 %v3185, %v3173
        %v4374 = vpack.c.b16 %v3186, %v3174
        %v4375 = vpack.c.b16 %v3199, %v3187
        %v4376 = vpack.c.b16 %v3200, %v3188
        %v4377 = vpack.c.b16 %v3201, %v3189
        %v4378 = vpack.c.b16 %v3202, %v3190
        %v4379 = vpack.c.b16 %v3203, %v3191
        %v4380 = vpack.c.b16 %v3204, %v3192
        %v4381 = vpack.c.b16 %v3205, %v3193
        %v4382 = vpack.c.b16 %v3206, %v3194
        %v4383 = vpack.c.b16 %v3207, %v3195
        %v4384 = vpack.c.b16 %v3208, %v3196
        %v4385 = vpack.c.b16 %v3209, %v3197
        %v4386 = vpack.c.b16 %v3210, %v3198
        %v4387 = vpack.c.b16 %v3223, %v3211
        %v4388 = vpack.c.b16 %v3224, %v3212
        %v4389 = vpack.c.b16 %v3225, %v3213
        %v4390 = vpack.c.b16 %v3226, %v3214
        %v4391 = vpack.c.b16 %v3227, %v3215
        %v4392 = vpack.c.b16 %v3228, %v3216
        %v4393 = vpack.c.b16 %v3229, %v3217
        %v4394 = vpack.c.b16 %v3230, %v3218
        %v4395 = vpack.c.b16 %v3231, %v3219
        %v4396 = vpack.c.b16 %v3232, %v3220
        %v4397 = vpack.c.b16 %v3233, %v3221
        %v4398 = vpack.c.b16 %v3234, %v3222
        %v4399 = vpack.c.b16 %v3247, %v3235
        %v4400 = vpack.c.b16 %v3248, %v3236
        %v4401 = vpack.c.b16 %v3249, %v3237
        %v4402 = vpack.c.b16 %v3250, %v3238
        %v4403 = vpack.c.b16 %v3251, %v3239
        %v4404 = vpack.c.b16 %v3252, %v3240
        %v4405 = vpack.c.b16 %v3253, %v3241
        %v4406 = vpack.c.b16 %v3254, %v3242
        %v4407 = vpack.c.b16 %v3255, %v3243
        %v4408 = vpack.c.b16 %v3256, %v3244
        %v4409 = vpack.c.b16 %v3257, %v3245
        %v4410 = vpack.c.b16 %v3258, %v3246
        %v4411 = vpack.c.b16 %v3271, %v3259
        %v4412 = vpack.c.b16 %v3272, %v3260
        %v4413 = vpack.c.b16 %v3273, %v3261
        %v4414 = vpack.c.b16 %v3274, %v3262
        %v4415 = vpack.c.b16 %v3275, %v3263
        %v4416 = vpack.c.b16 %v3276, %v3264
        %v4417 = vpack.c.b16 %v3277, %v3265
        %v4418 = vpack.c.b16 %v3278, %v3266
        %v4419 = vpack.c.b16 %v3279, %v3267
        %v4420 = vpack.c.b16 %v3280, %v3268
        %v4421 = vpack.c.b16 %v3281, %v3269
        %v4422 = vpack.c.b16 %v3282, %v3270
        %v4423 = vpack.c.b16 %v3295, %v3283
        %v4424 = vpack.c.b16 %v3296, %v3284
        %v4425 = vpack.c.b16 %v3297, %v3285
        %v4426 = vpack.c.b16 %v3298, %v3286
        %v4427 = vpack.c.b16 %v3299, %v3287
        %v4428 = vpack.c.b16 %v3300, %v3288
        %v4429 = vpack.c.b16 %v3301, %v3289
        %v4430 = vpack.c.b16 %v3302, %v3290
        %v4431 = vpack.c.b16 %v3303, %v3291
        %v4432 = vpack.c.b16 %v3304, %v3292
        %v4433 = vpack.c.b16 %v3305, %v3293
        %v4434 = vpack.c.b16 %v3306, %v3294
        %v4435 = vpack.c.b16 %v3319, %v3307
        %v4436 = vpack.c.b16 %v3320, %v3308
        %v4437 = vpack.c.b16 %v3321, %v3309
        %v4438 = vpack.c.b16 %v3322, %v3310
        %v4439 = vpack.c.b16 %v3323, %v3311
        %v4440 = vpack.c.b16 %v3324, %v3312
        %v4441 = vpack.c.b16 %v3325, %v3313
        %v4442 = vpack.c.b16 %v3326, %v3314
        %v4443 = vpack.c.b16 %v3327, %v3315
        %v4444 = vpack.c.b16 %v3328, %v3316
        %v4445 = vpack.c.b16 %v3329, %v3317
        %v4446 = vpack.c.b16 %v3330, %v3318
        %v4447 = vpack.c.b16 %v3343, %v3331
        %v4448 = vpack.c.b16 %v3344, %v3332
        %v4449 = vpack.c.b16 %v3345, %v3333
        %v4450 = vpack.c.b16 %v3346, %v3334
        %v4451 = vpack.c.b16 %v3347, %v3335
        %v4452 = vpack.c.b16 %v3348, %v3336
        %v4453 = vpack.c.b16 %v3349, %v3337
        %v4454 = vpack.c.b16 %v3350, %v3338
        %v4455 = vpack.c.b16 %v3351, %v3339
        %v4456 = vpack.c.b16 %v3352, %v3340
        %v4457 = vpack.c.b16 %v3353, %v3341
        %v4458 = vpack.c.b16 %v3354, %v3342
        %v4459 = vpack.c.b16 %v3367, %v3355
        %v4460 = vpack.c.b16 %v3368, %v3356
        %v4461 = vpack.c.b16 %v3369, %v3357
        %v4462 = vpack.c.b16 %v3370, %v3358
        %v4463 = vpack.c.b16 %v3371, %v3359
        %v4464 = vpack.c.b16 %v3372, %v3360
        %v4465 = vpack.c.b16 %v3373, %v3361
        %v4466 = vpack.c.b16 %v3374, %v3362
        %v4467 = vpack.c.b16 %v3375, %v3363
        %v4468 = vpack.c.b16 %v3376, %v3364
        %v4469 = vpack.c.b16 %v3377, %v3365
        %v4470 = vpack.c.b16 %v3378, %v3366
        %v4471 = vpack.c.b16 %v3391, %v3379
        %v4472 = vpack.c.b16 %v3392, %v3380
        %v4473 = vpack.c.b16 %v3393, %v3381
        %v4474 = vpack.c.b16 %v3394, %v3382
        %v4475 = vpack.c.b16 %v3395, %v3383
        %v4476 = vpack.c.b16 %v3396, %v3384
        %v4477 = vpack.c.b16 %v3397, %v3385
        %v4478 = vpack.c.b16 %v3398, %v3386
        %v4479 = vpack.c.b16 %v3399, %v3387
        %v4480 = vpack.c.b16 %v3400, %v3388
        %v4481 = vpack.c.b16 %v3401, %v3389
        %v4482 = vpack.c.b16 %v3402, %v3390
        %v4483 = vpack.c.b16 %v3415, %v3403
        %v4484 = vpack.c.b16 %v3416, %v3404
        %v4485 = vpack.c.b16 %v3417, %v3405
        %v4486 = vpack.c.b16 %v3418, %v3406
        %v4487 = vpack.c.b16 %v3419, %v3407
        %v4488 = vpack.c.b16 %v3420, %v3408
        %v4489 = vpack.c.b16 %v3421, %v3409
        %v4490 = vpack.c.b16 %v3422, %v3410
        %v4491 = vpack.c.b16 %v3423, %v3411
        %v4492 = vpack.c.b16 %v3424, %v3412
        %v4493 = vpack.c.b16 %v3425, %v3413
        %v4494 = vpack.c.b16 %v3426, %v3414
        %v4495 = vpack.c.b16 %v3439, %v3427
        %v4496 = vpack.c.b16 %v3440, %v3428
        %v4497 = vpack.c.b16 %v3441, %v3429
        %v4498 = vpack.c.b16 %v3442, %v3430
        %v4499 = vpack.c.b16 %v3443, %v3431
        %v4500 = vpack.c.b16 %v3444, %v3432
        %v4501 = vpack.c.b16 %v3445, %v3433
        %v4502 = vpack.c.b16 %v3446, %v3434
        %v4503 = vpack.c.b16 %v3447, %v3435
        %v4504 = vpack.c.b16 %v3448, %v3436
        %v4505 = vpack.c.b16 %v3449, %v3437
        %v4506 = vpack.c.b16 %v3450, %v3438
        %v4507 = vpack.c.b16 %v3463, %v3451
        %v4508 = vpack.c.b16 %v3464, %v3452
        %v4509 = vpack.c.b16 %v3465, %v3453
        %v4510 = vpack.c.b16 %v3466, %v3454
        %v4511 = vpack.c.b16 %v3467, %v3455
        %v4512 = vpack.c.b16 %v3468, %v3456
        %v4513 = vpack.c.b16 %v3469, %v3457
        %v4514 = vpack.c.b16 %v3470, %v3458
        %v4515 = vpack.c.b16 %v3471, %v3459
        %v4516 = vpack.c.b16 %v3472, %v3460
        %v4517 = vpack.c.b16 %v3473, %v3461
        %v4518 = vpack.c.b16 %v3474, %v3462
        %v4519 = vpack.c.b16 %v3487, %v3475
        %v4520 = vpack.c.b16 %v3488, %v3476
        %v4521 = vpack.c.b16 %v3489, %v3477
        %v4522 = vpack.c.b16 %v3490, %v3478
        %v4523 = vpack.c.b16 %v3491, %v3479
        %v4524 = vpack.c.b16 %v3492, %v3480
        %v4525 = vpack.c.b16 %v3493, %v3481
        %v4526 = vpack.c.b16 %v3494, %v3482
        %v4527 = vpack.c.b16 %v3495, %v3483
        %v4528 = vpack.c.b16 %v3496, %v3484
        %v4529 = vpack.c.b16 %v3497, %v3485
        %v4530 = vpack.c.b16 %v3498, %v3486
        %v4531 = vpack.c.b16 %v3511, %v3499
        %v4532 = vpack.c.b16 %v3512, %v3500
        %v4533 = vpack.c.b16 %v3513, %v3501
        %v4534 = vpack.c.b16 %v3514, %v3502
        %v4535 = vpack.c.b16 %v3515, %v3503
        %v4536 = vpack.c.b16 %v3516, %v3504
        %v4537 = vpack.c.b16 %v3517, %v3505
        %v4538 = vpack.c.b16 %v3518, %v3506
        %v4539 = vpack.c.b16 %v3519, %v3507
        %v4540 = vpack.c.b16 %v3520, %v3508
        %v4541 = vpack.c.b16 %v3521, %v3509
        %v4542 = vpack.c.b16 %v3522, %v3510
        %v4543 = vpack.c.b16 %v3535, %v3523
        %v4544 = vpack.c.b16 %v3536, %v3524
        %v4545 = vpack.c.b16 %v3537, %v3525
        %v4546 = vpack.c.b16 %v3538, %v3526
        %v4547 = vpack.c.b16 %v3539, %v3527
        %v4548 = vpack.c.b16 %v3540, %v3528
        %v4549 = vpack.c.b16 %v3541, %v3529
        %v4550 = vpack.c.b16 %v3542, %v3530
        %v4551 = vpack.c.b16 %v3543, %v3531
        %v4552 = vpack.c.b16 %v3544, %v3532
        %v4553 = vpack.c.b16 %v3545, %v3533
        %v4554 = vpack.c.b16 %v3546, %v3534
        %v4555 = vpack.c.b16 %v3559, %v3547
        %v4556 = vpack.c.b16 %v3560, %v3548
        %v4557 = vpack.c.b16 %v3561, %v3549
        %v4558 = vpack.c.b16 %v3562, %v3550
        %v4559 = vpack.c.b16 %v3563, %v3551
        %v4560 = vpack.c.b16 %v3564, %v3552
        %v4561 = vpack.c.b16 %v3565, %v3553
        %v4562 = vpack.c.b16 %v3566, %v3554
        %v4563 = vpack.c.b16 %v3567, %v3555
        %v4564 = vpack.c.b16 %v3568, %v3556
        %v4565 = vpack.c.b16 %v3569, %v3557
        %v4566 = vpack.c.b16 %v3570, %v3558
        %v4567 = vpack.c.b16 %v3583, %v3571
        %v4568 = vpack.c.b16 %v3584, %v3572
        %v4569 = vpack.c.b16 %v3585, %v3573
        %v4570 = vpack.c.b16 %v3586, %v3574
        %v4571 = vpack.c.b16 %v3587, %v3575
        %v4572 = vpack.c.b16 %v3588, %v3576
        %v4573 = vpack.c.b16 %v3589, %v3577
        %v4574 = vpack.c.b16 %v3590, %v3578
        %v4575 = vpack.c.b16 %v3591, %v3579
        %v4576 = vpack.c.b16 %v3592, %v3580
        %v4577 = vpack.c.b16 %v3593, %v3581
        %v4578 = vpack.c.b16 %v3594, %v3582
        %v4579 = vpack.c.b16 %v3607, %v3595
        %v4580 = vpack.c.b16 %v3608, %v3596
        %v4581 = vpack.c.b16 %v3609, %v3597
        %v4582 = vpack.c.b16 %v3610, %v3598
        %v4583 = vpack.c.b16 %v3611, %v3599
        %v4584 = vpack.c.b16 %v3612, %v3600
        %v4585 = vpack.c.b16 %v3613, %v3601
        %v4586 = vpack.c.b16 %v3614, %v3602
        %v4587 = vpack.c.b16 %v3615, %v3603
        %v4588 = vpack.c.b16 %v3616, %v3604
        %v4589 = vpack.c.b16 %v3617, %v3605
        %v4590 = vpack.c.b16 %v3618, %v3606
        %v4591 = vpack.c.b16 %v3631, %v3619
        %v4592 = vpack.c.b16 %v3632, %v3620
        %v4593 = vpack.c.b16 %v3633, %v3621
        %v4594 = vpack.c.b16 %v3634, %v3622
        %v4595 = vpack.c.b16 %v3635, %v3623
        %v4596 = vpack.c.b16 %v3636, %v3624
        %v4597 = vpack.c.b16 %v3637, %v3625
        %v4598 = vpack.c.b16 %v3638, %v3626
        %v4599 = vpack.c.b16 %v3639, %v3627
        %v4600 = vpack.c.b16 %v3640, %v3628
        %v4601 = vpack.c.b16 %v3641, %v3629
        %v4602 = vpack.c.b16 %v3642, %v3630
        %v4603 = vpack.c.b16 %v3655, %v3643
        %v4604 = vpack.c.b16 %v3656, %v3644
        %v4605 = vpack.c.b16 %v3657, %v3645
        %v4606 = vpack.c.b16 %v3658, %v3646
        %v4607 = vpack.c.b16 %v3659, %v3647
        %v4608 = vpack.c.b16 %v3660, %v3648
        %v4609 = vpack.c.b16 %v3661, %v3649
        %v4610 = vpack.c.b16 %v3662, %v3650
        %v4611 = vpack.c.b16 %v3663, %v3651
        %v4612 = vpack.c.b16 %v3664, %v3652
        %v4613 = vpack.c.b16 %v3665, %v3653
        %v4614 = vpack.c.b16 %v3666, %v3654
        %v4615 = vpack.c.b16 %v3679, %v3667
        %v4616 = vpack.c.b16 %v3680, %v3668
        %v4617 = vpack.c.b16 %v3681, %v3669
        %v4618 = vpack.c.b16 %v3682, %v3670
        %v4619 = vpack.c.b16 %v3683, %v3671
        %v4620 = vpack.c.b16 %v3684, %v3672
        %v4621 = vpack.c.b16 %v3685, %v3673
        %v4622 = vpack.c.b16 %v3686, %v3674
        %v4623 = vpack.c.b16 %v3687, %v3675
        %v4624 = vpack.c.b16 %v3688, %v3676
        %v4625 = vpack.c.b16 %v3689, %v3677
        %v4626 = vpack.c.b16 %v3690, %v3678
        %v4627 = vpack.c.b16 %v3703, %v3691
        %v4628 = vpack.c.b16 %v3704, %v3692
        %v4629 = vpack.c.b16 %v3705, %v3693
        %v4630 = vpack.c.b16 %v3706, %v3694
        %v4631 = vpack.c.b16 %v3707, %v3695
        %v4632 = vpack.c.b16 %v3708, %v3696
        %v4633 = vpack.c.b16 %v3709, %v3697
        %v4634 = vpack.c.b16 %v3710, %v3698
        %v4635 = vpack.c.b16 %v3711, %v3699
        %v4636 = vpack.c.b16 %v3712, %v3700
        %v4637 = vpack.c.b16 %v3713, %v3701
        %v4638 = vpack.c.b16 %v3714, %v3702
        %v4639 = vpack.c.b16 %v3727, %v3715
        %v4640 = vpack.c.b16 %v3728, %v3716
        %v4641 = vpack.c.b16 %v3729, %v3717
        %v4642 = vpack.c.b16 %v3730, %v3718
        %v4643 = vpack.c.b16 %v3731, %v3719
        %v4644 = vpack.c.b16 %v3732, %v3720
        %v4645 = vpack.c.b16 %v3733, %v3721
        %v4646 = vpack.c.b16 %v3734, %v3722
        %v4647 = vpack.c.b16 %v3735, %v3723
        %v4648 = vpack.c.b16 %v3736, %v3724
        %v4649 = vpack.c.b16 %v3737, %v3725
        %v4650 = vpack.c.b16 %v3738, %v3726
        %v4651 = vpack.c.b16 %v3751, %v3739
        %v4652 = vpack.c.b16 %v3752, %v3740
        %v4653 = vpack.c.b16 %v3753, %v3741
        %v4654 = vpack.c.b16 %v3754, %v3742
        %v4655 = vpack.c.b16 %v3755, %v3743
        %v4656 = vpack.c.b16 %v3756, %v3744
        %v4657 = vpack.c.b16 %v3757, %v3745
        %v4658 = vpack.c.b16 %v3758, %v3746
        %v4659 = vpack.c.b16 %v3759, %v3747
        %v4660 = vpack.c.b16 %v3760, %v3748
        %v4661 = vpack.c.b16 %v3761, %v3749
        %v4662 = vpack.c.b16 %v3762, %v3750
        %v4663 = vpack.c.b16 %v3775, %v3763
        %v4664 = vpack.c.b16 %v3776, %v3764
        %v4665 = vpack.c.b16 %v3777, %v3765
        %v4666 = vpack.c.b16 %v3778, %v3766
        %v4667 = vpack.c.b16 %v3779, %v3767
        %v4668 = vpack.c.b16 %v3780, %v3768
        %v4669 = vpack.c.b16 %v3781, %v3769
        %v4670 = vpack.c.b16 %v3782, %v3770
        %v4671 = vpack.c.b16 %v3783, %v3771
        %v4672 = vpack.c.b16 %v3784, %v3772
        %v4673 = vpack.c.b16 %v3785, %v3773
        %v4674 = vpack.c.b16 %v3786, %v3774
        %v4675 = vpack.c.b16 %v3799, %v3787
        %v4676 = vpack.c.b16 %v3800, %v3788
        %v4677 = vpack.c.b16 %v3801, %v3789
        %v4678 = vpack.c.b16 %v3802, %v3790
        %v4679 = vpack.c.b16 %v3803, %v3791
        %v4680 = vpack.c.b16 %v3804, %v3792
        %v4681 = vpack.c.b16 %v3805, %v3793
        %v4682 = vpack.c.b16 %v3806, %v3794
        %v4683 = vpack.c.b16 %v3807, %v3795
        %v4684 = vpack.c.b16 %v3808, %v3796
        %v4685 = vpack.c.b16 %v3809, %v3797
        %v4686 = vpack.c.b16 %v3810, %v3798
        %v4687 = vpack.c.b16 %v3823, %v3811
        %v4688 = vpack.c.b16 %v3824, %v3812
        %v4689 = vpack.c.b16 %v3825, %v3813
        %v4690 = vpack.c.b16 %v3826, %v3814
        %v4691 = vpack.c.b16 %v3827, %v3815
        %v4692 = vpack.c.b16 %v3828, %v3816
        %v4693 = vpack.c.b16 %v3829, %v3817
        %v4694 = vpack.c.b16 %v3830, %v3818
        %v4695 = vpack.c.b16 %v3831, %v3819
        %v4696 = vpack.c.b16 %v3832, %v3820
        %v4697 = vpack.c.b16 %v3833, %v3821
        %v4698 = vpack.c.b16 %v3834, %v3822
        %v4699 = vpack.c.b16 %v3847, %v3835
        %v4700 = vpack.c.b16 %v3848, %v3836
        %v4701 = vpack.c.b16 %v3849, %v3837
        %v4702 = vpack.c.b16 %v3850, %v3838
        %v4703 = vpack.c.b16 %v3851, %v3839
        %v4704 = vpack.c.b16 %v3852, %v3840
        %v4705 = vpack.c.b16 %v3853, %v3841
        %v4706 = vpack.c.b16 %v3854, %v3842
        %v4707 = vpack.c.b16 %v3855, %v3843
        %v4708 = vpack.c.b16 %v3856, %v3844
        %v4709 = vpack.c.b16 %v3857, %v3845
        %v4710 = vpack.c.b16 %v3858, %v3846
        %v4711 = vpack.c.b16 %v3871, %v3859
        %v4712 = vpack.c.b16 %v3872, %v3860
        %v4713 = vpack.c.b16 %v3873, %v3861
        %v4714 = vpack.c.b16 %v3874, %v3862
        %v4715 = vpack.c.b16 %v3875, %v3863
        %v4716 = vpack.c.b16 %v3876, %v3864
        %v4717 = vpack.c.b16 %v3877, %v3865
        %v4718 = vpack.c.b16 %v3878, %v3866
        %v4719 = vpack.c.b16 %v3879, %v3867
        %v4720 = vpack.c.b16 %v3880, %v3868
        %v4721 = vpack.c.b16 %v3881, %v3869
        %v4722 = vpack.c.b16 %v3882, %v3870
        %v4723 = vpack.c.b16 %v3895, %v3883
        %v4724 = vpack.c.b16 %v3896, %v3884
        %v4725 = vpack.c.b16 %v3897, %v3885
        %v4726 = vpack.c.b16 %v3898, %v3886
        %v4727 = vpack.c.b16 %v3899, %v3887
        %v4728 = vpack.c.b16 %v3900, %v3888
        %v4729 = vpack.c.b16 %v3901, %v3889
        %v4730 = vpack.c.b16 %v3902, %v3890
        %v4731 = vpack.c.b16 %v3903, %v3891
        %v4732 = vpack.c.b16 %v3904, %v3892
        %v4733 = vpack.c.b16 %v3905, %v3893
        %v4734 = vpack.c.b16 %v3906, %v3894
        %v4735 = vpack.c.b16 %v3919, %v3907
        %v4736 = vpack.c.b16 %v3920, %v3908
        %v4737 = vpack.c.b16 %v3921, %v3909
        %v4738 = vpack.c.b16 %v3922, %v3910
        %v4739 = vpack.c.b16 %v3923, %v3911
        %v4740 = vpack.c.b16 %v3924, %v3912
        %v4741 = vpack.c.b16 %v3925, %v3913
        %v4742 = vpack.c.b16 %v3926, %v3914
        %v4743 = vpack.c.b16 %v3927, %v3915
        %v4744 = vpack.c.b16 %v3928, %v3916
        %v4745 = vpack.c.b16 %v3929, %v3917
        %v4746 = vpack.c.b16 %v3930, %v3918
        %v4747 = vpack.c.b16 %v3943, %v3931
        %v4748 = vpack.c.b16 %v3944, %v3932
        %v4749 = vpack.c.b16 %v3945, %v3933
        %v4750 = vpack.c.b16 %v3946, %v3934
        %v4751 = vpack.c.b16 %v3947, %v3935
        %v4752 = vpack.c.b16 %v3948, %v3936
        %v4753 = vpack.c.b16 %v3949, %v3937
        %v4754 = vpack.c.b16 %v3950, %v3938
        %v4755 = vpack.c.b16 %v3951, %v3939
        %v4756 = vpack.c.b16 %v3952, %v3940
        %v4757 = vpack.c.b16 %v3953, %v3941
        %v4758 = vpack.c.b16 %v3954, %v3942
        %v4759 = vpack.c.b16 %v3967, %v3955
        %v4760 = vpack.c.b16 %v3968, %v3956
        %v4761 = vpack.c.b16 %v3969, %v3957
        %v4762 = vpack.c.b16 %v3970, %v3958
        %v4763 = vpack.c.b16 %v3971, %v3959
        %v4764 = vpack.c.b16 %v3972, %v3960
        %v4765 = vpack.c.b16 %v3973, %v3961
        %v4766 = vpack.c.b16 %v3974, %v3962
        %v4767 = vpack.c.b16 %v3975, %v3963
        %v4768 = vpack.c.b16 %v3976, %v3964
        %v4769 = vpack.c.b16 %v3977, %v3965
        %v4770 = vpack.c.b16 %v3978, %v3966
        %v4771 = vpack.c.b16 %v3991, %v3979
        %v4772 = vpack.c.b16 %v3992, %v3980
        %v4773 = vpack.c.b16 %v3993, %v3981
        %v4774 = vpack.c.b16 %v3994, %v3982
        %v4775 = vpack.c.b16 %v3995, %v3983
        %v4776 = vpack.c.b16 %v3996, %v3984
        %v4777 = vpack.c.b16 %v3997, %v3985
        %v4778 = vpack.c.b16 %v3998, %v3986
        %v4779 = vpack.c.b16 %v3999, %v3987
        %v4780 = vpack.c.b16 %v4000, %v3988
        %v4781 = vpack.c.b16 %v4001, %v3989
        %v4782 = vpack.c.b16 %v4002, %v3990
        %v4783 = vpack.c.b16 %v4015, %v4003
        %v4784 = vpack.c.b16 %v4016, %v4004
        %v4785 = vpack.c.b16 %v4017, %v4005
        %v4786 = vpack.c.b16 %v4018, %v4006
        %v4787 = vpack.c.b16 %v4019, %v4007
        %v4788 = vpack.c.b16 %v4020, %v4008
        %v4789 = vpack.c.b16 %v4021, %v4009
        %v4790 = vpack.c.b16 %v4022, %v4010
        %v4791 = vpack.c.b16 %v4023, %v4011
        %v4792 = vpack.c.b16 %v4024, %v4012
        %v4793 = vpack.c.b16 %v4025, %v4013
        %v4794 = vpack.c.b16 %v4026, %v4014
        %v5565 = vlaneseq
        %v5566 = vshrl.u32 %v5565, 7
        %v5567 = vsub.s32 0, %v5566
        %v5568 = vrot.slane %v1663, %v5567
        %v5569 = vlaneseq
        %v5570 = vshrl.u32 %v5569, 7
        %v5571 = vsub.s32 1, %v5570
        %v5572 = vrot.slane %v1663, %v5571
        %v5573 = vlaneseq
        %v5574 = vshrl.u32 %v5573, 7
        %v5575 = vsub.s32 2, %v5574
        %v5576 = vrot.slane %v1663, %v5575
        %v5577 = vlaneseq
        %v5578 = vshrl.u32 %v5577, 7
        %v5579 = vsub.s32 3, %v5578
        %v5580 = vrot.slane %v1663, %v5579
        %v5581 = vlaneseq
        %v5582 = vshrl.u32 %v5581, 7
        %v5583 = vsub.s32 4, %v5582
        %v5584 = vrot.slane %v1663, %v5583
        %v5585 = vlaneseq
        %v5586 = vshrl.u32 %v5585, 7
        %v5587 = vsub.s32 5, %v5586
        %v5588 = vrot.slane %v1663, %v5587
        %v5589 = vlaneseq
        %v5590 = vshrl.u32 %v5589, 7
        %v5591 = vsub.s32 6, %v5590
        %v5592 = vrot.slane %v1663, %v5591
        %v5593 = vlaneseq
        %v5594 = vshrl.u32 %v5593, 7
        %v5595 = vsub.s32 7, %v5594
        %v5596 = vrot.slane %v1663, %v5595
        %v5597 = vlaneseq
        %v5598 = vshrl.u32 %v5597, 7
        %v5599 = vsub.s32 0, %v5598
        %v5600 = vrot.slane %v1664, %v5599
        %v5601 = vlaneseq
        %v5602 = vshrl.u32 %v5601, 7
        %v5603 = vsub.s32 1, %v5602
        %v5604 = vrot.slane %v1664, %v5603
        %v5605 = vlaneseq
        %v5606 = vshrl.u32 %v5605, 7
        %v5607 = vsub.s32 2, %v5606
        %v5608 = vrot.slane %v1664, %v5607
        %v5609 = vlaneseq
        %v5610 = vshrl.u32 %v5609, 7
        %v5611 = vsub.s32 3, %v5610
        %v5612 = vrot.slane %v1664, %v5611
        %5625 = vmatprep.subr.bf16.mxu0 %v4112
        %5626 = vmatpush1.bf16.msra.mxu0 %v4111
        %5627 = vmatprep.subr.bf16.mxu0 %v4100
        %5628 = vmatpush1.bf16.msra.mxu0 %v4099
        %5629 = vmatprep.subr.bf16.mxu0 %v4088
        %5630 = vmatpush1.bf16.msra.mxu0 %v4087
        %5631 = vmatprep.subr.bf16.mxu0 %v4076
        %5632 = vmatpush1.bf16.msra.mxu0 %v4075
        %5633 = vmatprep.subr.bf16.mxu0 %v4064
        %5634 = vmatpush1.bf16.msra.mxu0 %v4063
        %5635 = vmatprep.subr.bf16.mxu0 %v4052
        %5636 = vmatpush1.bf16.msra.mxu0 %v4051
        %5637 = vmatprep.subr.bf16.mxu0 %v4040
        %5638 = vmatpush1.bf16.msra.mxu0 %v4039
        %5639 = vmatprep.subr.bf16.mxu0 %v4028
        %5640 = vmatpush1.bf16.msra.mxu0 %v4027
        %5641 = vmatprep.subr.bf16.mxu0 %v4208
        %5642 = vmatpush2.bf16.msra.mxu0 %v4207
        %5643 = vmatprep.subr.bf16.mxu0 %v4196
        %5644 = vmatpush2.bf16.msra.mxu0 %v4195
        %5645 = vmatprep.subr.bf16.mxu0 %v4184
        %5646 = vmatpush2.bf16.msra.mxu0 %v4183
        %5647 = vmatprep.subr.bf16.mxu0 %v4172
        %5648 = vmatpush2.bf16.msra.mxu0 %v4171
        %5649 = vmatprep.subr.bf16.mxu0 %v4160
        %5650 = vmatpush2.bf16.msra.mxu0 %v4159
        %5651 = vmatprep.subr.bf16.mxu0 %v4148
        %5652 = vmatpush2.bf16.msra.mxu0 %v4147
        %5653 = vmatprep.subr.bf16.mxu0 %v4136
        %5654 = vmatpush2.bf16.msra.mxu0 %v4135
        %5655 = vmatprep.subr.bf16.mxu0 %v4124
        %5656 = vmatpush2.bf16.msra.mxu0 %v4123
        %5657 = vmatprep.mubr.bf16.mxu0 %v1703
        %5658 = vmatmul.mubr.bf16.gmra.mxu0 %v1689
        %v5659 = vpop.f32.mrf.mxu0
        %v5660 = vadd.f32 %v5568, %v5659
        %v5661 = vpop.f32.mrf.mxu0
        %v5662 = vadd.f32 %v5572, %v5661
        %v5663 = vpop.f32.mrf.mxu0
        %v5664 = vpop.f32.mrf.mxu0
        %5665 = vdwg.mxu0
        %5666 = vmatprep.subr.bf16.mxu0 %v4304
        %5667 = vmatpush1.bf16.msra.mxu0 %v4303
        %5668 = vmatprep.subr.bf16.mxu0 %v4292
        %5669 = vmatpush1.bf16.msra.mxu0 %v4291
        %5670 = vmatprep.subr.bf16.mxu0 %v4280
        %5671 = vmatpush1.bf16.msra.mxu0 %v4279
        %5672 = vmatprep.subr.bf16.mxu0 %v4268
        %5673 = vmatpush1.bf16.msra.mxu0 %v4267
        %5674 = vmatprep.subr.bf16.mxu0 %v4256
        %5675 = vmatpush1.bf16.msra.mxu0 %v4255
        %5676 = vmatprep.subr.bf16.mxu0 %v4244
        %5677 = vmatpush1.bf16.msra.mxu0 %v4243
        %5678 = vmatprep.subr.bf16.mxu0 %v4232
        %5679 = vmatpush1.bf16.msra.mxu0 %v4231
        %5680 = vmatprep.subr.bf16.mxu0 %v4220
        %5681 = vmatpush1.bf16.msra.mxu0 %v4219
        %5682 = vmatprep.subr.bf16.mxu0 %v4400
        %5683 = vmatpush2.bf16.msra.mxu0 %v4399
        %5684 = vmatprep.subr.bf16.mxu0 %v4388
        %5685 = vmatpush2.bf16.msra.mxu0 %v4387
        %5686 = vmatprep.subr.bf16.mxu0 %v4376
        %5687 = vmatpush2.bf16.msra.mxu0 %v4375
        %5688 = vmatprep.subr.bf16.mxu0 %v4364
        %5689 = vmatpush2.bf16.msra.mxu0 %v4363
        %5690 = vmatprep.subr.bf16.mxu0 %v4352
        %5691 = vmatpush2.bf16.msra.mxu0 %v4351
        %5692 = vmatprep.subr.bf16.mxu0 %v4340
        %5693 = vmatpush2.bf16.msra.mxu0 %v4339
        %5694 = vmatprep.subr.bf16.mxu0 %v4328
        %5695 = vmatpush2.bf16.msra.mxu0 %v4327
        %5696 = vmatprep.subr.bf16.mxu0 %v4316
        %5697 = vmatpush2.bf16.msra.mxu0 %v4315
        %5698 = vmatprep.mubr.bf16.mxu0 %v1713
        %5699 = vmatmul.mubr.bf16.gmra.mxu0 %v1711
        %v5700 = vpop.f32.mrf.mxu0
        %v5701 = vadd.f32 %v5660, %v5700
        %v5702 = vpop.f32.mrf.mxu0
        %v5703 = vadd.f32 %v5662, %v5702
        %v5704 = vpop.f32.mrf.mxu0
        %v5705 = vpop.f32.mrf.mxu0
        %5706 = vdwg.mxu0
        %5707 = vmatprep.subr.bf16.mxu0 %v4496
        %5708 = vmatpush1.bf16.msra.mxu0 %v4495
        %5709 = vmatprep.subr.bf16.mxu0 %v4484
        %5710 = vmatpush1.bf16.msra.mxu0 %v4483
        %5711 = vmatprep.subr.bf16.mxu0 %v4472
        %5712 = vmatpush1.bf16.msra.mxu0 %v4471
        %5713 = vmatprep.subr.bf16.mxu0 %v4460
        %5714 = vmatpush1.bf16.msra.mxu0 %v4459
        %5715 = vmatprep.subr.bf16.mxu0 %v4448
        %5716 = vmatpush1.bf16.msra.mxu0 %v4447
        %5717 = vmatprep.subr.bf16.mxu0 %v4436
        %5718 = vmatpush1.bf16.msra.mxu0 %v4435
        %5719 = vmatprep.subr.bf16.mxu0 %v4424
        %5720 = vmatpush1.bf16.msra.mxu0 %v4423
        %5721 = vmatprep.subr.bf16.mxu0 %v4412
        %5722 = vmatpush1.bf16.msra.mxu0 %v4411
        %5723 = vmatprep.subr.bf16.mxu0 %v4592
        %5724 = vmatpush2.bf16.msra.mxu0 %v4591
        %5725 = vmatprep.subr.bf16.mxu0 %v4580
        %5726 = vmatpush2.bf16.msra.mxu0 %v4579
        %5727 = vmatprep.subr.bf16.mxu0 %v4568
        %5728 = vmatpush2.bf16.msra.mxu0 %v4567
        %5729 = vmatprep.subr.bf16.mxu0 %v4556
        %5730 = vmatpush2.bf16.msra.mxu0 %v4555
        %5731 = vmatprep.subr.bf16.mxu0 %v4544
        %5732 = vmatpush2.bf16.msra.mxu0 %v4543
        %5733 = vmatprep.subr.bf16.mxu0 %v4532
        %5734 = vmatpush2.bf16.msra.mxu0 %v4531
        %5735 = vmatprep.subr.bf16.mxu0 %v4520
        %5736 = vmatpush2.bf16.msra.mxu0 %v4519
        %5737 = vmatprep.subr.bf16.mxu0 %v4508
        %5738 = vmatpush2.bf16.msra.mxu0 %v4507
        %5739 = vmatprep.mubr.bf16.mxu0 %v1710
        %5740 = vmatmul.mubr.bf16.gmra.mxu0 %v1696
        %v5741 = vpop.f32.mrf.mxu0
        %v5742 = vadd.f32 %v5701, %v5741
        %v5743 = vpop.f32.mrf.mxu0
        %v5744 = vadd.f32 %v5703, %v5743
        %v5745 = vpop.f32.mrf.mxu0
        %v5746 = vpop.f32.mrf.mxu0
        %5747 = vdwg.mxu0
        %5748 = vmatprep.subr.bf16.mxu0 %v4688
        %5749 = vmatpush1.bf16.msra.mxu0 %v4687
        %5750 = vmatprep.subr.bf16.mxu0 %v4676
        %5751 = vmatpush1.bf16.msra.mxu0 %v4675
        %5752 = vmatprep.subr.bf16.mxu0 %v4664
        %5753 = vmatpush1.bf16.msra.mxu0 %v4663
        %5754 = vmatprep.subr.bf16.mxu0 %v4652
        %5755 = vmatpush1.bf16.msra.mxu0 %v4651
        %5756 = vmatprep.subr.bf16.mxu0 %v4640
        %5757 = vmatpush1.bf16.msra.mxu0 %v4639
        %5758 = vmatprep.subr.bf16.mxu0 %v4628
        %5759 = vmatpush1.bf16.msra.mxu0 %v4627
        %5760 = vmatprep.subr.bf16.mxu0 %v4616
        %5761 = vmatpush1.bf16.msra.mxu0 %v4615
        %5762 = vmatprep.subr.bf16.mxu0 %v4604
        %5763 = vmatpush1.bf16.msra.mxu0 %v4603
        %5764 = vmatprep.subr.bf16.mxu0 %v4784
        %5765 = vmatpush2.bf16.msra.mxu0 %v4783
        %5766 = vmatprep.subr.bf16.mxu0 %v4772
        %5767 = vmatpush2.bf16.msra.mxu0 %v4771
        %5768 = vmatprep.subr.bf16.mxu0 %v4760
        %5769 = vmatpush2.bf16.msra.mxu0 %v4759
        %5770 = vmatprep.subr.bf16.mxu0 %v4748
        %5771 = vmatpush2.bf16.msra.mxu0 %v4747
        %5772 = vmatprep.subr.bf16.mxu0 %v4736
        %5773 = vmatpush2.bf16.msra.mxu0 %v4735
        %5774 = vmatprep.subr.bf16.mxu0 %v4724
        %5775 = vmatpush2.bf16.msra.mxu0 %v4723
        %5776 = vmatprep.subr.bf16.mxu0 %v4712
        %5777 = vmatpush2.bf16.msra.mxu0 %v4711
        %5778 = vmatprep.subr.bf16.mxu0 %v4700
        %5779 = vmatpush2.bf16.msra.mxu0 %v4699
        %5780 = vmatprep.mubr.bf16.mxu0 %v1714
        %5781 = vmatmul.mubr.bf16.gmra.mxu0 %v1712
        %v5782 = vpop.f32.mrf.mxu0
        %v5783 = vadd.f32 %v5742, %v5782
        %v5784 = vpop.f32.mrf.mxu0
        %v5785 = vadd.f32 %v5744, %v5784
        %v5786 = vpop.f32.mrf.mxu0
        %v5787 = vpop.f32.mrf.mxu0
        %5788 = vdwg.mxu0
        %5789 = vmatprep.subr.bf16.mxu0 %v4114
        %5790 = vmatpush1.bf16.msra.mxu0 %v4113
        %5791 = vmatprep.subr.bf16.mxu0 %v4102
        %5792 = vmatpush1.bf16.msra.mxu0 %v4101
        %5793 = vmatprep.subr.bf16.mxu0 %v4090
        %5794 = vmatpush1.bf16.msra.mxu0 %v4089
        %5795 = vmatprep.subr.bf16.mxu0 %v4078
        %5796 = vmatpush1.bf16.msra.mxu0 %v4077
        %5797 = vmatprep.subr.bf16.mxu0 %v4066
        %5798 = vmatpush1.bf16.msra.mxu0 %v4065
        %5799 = vmatprep.subr.bf16.mxu0 %v4054
        %5800 = vmatpush1.bf16.msra.mxu0 %v4053
        %5801 = vmatprep.subr.bf16.mxu0 %v4042
        %5802 = vmatpush1.bf16.msra.mxu0 %v4041
        %5803 = vmatprep.subr.bf16.mxu0 %v4030
        %5804 = vmatpush1.bf16.msra.mxu0 %v4029
        %5805 = vmatprep.subr.bf16.mxu0 %v4210
        %5806 = vmatpush2.bf16.msra.mxu0 %v4209
        %5807 = vmatprep.subr.bf16.mxu0 %v4198
        %5808 = vmatpush2.bf16.msra.mxu0 %v4197
        %5809 = vmatprep.subr.bf16.mxu0 %v4186
        %5810 = vmatpush2.bf16.msra.mxu0 %v4185
        %5811 = vmatprep.subr.bf16.mxu0 %v4174
        %5812 = vmatpush2.bf16.msra.mxu0 %v4173
        %5813 = vmatprep.subr.bf16.mxu0 %v4162
        %5814 = vmatpush2.bf16.msra.mxu0 %v4161
        %5815 = vmatprep.subr.bf16.mxu0 %v4150
        %5816 = vmatpush2.bf16.msra.mxu0 %v4149
        %5817 = vmatprep.subr.bf16.mxu0 %v4138
        %5818 = vmatpush2.bf16.msra.mxu0 %v4137
        %5819 = vmatprep.subr.bf16.mxu0 %v4126
        %5820 = vmatpush2.bf16.msra.mxu0 %v4125
        %5821 = vmatprep.mubr.bf16.mxu0 %v1703
        %5822 = vmatmul.mubr.bf16.gmra.mxu0 %v1689
        %v5823 = vpop.f32.mrf.mxu0
        %v5824 = vadd.f32 %v5576, %v5823
        %v5825 = vpop.f32.mrf.mxu0
        %v5826 = vadd.f32 %v5580, %v5825
        %v5827 = vpop.f32.mrf.mxu0
        %v5828 = vpop.f32.mrf.mxu0
        %5829 = vdwg.mxu0
        %5830 = vmatprep.subr.bf16.mxu0 %v4306
        %5831 = vmatpush1.bf16.msra.mxu0 %v4305
        %5832 = vmatprep.subr.bf16.mxu0 %v4294
        %5833 = vmatpush1.bf16.msra.mxu0 %v4293
        %5834 = vmatprep.subr.bf16.mxu0 %v4282
        %5835 = vmatpush1.bf16.msra.mxu0 %v4281
        %5836 = vmatprep.subr.bf16.mxu0 %v4270
        %5837 = vmatpush1.bf16.msra.mxu0 %v4269
        %5838 = vmatprep.subr.bf16.mxu0 %v4258
        %5839 = vmatpush1.bf16.msra.mxu0 %v4257
        %5840 = vmatprep.subr.bf16.mxu0 %v4246
        %5841 = vmatpush1.bf16.msra.mxu0 %v4245
        %5842 = vmatprep.subr.bf16.mxu0 %v4234
        %5843 = vmatpush1.bf16.msra.mxu0 %v4233
        %5844 = vmatprep.subr.bf16.mxu0 %v4222
        %5845 = vmatpush1.bf16.msra.mxu0 %v4221
        %5846 = vmatprep.subr.bf16.mxu0 %v4402
        %5847 = vmatpush2.bf16.msra.mxu0 %v4401
        %5848 = vmatprep.subr.bf16.mxu0 %v4390
        %5849 = vmatpush2.bf16.msra.mxu0 %v4389
        %5850 = vmatprep.subr.bf16.mxu0 %v4378
        %5851 = vmatpush2.bf16.msra.mxu0 %v4377
        %5852 = vmatprep.subr.bf16.mxu0 %v4366
        %5853 = vmatpush2.bf16.msra.mxu0 %v4365
        %5854 = vmatprep.subr.bf16.mxu0 %v4354
        %5855 = vmatpush2.bf16.msra.mxu0 %v4353
        %5856 = vmatprep.subr.bf16.mxu0 %v4342
        %5857 = vmatpush2.bf16.msra.mxu0 %v4341
        %5858 = vmatprep.subr.bf16.mxu0 %v4330
        %5859 = vmatpush2.bf16.msra.mxu0 %v4329
        %5860 = vmatprep.subr.bf16.mxu0 %v4318
        %5861 = vmatpush2.bf16.msra.mxu0 %v4317
        %5862 = vmatprep.mubr.bf16.mxu0 %v1713
        %5863 = vmatmul.mubr.bf16.gmra.mxu0 %v1711
        %v5864 = vpop.f32.mrf.mxu0
        %v5865 = vadd.f32 %v5824, %v5864
        %v5866 = vpop.f32.mrf.mxu0
        %v5867 = vadd.f32 %v5826, %v5866
        %v5868 = vpop.f32.mrf.mxu0
        %v5869 = vpop.f32.mrf.mxu0
        %5870 = vdwg.mxu0
        %5871 = vmatprep.subr.bf16.mxu0 %v4498
        %5872 = vmatpush1.bf16.msra.mxu0 %v4497
        %5873 = vmatprep.subr.bf16.mxu0 %v4486
        %5874 = vmatpush1.bf16.msra.mxu0 %v4485
        %5875 = vmatprep.subr.bf16.mxu0 %v4474
        %5876 = vmatpush1.bf16.msra.mxu0 %v4473
        %5877 = vmatprep.subr.bf16.mxu0 %v4462
        %5878 = vmatpush1.bf16.msra.mxu0 %v4461
        %5879 = vmatprep.subr.bf16.mxu0 %v4450
        %5880 = vmatpush1.bf16.msra.mxu0 %v4449
        %5881 = vmatprep.subr.bf16.mxu0 %v4438
        %5882 = vmatpush1.bf16.msra.mxu0 %v4437
        %5883 = vmatprep.subr.bf16.mxu0 %v4426
        %5884 = vmatpush1.bf16.msra.mxu0 %v4425
        %5885 = vmatprep.subr.bf16.mxu0 %v4414
        %5886 = vmatpush1.bf16.msra.mxu0 %v4413
        %5887 = vmatprep.subr.bf16.mxu0 %v4594
        %5888 = vmatpush2.bf16.msra.mxu0 %v4593
        %5889 = vmatprep.subr.bf16.mxu0 %v4582
        %5890 = vmatpush2.bf16.msra.mxu0 %v4581
        %5891 = vmatprep.subr.bf16.mxu0 %v4570
        %5892 = vmatpush2.bf16.msra.mxu0 %v4569
        %5893 = vmatprep.subr.bf16.mxu0 %v4558
        %5894 = vmatpush2.bf16.msra.mxu0 %v4557
        %5895 = vmatprep.subr.bf16.mxu0 %v4546
        %5896 = vmatpush2.bf16.msra.mxu0 %v4545
        %5897 = vmatprep.subr.bf16.mxu0 %v4534
        %5898 = vmatpush2.bf16.msra.mxu0 %v4533
        %5899 = vmatprep.subr.bf16.mxu0 %v4522
        %5900 = vmatpush2.bf16.msra.mxu0 %v4521
        %5901 = vmatprep.subr.bf16.mxu0 %v4510
        %5902 = vmatpush2.bf16.msra.mxu0 %v4509
        %5903 = vmatprep.mubr.bf16.mxu0 %v1710
        %5904 = vmatmul.mubr.bf16.gmra.mxu0 %v1696
        %v5905 = vpop.f32.mrf.mxu0
        %v5906 = vadd.f32 %v5865, %v5905
        %v5907 = vpop.f32.mrf.mxu0
        %v5908 = vadd.f32 %v5867, %v5907
        %v5909 = vpop.f32.mrf.mxu0
        %v5910 = vpop.f32.mrf.mxu0
        %5911 = vdwg.mxu0
        %5912 = vmatprep.subr.bf16.mxu0 %v4690
        %5913 = vmatpush1.bf16.msra.mxu0 %v4689
        %5914 = vmatprep.subr.bf16.mxu0 %v4678
        %5915 = vmatpush1.bf16.msra.mxu0 %v4677
        %5916 = vmatprep.subr.bf16.mxu0 %v4666
        %5917 = vmatpush1.bf16.msra.mxu0 %v4665
        %5918 = vmatprep.subr.bf16.mxu0 %v4654
        %5919 = vmatpush1.bf16.msra.mxu0 %v4653
        %5920 = vmatprep.subr.bf16.mxu0 %v4642
        %5921 = vmatpush1.bf16.msra.mxu0 %v4641
        %5922 = vmatprep.subr.bf16.mxu0 %v4630
        %5923 = vmatpush1.bf16.msra.mxu0 %v4629
        %5924 = vmatprep.subr.bf16.mxu0 %v4618
        %5925 = vmatpush1.bf16.msra.mxu0 %v4617
        %5926 = vmatprep.subr.bf16.mxu0 %v4606
        %5927 = vmatpush1.bf16.msra.mxu0 %v4605
        %5928 = vmatprep.subr.bf16.mxu0 %v4786
        %5929 = vmatpush2.bf16.msra.mxu0 %v4785
        %5930 = vmatprep.subr.bf16.mxu0 %v4774
        %5931 = vmatpush2.bf16.msra.mxu0 %v4773
        %5932 = vmatprep.subr.bf16.mxu0 %v4762
        %5933 = vmatpush2.bf16.msra.mxu0 %v4761
        %5934 = vmatprep.subr.bf16.mxu0 %v4750
        %5935 = vmatpush2.bf16.msra.mxu0 %v4749
        %5936 = vmatprep.subr.bf16.mxu0 %v4738
        %5937 = vmatpush2.bf16.msra.mxu0 %v4737
        %5938 = vmatprep.subr.bf16.mxu0 %v4726
        %5939 = vmatpush2.bf16.msra.mxu0 %v4725
        %5940 = vmatprep.subr.bf16.mxu0 %v4714
        %5941 = vmatpush2.bf16.msra.mxu0 %v4713
        %5942 = vmatprep.subr.bf16.mxu0 %v4702
        %5943 = vmatpush2.bf16.msra.mxu0 %v4701
        %5944 = vmatprep.mubr.bf16.mxu0 %v1714
        %5945 = vmatmul.mubr.bf16.gmra.mxu0 %v1712
        %v5946 = vpop.f32.mrf.mxu0
        %v5947 = vadd.f32 %v5906, %v5946
        %v5948 = vpop.f32.mrf.mxu0
        %v5949 = vadd.f32 %v5908, %v5948
        %v5950 = vpop.f32.mrf.mxu0
        %v5951 = vpop.f32.mrf.mxu0
        %5952 = vdwg.mxu0
        %5953 = vmatprep.subr.bf16.mxu0 %v4116
        %5954 = vmatpush1.bf16.msra.mxu0 %v4115
        %5955 = vmatprep.subr.bf16.mxu0 %v4104
        %5956 = vmatpush1.bf16.msra.mxu0 %v4103
        %5957 = vmatprep.subr.bf16.mxu0 %v4092
        %5958 = vmatpush1.bf16.msra.mxu0 %v4091
        %5959 = vmatprep.subr.bf16.mxu0 %v4080
        %5960 = vmatpush1.bf16.msra.mxu0 %v4079
        %5961 = vmatprep.subr.bf16.mxu0 %v4068
        %5962 = vmatpush1.bf16.msra.mxu0 %v4067
        %5963 = vmatprep.subr.bf16.mxu0 %v4056
        %5964 = vmatpush1.bf16.msra.mxu0 %v4055
        %5965 = vmatprep.subr.bf16.mxu0 %v4044
        %5966 = vmatpush1.bf16.msra.mxu0 %v4043
        %5967 = vmatprep.subr.bf16.mxu0 %v4032
        %5968 = vmatpush1.bf16.msra.mxu0 %v4031
        %5969 = vmatprep.subr.bf16.mxu0 %v4212
        %5970 = vmatpush2.bf16.msra.mxu0 %v4211
        %5971 = vmatprep.subr.bf16.mxu0 %v4200
        %5972 = vmatpush2.bf16.msra.mxu0 %v4199
        %5973 = vmatprep.subr.bf16.mxu0 %v4188
        %5974 = vmatpush2.bf16.msra.mxu0 %v4187
        %5975 = vmatprep.subr.bf16.mxu0 %v4176
        %5976 = vmatpush2.bf16.msra.mxu0 %v4175
        %5977 = vmatprep.subr.bf16.mxu0 %v4164
        %5978 = vmatpush2.bf16.msra.mxu0 %v4163
        %5979 = vmatprep.subr.bf16.mxu0 %v4152
        %5980 = vmatpush2.bf16.msra.mxu0 %v4151
        %5981 = vmatprep.subr.bf16.mxu0 %v4140
        %5982 = vmatpush2.bf16.msra.mxu0 %v4139
        %5983 = vmatprep.subr.bf16.mxu0 %v4128
        %5984 = vmatpush2.bf16.msra.mxu0 %v4127
        %5985 = vmatprep.mubr.bf16.mxu0 %v1703
        %5986 = vmatmul.mubr.bf16.gmra.mxu0 %v1689
        %v5987 = vpop.f32.mrf.mxu0
        %v5988 = vadd.f32 %v5584, %v5987
        %v5989 = vpop.f32.mrf.mxu0
        %v5990 = vadd.f32 %v5588, %v5989
        %v5991 = vpop.f32.mrf.mxu0
        %v5992 = vpop.f32.mrf.mxu0
        %5993 = vdwg.mxu0
        %5994 = vmatprep.subr.bf16.mxu0 %v4308
        %5995 = vmatpush1.bf16.msra.mxu0 %v4307
        %5996 = vmatprep.subr.bf16.mxu0 %v4296
        %5997 = vmatpush1.bf16.msra.mxu0 %v4295
        %5998 = vmatprep.subr.bf16.mxu0 %v4284
        %5999 = vmatpush1.bf16.msra.mxu0 %v4283
        %6000 = vmatprep.subr.bf16.mxu0 %v4272
        %6001 = vmatpush1.bf16.msra.mxu0 %v4271
        %6002 = vmatprep.subr.bf16.mxu0 %v4260
        %6003 = vmatpush1.bf16.msra.mxu0 %v4259
        %6004 = vmatprep.subr.bf16.mxu0 %v4248
        %6005 = vmatpush1.bf16.msra.mxu0 %v4247
        %6006 = vmatprep.subr.bf16.mxu0 %v4236
        %6007 = vmatpush1.bf16.msra.mxu0 %v4235
        %6008 = vmatprep.subr.bf16.mxu0 %v4224
        %6009 = vmatpush1.bf16.msra.mxu0 %v4223
        %6010 = vmatprep.subr.bf16.mxu0 %v4404
        %6011 = vmatpush2.bf16.msra.mxu0 %v4403
        %6012 = vmatprep.subr.bf16.mxu0 %v4392
        %6013 = vmatpush2.bf16.msra.mxu0 %v4391
        %6014 = vmatprep.subr.bf16.mxu0 %v4380
        %6015 = vmatpush2.bf16.msra.mxu0 %v4379
        %6016 = vmatprep.subr.bf16.mxu0 %v4368
        %6017 = vmatpush2.bf16.msra.mxu0 %v4367
        %6018 = vmatprep.subr.bf16.mxu0 %v4356
        %6019 = vmatpush2.bf16.msra.mxu0 %v4355
        %6020 = vmatprep.subr.bf16.mxu0 %v4344
        %6021 = vmatpush2.bf16.msra.mxu0 %v4343
        %6022 = vmatprep.subr.bf16.mxu0 %v4332
        %6023 = vmatpush2.bf16.msra.mxu0 %v4331
        %6024 = vmatprep.subr.bf16.mxu0 %v4320
        %6025 = vmatpush2.bf16.msra.mxu0 %v4319
        %6026 = vmatprep.mubr.bf16.mxu0 %v1713
        %6027 = vmatmul.mubr.bf16.gmra.mxu0 %v1711
        %v6028 = vpop.f32.mrf.mxu0
        %v6029 = vadd.f32 %v5988, %v6028
        %v6030 = vpop.f32.mrf.mxu0
        %v6031 = vadd.f32 %v5990, %v6030
        %v6032 = vpop.f32.mrf.mxu0
        %v6033 = vpop.f32.mrf.mxu0
        %6034 = vdwg.mxu0
        %6035 = vmatprep.subr.bf16.mxu0 %v4500
        %6036 = vmatpush1.bf16.msra.mxu0 %v4499
        %6037 = vmatprep.subr.bf16.mxu0 %v4488
        %6038 = vmatpush1.bf16.msra.mxu0 %v4487
        %6039 = vmatprep.subr.bf16.mxu0 %v4476
        %6040 = vmatpush1.bf16.msra.mxu0 %v4475
        %6041 = vmatprep.subr.bf16.mxu0 %v4464
        %6042 = vmatpush1.bf16.msra.mxu0 %v4463
        %6043 = vmatprep.subr.bf16.mxu0 %v4452
        %6044 = vmatpush1.bf16.msra.mxu0 %v4451
        %6045 = vmatprep.subr.bf16.mxu0 %v4440
        %6046 = vmatpush1.bf16.msra.mxu0 %v4439
        %6047 = vmatprep.subr.bf16.mxu0 %v4428
        %6048 = vmatpush1.bf16.msra.mxu0 %v4427
        %6049 = vmatprep.subr.bf16.mxu0 %v4416
        %6050 = vmatpush1.bf16.msra.mxu0 %v4415
        %6051 = vmatprep.subr.bf16.mxu0 %v4596
        %6052 = vmatpush2.bf16.msra.mxu0 %v4595
        %6053 = vmatprep.subr.bf16.mxu0 %v4584
        %6054 = vmatpush2.bf16.msra.mxu0 %v4583
        %6055 = vmatprep.subr.bf16.mxu0 %v4572
        %6056 = vmatpush2.bf16.msra.mxu0 %v4571
        %6057 = vmatprep.subr.bf16.mxu0 %v4560
        %6058 = vmatpush2.bf16.msra.mxu0 %v4559
        %6059 = vmatprep.subr.bf16.mxu0 %v4548
        %6060 = vmatpush2.bf16.msra.mxu0 %v4547
        %6061 = vmatprep.subr.bf16.mxu0 %v4536
        %6062 = vmatpush2.bf16.msra.mxu0 %v4535
        %6063 = vmatprep.subr.bf16.mxu0 %v4524
        %6064 = vmatpush2.bf16.msra.mxu0 %v4523
        %6065 = vmatprep.subr.bf16.mxu0 %v4512
        %6066 = vmatpush2.bf16.msra.mxu0 %v4511
        %6067 = vmatprep.mubr.bf16.mxu0 %v1710
        %6068 = vmatmul.mubr.bf16.gmra.mxu0 %v1696
        %v6069 = vpop.f32.mrf.mxu0
        %v6070 = vadd.f32 %v6029, %v6069
        %v6071 = vpop.f32.mrf.mxu0
        %v6072 = vadd.f32 %v6031, %v6071
        %v6073 = vpop.f32.mrf.mxu0
        %v6074 = vpop.f32.mrf.mxu0
        %6075 = vdwg.mxu0
        %6076 = vmatprep.subr.bf16.mxu0 %v4692
        %6077 = vmatpush1.bf16.msra.mxu0 %v4691
        %6078 = vmatprep.subr.bf16.mxu0 %v4680
        %6079 = vmatpush1.bf16.msra.mxu0 %v4679
        %6080 = vmatprep.subr.bf16.mxu0 %v4668
        %6081 = vmatpush1.bf16.msra.mxu0 %v4667
        %6082 = vmatprep.subr.bf16.mxu0 %v4656
        %6083 = vmatpush1.bf16.msra.mxu0 %v4655
        %6084 = vmatprep.subr.bf16.mxu0 %v4644
        %6085 = vmatpush1.bf16.msra.mxu0 %v4643
        %6086 = vmatprep.subr.bf16.mxu0 %v4632
        %6087 = vmatpush1.bf16.msra.mxu0 %v4631
        %6088 = vmatprep.subr.bf16.mxu0 %v4620
        %6089 = vmatpush1.bf16.msra.mxu0 %v4619
        %6090 = vmatprep.subr.bf16.mxu0 %v4608
        %6091 = vmatpush1.bf16.msra.mxu0 %v4607
        %6092 = vmatprep.subr.bf16.mxu0 %v4788
        %6093 = vmatpush2.bf16.msra.mxu0 %v4787
        %6094 = vmatprep.subr.bf16.mxu0 %v4776
        %6095 = vmatpush2.bf16.msra.mxu0 %v4775
        %6096 = vmatprep.subr.bf16.mxu0 %v4764
        %6097 = vmatpush2.bf16.msra.mxu0 %v4763
        %6098 = vmatprep.subr.bf16.mxu0 %v4752
        %6099 = vmatpush2.bf16.msra.mxu0 %v4751
        %6100 = vmatprep.subr.bf16.mxu0 %v4740
        %6101 = vmatpush2.bf16.msra.mxu0 %v4739
        %6102 = vmatprep.subr.bf16.mxu0 %v4728
        %6103 = vmatpush2.bf16.msra.mxu0 %v4727
        %6104 = vmatprep.subr.bf16.mxu0 %v4716
        %6105 = vmatpush2.bf16.msra.mxu0 %v4715
        %6106 = vmatprep.subr.bf16.mxu0 %v4704
        %6107 = vmatpush2.bf16.msra.mxu0 %v4703
        %6108 = vmatprep.mubr.bf16.mxu0 %v1714
        %6109 = vmatmul.mubr.bf16.gmra.mxu0 %v1712
        %v6110 = vpop.f32.mrf.mxu0
        %v6111 = vadd.f32 %v6070, %v6110
        %v6112 = vpop.f32.mrf.mxu0
        %v6113 = vadd.f32 %v6072, %v6112
        %v6114 = vpop.f32.mrf.mxu0
        %v6115 = vpop.f32.mrf.mxu0
        %6116 = vdwg.mxu0
        %6117 = vmatprep.subr.bf16.mxu0 %v4118
        %6118 = vmatpush1.bf16.msra.mxu0 %v4117
        %6119 = vmatprep.subr.bf16.mxu0 %v4106
        %6120 = vmatpush1.bf16.msra.mxu0 %v4105
        %6121 = vmatprep.subr.bf16.mxu0 %v4094
        %6122 = vmatpush1.bf16.msra.mxu0 %v4093
        %6123 = vmatprep.subr.bf16.mxu0 %v4082
        %6124 = vmatpush1.bf16.msra.mxu0 %v4081
        %6125 = vmatprep.subr.bf16.mxu0 %v4070
        %6126 = vmatpush1.bf16.msra.mxu0 %v4069
        %6127 = vmatprep.subr.bf16.mxu0 %v4058
        %6128 = vmatpush1.bf16.msra.mxu0 %v4057
        %6129 = vmatprep.subr.bf16.mxu0 %v4046
        %6130 = vmatpush1.bf16.msra.mxu0 %v4045
        %6131 = vmatprep.subr.bf16.mxu0 %v4034
        %6132 = vmatpush1.bf16.msra.mxu0 %v4033
        %6133 = vmatprep.subr.bf16.mxu0 %v4214
        %6134 = vmatpush2.bf16.msra.mxu0 %v4213
        %6135 = vmatprep.subr.bf16.mxu0 %v4202
        %6136 = vmatpush2.bf16.msra.mxu0 %v4201
        %6137 = vmatprep.subr.bf16.mxu0 %v4190
        %6138 = vmatpush2.bf16.msra.mxu0 %v4189
        %6139 = vmatprep.subr.bf16.mxu0 %v4178
        %6140 = vmatpush2.bf16.msra.mxu0 %v4177
        %6141 = vmatprep.subr.bf16.mxu0 %v4166
        %6142 = vmatpush2.bf16.msra.mxu0 %v4165
        %6143 = vmatprep.subr.bf16.mxu0 %v4154
        %6144 = vmatpush2.bf16.msra.mxu0 %v4153
        %6145 = vmatprep.subr.bf16.mxu0 %v4142
        %6146 = vmatpush2.bf16.msra.mxu0 %v4141
        %6147 = vmatprep.subr.bf16.mxu0 %v4130
        %6148 = vmatpush2.bf16.msra.mxu0 %v4129
        %6149 = vmatprep.mubr.bf16.mxu0 %v1703
        %6150 = vmatmul.mubr.bf16.gmra.mxu0 %v1689
        %v6151 = vpop.f32.mrf.mxu0
        %v6152 = vadd.f32 %v5592, %v6151
        %v6153 = vpop.f32.mrf.mxu0
        %v6154 = vadd.f32 %v5596, %v6153
        %v6155 = vpop.f32.mrf.mxu0
        %v6156 = vpop.f32.mrf.mxu0
        %6157 = vdwg.mxu0
        %6158 = vmatprep.subr.bf16.mxu0 %v4310
        %6159 = vmatpush1.bf16.msra.mxu0 %v4309
        %6160 = vmatprep.subr.bf16.mxu0 %v4298
        %6161 = vmatpush1.bf16.msra.mxu0 %v4297
        %6162 = vmatprep.subr.bf16.mxu0 %v4286
        %6163 = vmatpush1.bf16.msra.mxu0 %v4285
        %6164 = vmatprep.subr.bf16.mxu0 %v4274
        %6165 = vmatpush1.bf16.msra.mxu0 %v4273
        %6166 = vmatprep.subr.bf16.mxu0 %v4262
        %6167 = vmatpush1.bf16.msra.mxu0 %v4261
        %6168 = vmatprep.subr.bf16.mxu0 %v4250
        %6169 = vmatpush1.bf16.msra.mxu0 %v4249
        %6170 = vmatprep.subr.bf16.mxu0 %v4238
        %6171 = vmatpush1.bf16.msra.mxu0 %v4237
        %6172 = vmatprep.subr.bf16.mxu0 %v4226
        %6173 = vmatpush1.bf16.msra.mxu0 %v4225
        %6174 = vmatprep.subr.bf16.mxu0 %v4406
        %6175 = vmatpush2.bf16.msra.mxu0 %v4405
        %6176 = vmatprep.subr.bf16.mxu0 %v4394
        %6177 = vmatpush2.bf16.msra.mxu0 %v4393
        %6178 = vmatprep.subr.bf16.mxu0 %v4382
        %6179 = vmatpush2.bf16.msra.mxu0 %v4381
        %6180 = vmatprep.subr.bf16.mxu0 %v4370
        %6181 = vmatpush2.bf16.msra.mxu0 %v4369
        %6182 = vmatprep.subr.bf16.mxu0 %v4358
        %6183 = vmatpush2.bf16.msra.mxu0 %v4357
        %6184 = vmatprep.subr.bf16.mxu0 %v4346
        %6185 = vmatpush2.bf16.msra.mxu0 %v4345
        %6186 = vmatprep.subr.bf16.mxu0 %v4334
        %6187 = vmatpush2.bf16.msra.mxu0 %v4333
        %6188 = vmatprep.subr.bf16.mxu0 %v4322
        %6189 = vmatpush2.bf16.msra.mxu0 %v4321
        %6190 = vmatprep.mubr.bf16.mxu0 %v1713
        %6191 = vmatmul.mubr.bf16.gmra.mxu0 %v1711
        %v6192 = vpop.f32.mrf.mxu0
        %v6193 = vadd.f32 %v6152, %v6192
        %v6194 = vpop.f32.mrf.mxu0
        %v6195 = vadd.f32 %v6154, %v6194
        %v6196 = vpop.f32.mrf.mxu0
        %v6197 = vpop.f32.mrf.mxu0
        %6198 = vdwg.mxu0
        %6199 = vmatprep.subr.bf16.mxu0 %v4502
        %6200 = vmatpush1.bf16.msra.mxu0 %v4501
        %6201 = vmatprep.subr.bf16.mxu0 %v4490
        %6202 = vmatpush1.bf16.msra.mxu0 %v4489
        %6203 = vmatprep.subr.bf16.mxu0 %v4478
        %6204 = vmatpush1.bf16.msra.mxu0 %v4477
        %6205 = vmatprep.subr.bf16.mxu0 %v4466
        %6206 = vmatpush1.bf16.msra.mxu0 %v4465
        %6207 = vmatprep.subr.bf16.mxu0 %v4454
        %6208 = vmatpush1.bf16.msra.mxu0 %v4453
        %6209 = vmatprep.subr.bf16.mxu0 %v4442
        %6210 = vmatpush1.bf16.msra.mxu0 %v4441
        %6211 = vmatprep.subr.bf16.mxu0 %v4430
        %6212 = vmatpush1.bf16.msra.mxu0 %v4429
        %6213 = vmatprep.subr.bf16.mxu0 %v4418
        %6214 = vmatpush1.bf16.msra.mxu0 %v4417
        %6215 = vmatprep.subr.bf16.mxu0 %v4598
        %6216 = vmatpush2.bf16.msra.mxu0 %v4597
        %6217 = vmatprep.subr.bf16.mxu0 %v4586
        %6218 = vmatpush2.bf16.msra.mxu0 %v4585
        %6219 = vmatprep.subr.bf16.mxu0 %v4574
        %6220 = vmatpush2.bf16.msra.mxu0 %v4573
        %6221 = vmatprep.subr.bf16.mxu0 %v4562
        %6222 = vmatpush2.bf16.msra.mxu0 %v4561
        %6223 = vmatprep.subr.bf16.mxu0 %v4550
        %6224 = vmatpush2.bf16.msra.mxu0 %v4549
        %6225 = vmatprep.subr.bf16.mxu0 %v4538
        %6226 = vmatpush2.bf16.msra.mxu0 %v4537
        %6227 = vmatprep.subr.bf16.mxu0 %v4526
        %6228 = vmatpush2.bf16.msra.mxu0 %v4525
        %6229 = vmatprep.subr.bf16.mxu0 %v4514
        %6230 = vmatpush2.bf16.msra.mxu0 %v4513
        %6231 = vmatprep.mubr.bf16.mxu0 %v1710
        %6232 = vmatmul.mubr.bf16.gmra.mxu0 %v1696
        %v6233 = vpop.f32.mrf.mxu0
        %v6234 = vadd.f32 %v6193, %v6233
        %v6235 = vpop.f32.mrf.mxu0
        %v6236 = vadd.f32 %v6195, %v6235
        %v6237 = vpop.f32.mrf.mxu0
        %v6238 = vpop.f32.mrf.mxu0
        %6239 = vdwg.mxu0
        %6240 = vmatprep.subr.bf16.mxu0 %v4694
        %6241 = vmatpush1.bf16.msra.mxu0 %v4693
        %6242 = vmatprep.subr.bf16.mxu0 %v4682
        %6243 = vmatpush1.bf16.msra.mxu0 %v4681
        %6244 = vmatprep.subr.bf16.mxu0 %v4670
        %6245 = vmatpush1.bf16.msra.mxu0 %v4669
        %6246 = vmatprep.subr.bf16.mxu0 %v4658
        %6247 = vmatpush1.bf16.msra.mxu0 %v4657
        %6248 = vmatprep.subr.bf16.mxu0 %v4646
        %6249 = vmatpush1.bf16.msra.mxu0 %v4645
        %6250 = vmatprep.subr.bf16.mxu0 %v4634
        %6251 = vmatpush1.bf16.msra.mxu0 %v4633
        %6252 = vmatprep.subr.bf16.mxu0 %v4622
        %6253 = vmatpush1.bf16.msra.mxu0 %v4621
        %6254 = vmatprep.subr.bf16.mxu0 %v4610
        %6255 = vmatpush1.bf16.msra.mxu0 %v4609
        %6256 = vmatprep.subr.bf16.mxu0 %v4790
        %6257 = vmatpush2.bf16.msra.mxu0 %v4789
        %6258 = vmatprep.subr.bf16.mxu0 %v4778
        %6259 = vmatpush2.bf16.msra.mxu0 %v4777
        %6260 = vmatprep.subr.bf16.mxu0 %v4766
        %6261 = vmatpush2.bf16.msra.mxu0 %v4765
        %6262 = vmatprep.subr.bf16.mxu0 %v4754
        %6263 = vmatpush2.bf16.msra.mxu0 %v4753
        %6264 = vmatprep.subr.bf16.mxu0 %v4742
        %6265 = vmatpush2.bf16.msra.mxu0 %v4741
        %6266 = vmatprep.subr.bf16.mxu0 %v4730
        %6267 = vmatpush2.bf16.msra.mxu0 %v4729
        %6268 = vmatprep.subr.bf16.mxu0 %v4718
        %6269 = vmatpush2.bf16.msra.mxu0 %v4717
        %6270 = vmatprep.subr.bf16.mxu0 %v4706
        %6271 = vmatpush2.bf16.msra.mxu0 %v4705
        %6272 = vmatprep.mubr.bf16.mxu0 %v1714
        %6273 = vmatmul.mubr.bf16.gmra.mxu0 %v1712
        %v6274 = vpop.f32.mrf.mxu0
        %v6275 = vadd.f32 %v6234, %v6274
        %v6276 = vpop.f32.mrf.mxu0
        %v6277 = vadd.f32 %v6236, %v6276
        %v6278 = vpop.f32.mrf.mxu0
        %v6279 = vpop.f32.mrf.mxu0
        %6280 = vdwg.mxu0
        %6281 = vmatprep.subr.bf16.mxu0 %v4120
        %6282 = vmatpush1.bf16.msra.mxu0 %v4119
        %6283 = vmatprep.subr.bf16.mxu0 %v4108
        %6284 = vmatpush1.bf16.msra.mxu0 %v4107
        %6285 = vmatprep.subr.bf16.mxu0 %v4096
        %6286 = vmatpush1.bf16.msra.mxu0 %v4095
        %6287 = vmatprep.subr.bf16.mxu0 %v4084
        %6288 = vmatpush1.bf16.msra.mxu0 %v4083
        %6289 = vmatprep.subr.bf16.mxu0 %v4072
        %6290 = vmatpush1.bf16.msra.mxu0 %v4071
        %6291 = vmatprep.subr.bf16.mxu0 %v4060
        %6292 = vmatpush1.bf16.msra.mxu0 %v4059
        %6293 = vmatprep.subr.bf16.mxu0 %v4048
        %6294 = vmatpush1.bf16.msra.mxu0 %v4047
        %6295 = vmatprep.subr.bf16.mxu0 %v4036
        %6296 = vmatpush1.bf16.msra.mxu0 %v4035
        %6297 = vmatprep.subr.bf16.mxu0 %v4216
        %6298 = vmatpush2.bf16.msra.mxu0 %v4215
        %6299 = vmatprep.subr.bf16.mxu0 %v4204
        %6300 = vmatpush2.bf16.msra.mxu0 %v4203
        %6301 = vmatprep.subr.bf16.mxu0 %v4192
        %6302 = vmatpush2.bf16.msra.mxu0 %v4191
        %6303 = vmatprep.subr.bf16.mxu0 %v4180
        %6304 = vmatpush2.bf16.msra.mxu0 %v4179
        %6305 = vmatprep.subr.bf16.mxu0 %v4168
        %6306 = vmatpush2.bf16.msra.mxu0 %v4167
        %6307 = vmatprep.subr.bf16.mxu0 %v4156
        %6308 = vmatpush2.bf16.msra.mxu0 %v4155
        %6309 = vmatprep.subr.bf16.mxu0 %v4144
        %6310 = vmatpush2.bf16.msra.mxu0 %v4143
        %6311 = vmatprep.subr.bf16.mxu0 %v4132
        %6312 = vmatpush2.bf16.msra.mxu0 %v4131
        %6313 = vmatprep.mubr.bf16.mxu0 %v1703
        %6314 = vmatmul.mubr.bf16.gmra.mxu0 %v1689
        %v6315 = vpop.f32.mrf.mxu0
        %v6316 = vadd.f32 %v5600, %v6315
        %v6317 = vpop.f32.mrf.mxu0
        %v6318 = vadd.f32 %v5604, %v6317
        %v6319 = vpop.f32.mrf.mxu0
        %v6320 = vpop.f32.mrf.mxu0
        %6321 = vdwg.mxu0
        %6322 = vmatprep.subr.bf16.mxu0 %v4312
        %6323 = vmatpush1.bf16.msra.mxu0 %v4311
        %6324 = vmatprep.subr.bf16.mxu0 %v4300
        %6325 = vmatpush1.bf16.msra.mxu0 %v4299
        %6326 = vmatprep.subr.bf16.mxu0 %v4288
        %6327 = vmatpush1.bf16.msra.mxu0 %v4287
        %6328 = vmatprep.subr.bf16.mxu0 %v4276
        %6329 = vmatpush1.bf16.msra.mxu0 %v4275
        %6330 = vmatprep.subr.bf16.mxu0 %v4264
        %6331 = vmatpush1.bf16.msra.mxu0 %v4263
        %6332 = vmatprep.subr.bf16.mxu0 %v4252
        %6333 = vmatpush1.bf16.msra.mxu0 %v4251
        %6334 = vmatprep.subr.bf16.mxu0 %v4240
        %6335 = vmatpush1.bf16.msra.mxu0 %v4239
        %6336 = vmatprep.subr.bf16.mxu0 %v4228
        %6337 = vmatpush1.bf16.msra.mxu0 %v4227
        %6338 = vmatprep.subr.bf16.mxu0 %v4408
        %6339 = vmatpush2.bf16.msra.mxu0 %v4407
        %6340 = vmatprep.subr.bf16.mxu0 %v4396
        %6341 = vmatpush2.bf16.msra.mxu0 %v4395
        %6342 = vmatprep.subr.bf16.mxu0 %v4384
        %6343 = vmatpush2.bf16.msra.mxu0 %v4383
        %6344 = vmatprep.subr.bf16.mxu0 %v4372
        %6345 = vmatpush2.bf16.msra.mxu0 %v4371
        %6346 = vmatprep.subr.bf16.mxu0 %v4360
        %6347 = vmatpush2.bf16.msra.mxu0 %v4359
        %6348 = vmatprep.subr.bf16.mxu0 %v4348
        %6349 = vmatpush2.bf16.msra.mxu0 %v4347
        %6350 = vmatprep.subr.bf16.mxu0 %v4336
        %6351 = vmatpush2.bf16.msra.mxu0 %v4335
        %6352 = vmatprep.subr.bf16.mxu0 %v4324
        %6353 = vmatpush2.bf16.msra.mxu0 %v4323
        %6354 = vmatprep.mubr.bf16.mxu0 %v1713
        %6355 = vmatmul.mubr.bf16.gmra.mxu0 %v1711
        %v6356 = vpop.f32.mrf.mxu0
        %v6357 = vadd.f32 %v6316, %v6356
        %v6358 = vpop.f32.mrf.mxu0
        %v6359 = vadd.f32 %v6318, %v6358
        %v6360 = vpop.f32.mrf.mxu0
        %v6361 = vpop.f32.mrf.mxu0
        %6362 = vdwg.mxu0
        %6363 = vmatprep.subr.bf16.mxu0 %v4504
        %6364 = vmatpush1.bf16.msra.mxu0 %v4503
        %6365 = vmatprep.subr.bf16.mxu0 %v4492
        %6366 = vmatpush1.bf16.msra.mxu0 %v4491
        %6367 = vmatprep.subr.bf16.mxu0 %v4480
        %6368 = vmatpush1.bf16.msra.mxu0 %v4479
        %6369 = vmatprep.subr.bf16.mxu0 %v4468
        %6370 = vmatpush1.bf16.msra.mxu0 %v4467
        %6371 = vmatprep.subr.bf16.mxu0 %v4456
        %6372 = vmatpush1.bf16.msra.mxu0 %v4455
        %6373 = vmatprep.subr.bf16.mxu0 %v4444
        %6374 = vmatpush1.bf16.msra.mxu0 %v4443
        %6375 = vmatprep.subr.bf16.mxu0 %v4432
        %6376 = vmatpush1.bf16.msra.mxu0 %v4431
        %6377 = vmatprep.subr.bf16.mxu0 %v4420
        %6378 = vmatpush1.bf16.msra.mxu0 %v4419
        %6379 = vmatprep.subr.bf16.mxu0 %v4600
        %6380 = vmatpush2.bf16.msra.mxu0 %v4599
        %6381 = vmatprep.subr.bf16.mxu0 %v4588
        %6382 = vmatpush2.bf16.msra.mxu0 %v4587
        %6383 = vmatprep.subr.bf16.mxu0 %v4576
        %6384 = vmatpush2.bf16.msra.mxu0 %v4575
        %6385 = vmatprep.subr.bf16.mxu0 %v4564
        %6386 = vmatpush2.bf16.msra.mxu0 %v4563
        %6387 = vmatprep.subr.bf16.mxu0 %v4552
        %6388 = vmatpush2.bf16.msra.mxu0 %v4551
        %6389 = vmatprep.subr.bf16.mxu0 %v4540
        %6390 = vmatpush2.bf16.msra.mxu0 %v4539
        %6391 = vmatprep.subr.bf16.mxu0 %v4528
        %6392 = vmatpush2.bf16.msra.mxu0 %v4527
        %6393 = vmatprep.subr.bf16.mxu0 %v4516
        %6394 = vmatpush2.bf16.msra.mxu0 %v4515
        %6395 = vmatprep.mubr.bf16.mxu0 %v1710
        %6396 = vmatmul.mubr.bf16.gmra.mxu0 %v1696
        %v6397 = vpop.f32.mrf.mxu0
        %v6398 = vadd.f32 %v6357, %v6397
        %v6399 = vpop.f32.mrf.mxu0
        %v6400 = vadd.f32 %v6359, %v6399
        %v6401 = vpop.f32.mrf.mxu0
        %v6402 = vpop.f32.mrf.mxu0
        %6403 = vdwg.mxu0
        %6404 = vmatprep.subr.bf16.mxu0 %v4696
        %6405 = vmatpush1.bf16.msra.mxu0 %v4695
        %6406 = vmatprep.subr.bf16.mxu0 %v4684
        %6407 = vmatpush1.bf16.msra.mxu0 %v4683
        %6408 = vmatprep.subr.bf16.mxu0 %v4672
        %6409 = vmatpush1.bf16.msra.mxu0 %v4671
        %6410 = vmatprep.subr.bf16.mxu0 %v4660
        %6411 = vmatpush1.bf16.msra.mxu0 %v4659
        %6412 = vmatprep.subr.bf16.mxu0 %v4648
        %6413 = vmatpush1.bf16.msra.mxu0 %v4647
        %6414 = vmatprep.subr.bf16.mxu0 %v4636
        %6415 = vmatpush1.bf16.msra.mxu0 %v4635
        %6416 = vmatprep.subr.bf16.mxu0 %v4624
        %6417 = vmatpush1.bf16.msra.mxu0 %v4623
        %6418 = vmatprep.subr.bf16.mxu0 %v4612
        %6419 = vmatpush1.bf16.msra.mxu0 %v4611
        %6420 = vmatprep.subr.bf16.mxu0 %v4792
        %6421 = vmatpush2.bf16.msra.mxu0 %v4791
        %6422 = vmatprep.subr.bf16.mxu0 %v4780
        %6423 = vmatpush2.bf16.msra.mxu0 %v4779
        %6424 = vmatprep.subr.bf16.mxu0 %v4768
        %6425 = vmatpush2.bf16.msra.mxu0 %v4767
        %6426 = vmatprep.subr.bf16.mxu0 %v4756
        %6427 = vmatpush2.bf16.msra.mxu0 %v4755
        %6428 = vmatprep.subr.bf16.mxu0 %v4744
        %6429 = vmatpush2.bf16.msra.mxu0 %v4743
        %6430 = vmatprep.subr.bf16.mxu0 %v4732
        %6431 = vmatpush2.bf16.msra.mxu0 %v4731
        %6432 = vmatprep.subr.bf16.mxu0 %v4720
        %6433 = vmatpush2.bf16.msra.mxu0 %v4719
        %6434 = vmatprep.subr.bf16.mxu0 %v4708
        %6435 = vmatpush2.bf16.msra.mxu0 %v4707
        %6436 = vmatprep.mubr.bf16.mxu0 %v1714
        %6437 = vmatmul.mubr.bf16.gmra.mxu0 %v1712
        %v6438 = vpop.f32.mrf.mxu0
        %v6439 = vadd.f32 %v6398, %v6438
        %v6440 = vpop.f32.mrf.mxu0
        %v6441 = vadd.f32 %v6400, %v6440
        %v6442 = vpop.f32.mrf.mxu0
        %v6443 = vpop.f32.mrf.mxu0
        %6444 = vdwg.mxu0
        %6445 = vmatprep.subr.bf16.mxu0 %v4122
        %6446 = vmatpush1.bf16.msra.mxu0 %v4121
        %6447 = vmatprep.subr.bf16.mxu0 %v4110
        %6448 = vmatpush1.bf16.msra.mxu0 %v4109
        %6449 = vmatprep.subr.bf16.mxu0 %v4098
        %6450 = vmatpush1.bf16.msra.mxu0 %v4097
        %6451 = vmatprep.subr.bf16.mxu0 %v4086
        %6452 = vmatpush1.bf16.msra.mxu0 %v4085
        %6453 = vmatprep.subr.bf16.mxu0 %v4074
        %6454 = vmatpush1.bf16.msra.mxu0 %v4073
        %6455 = vmatprep.subr.bf16.mxu0 %v4062
        %6456 = vmatpush1.bf16.msra.mxu0 %v4061
        %6457 = vmatprep.subr.bf16.mxu0 %v4050
        %6458 = vmatpush1.bf16.msra.mxu0 %v4049
        %6459 = vmatprep.subr.bf16.mxu0 %v4038
        %6460 = vmatpush1.bf16.msra.mxu0 %v4037
        %6461 = vmatprep.subr.bf16.mxu0 %v4218
        %6462 = vmatpush2.bf16.msra.mxu0 %v4217
        %6463 = vmatprep.subr.bf16.mxu0 %v4206
        %6464 = vmatpush2.bf16.msra.mxu0 %v4205
        %6465 = vmatprep.subr.bf16.mxu0 %v4194
        %6466 = vmatpush2.bf16.msra.mxu0 %v4193
        %6467 = vmatprep.subr.bf16.mxu0 %v4182
        %6468 = vmatpush2.bf16.msra.mxu0 %v4181
        %6469 = vmatprep.subr.bf16.mxu0 %v4170
        %6470 = vmatpush2.bf16.msra.mxu0 %v4169
        %6471 = vmatprep.subr.bf16.mxu0 %v4158
        %6472 = vmatpush2.bf16.msra.mxu0 %v4157
        %6473 = vmatprep.subr.bf16.mxu0 %v4146
        %6474 = vmatpush2.bf16.msra.mxu0 %v4145
        %6475 = vmatprep.subr.bf16.mxu0 %v4134
        %6476 = vmatpush2.bf16.msra.mxu0 %v4133
        %6477 = vmatprep.mubr.bf16.mxu0 %v1703
        %6478 = vmatmul.mubr.bf16.gmra.mxu0 %v1689
        %v6479 = vpop.f32.mrf.mxu0
        %v6480 = vadd.f32 %v5608, %v6479
        %v6481 = vpop.f32.mrf.mxu0
        %v6482 = vadd.f32 %v5612, %v6481
        %v6483 = vpop.f32.mrf.mxu0
        %v6484 = vpop.f32.mrf.mxu0
        %6485 = vdwg.mxu0
        %6486 = vmatprep.subr.bf16.mxu0 %v4314
        %6487 = vmatpush1.bf16.msra.mxu0 %v4313
        %6488 = vmatprep.subr.bf16.mxu0 %v4302
        %6489 = vmatpush1.bf16.msra.mxu0 %v4301
        %6490 = vmatprep.subr.bf16.mxu0 %v4290
        %6491 = vmatpush1.bf16.msra.mxu0 %v4289
        %6492 = vmatprep.subr.bf16.mxu0 %v4278
        %6493 = vmatpush1.bf16.msra.mxu0 %v4277
        %6494 = vmatprep.subr.bf16.mxu0 %v4266
        %6495 = vmatpush1.bf16.msra.mxu0 %v4265
        %6496 = vmatprep.subr.bf16.mxu0 %v4254
        %6497 = vmatpush1.bf16.msra.mxu0 %v4253
        %6498 = vmatprep.subr.bf16.mxu0 %v4242
        %6499 = vmatpush1.bf16.msra.mxu0 %v4241
        %6500 = vmatprep.subr.bf16.mxu0 %v4230
        %6501 = vmatpush1.bf16.msra.mxu0 %v4229
        %6502 = vmatprep.subr.bf16.mxu0 %v4410
        %6503 = vmatpush2.bf16.msra.mxu0 %v4409
        %6504 = vmatprep.subr.bf16.mxu0 %v4398
        %6505 = vmatpush2.bf16.msra.mxu0 %v4397
        %6506 = vmatprep.subr.bf16.mxu0 %v4386
        %6507 = vmatpush2.bf16.msra.mxu0 %v4385
        %6508 = vmatprep.subr.bf16.mxu0 %v4374
        %6509 = vmatpush2.bf16.msra.mxu0 %v4373
        %6510 = vmatprep.subr.bf16.mxu0 %v4362
        %6511 = vmatpush2.bf16.msra.mxu0 %v4361
        %6512 = vmatprep.subr.bf16.mxu0 %v4350
        %6513 = vmatpush2.bf16.msra.mxu0 %v4349
        %6514 = vmatprep.subr.bf16.mxu0 %v4338
        %6515 = vmatpush2.bf16.msra.mxu0 %v4337
        %6516 = vmatprep.subr.bf16.mxu0 %v4326
        %6517 = vmatpush2.bf16.msra.mxu0 %v4325
        %6518 = vmatprep.mubr.bf16.mxu0 %v1713
        %6519 = vmatmul.mubr.bf16.gmra.mxu0 %v1711
        %v6520 = vpop.f32.mrf.mxu0
        %v6521 = vadd.f32 %v6480, %v6520
        %v6522 = vpop.f32.mrf.mxu0
        %v6523 = vadd.f32 %v6482, %v6522
        %v6524 = vpop.f32.mrf.mxu0
        %v6525 = vpop.f32.mrf.mxu0
        %6526 = vdwg.mxu0
        %6527 = vmatprep.subr.bf16.mxu0 %v4506
        %6528 = vmatpush1.bf16.msra.mxu0 %v4505
        %6529 = vmatprep.subr.bf16.mxu0 %v4494
        %6530 = vmatpush1.bf16.msra.mxu0 %v4493
        %6531 = vmatprep.subr.bf16.mxu0 %v4482
        %6532 = vmatpush1.bf16.msra.mxu0 %v4481
        %6533 = vmatprep.subr.bf16.mxu0 %v4470
        %6534 = vmatpush1.bf16.msra.mxu0 %v4469
        %6535 = vmatprep.subr.bf16.mxu0 %v4458
        %6536 = vmatpush1.bf16.msra.mxu0 %v4457
        %6537 = vmatprep.subr.bf16.mxu0 %v4446
        %6538 = vmatpush1.bf16.msra.mxu0 %v4445
        %6539 = vmatprep.subr.bf16.mxu0 %v4434
        %6540 = vmatpush1.bf16.msra.mxu0 %v4433
        %6541 = vmatprep.subr.bf16.mxu0 %v4422
        %6542 = vmatpush1.bf16.msra.mxu0 %v4421
        %6543 = vmatprep.subr.bf16.mxu0 %v4602
        %6544 = vmatpush2.bf16.msra.mxu0 %v4601
        %6545 = vmatprep.subr.bf16.mxu0 %v4590
        %6546 = vmatpush2.bf16.msra.mxu0 %v4589
        %6547 = vmatprep.subr.bf16.mxu0 %v4578
        %6548 = vmatpush2.bf16.msra.mxu0 %v4577
        %6549 = vmatprep.subr.bf16.mxu0 %v4566
        %6550 = vmatpush2.bf16.msra.mxu0 %v4565
        %6551 = vmatprep.subr.bf16.mxu0 %v4554
        %6552 = vmatpush2.bf16.msra.mxu0 %v4553
        %6553 = vmatprep.subr.bf16.mxu0 %v4542
        %6554 = vmatpush2.bf16.msra.mxu0 %v4541
        %6555 = vmatprep.subr.bf16.mxu0 %v4530
        %6556 = vmatpush2.bf16.msra.mxu0 %v4529
        %6557 = vmatprep.subr.bf16.mxu0 %v4518
        %6558 = vmatpush2.bf16.msra.mxu0 %v4517
        %6559 = vmatprep.mubr.bf16.mxu0 %v1710
        %6560 = vmatmul.mubr.bf16.gmra.mxu0 %v1696
        %v6561 = vpop.f32.mrf.mxu0
        %v6562 = vadd.f32 %v6521, %v6561
        %v6563 = vpop.f32.mrf.mxu0
        %v6564 = vadd.f32 %v6523, %v6563
        %v6565 = vpop.f32.mrf.mxu0
        %v6566 = vpop.f32.mrf.mxu0
        %6567 = vdwg.mxu0
        %6568 = vmatprep.subr.bf16.mxu0 %v4698
        %6569 = vmatpush1.bf16.msra.mxu0 %v4697
        %6570 = vmatprep.subr.bf16.mxu0 %v4686
        %6571 = vmatpush1.bf16.msra.mxu0 %v4685
        %6572 = vmatprep.subr.bf16.mxu0 %v4674
        %6573 = vmatpush1.bf16.msra.mxu0 %v4673
        %6574 = vmatprep.subr.bf16.mxu0 %v4662
        %6575 = vmatpush1.bf16.msra.mxu0 %v4661
        %6576 = vmatprep.subr.bf16.mxu0 %v4650
        %6577 = vmatpush1.bf16.msra.mxu0 %v4649
        %6578 = vmatprep.subr.bf16.mxu0 %v4638
        %6579 = vmatpush1.bf16.msra.mxu0 %v4637
        %6580 = vmatprep.subr.bf16.mxu0 %v4626
        %6581 = vmatpush1.bf16.msra.mxu0 %v4625
        %6582 = vmatprep.subr.bf16.mxu0 %v4614
        %6583 = vmatpush1.bf16.msra.mxu0 %v4613
        %6584 = vmatprep.subr.bf16.mxu0 %v4794
        %6585 = vmatpush2.bf16.msra.mxu0 %v4793
        %6586 = vmatprep.subr.bf16.mxu0 %v4782
        %6587 = vmatpush2.bf16.msra.mxu0 %v4781
        %6588 = vmatprep.subr.bf16.mxu0 %v4770
        %6589 = vmatpush2.bf16.msra.mxu0 %v4769
        %6590 = vmatprep.subr.bf16.mxu0 %v4758
        %6591 = vmatpush2.bf16.msra.mxu0 %v4757
        %6592 = vmatprep.subr.bf16.mxu0 %v4746
        %6593 = vmatpush2.bf16.msra.mxu0 %v4745
        %6594 = vmatprep.subr.bf16.mxu0 %v4734
        %6595 = vmatpush2.bf16.msra.mxu0 %v4733
        %6596 = vmatprep.subr.bf16.mxu0 %v4722
        %6597 = vmatpush2.bf16.msra.mxu0 %v4721
        %6598 = vmatprep.subr.bf16.mxu0 %v4710
        %6599 = vmatpush2.bf16.msra.mxu0 %v4709
        %6600 = vmatprep.mubr.bf16.mxu0 %v1714
        %6601 = vmatmul.mubr.bf16.gmra.mxu0 %v1712
        %v6602 = vpop.f32.mrf.mxu0
        %v6603 = vadd.f32 %v6562, %v6602
        %v6604 = vpop.f32.mrf.mxu0
        %v6605 = vadd.f32 %v6564, %v6604
        %v6606 = vpop.f32.mrf.mxu0
        %v6607 = vpop.f32.mrf.mxu0
        %6608 = vdwg.mxu0
        %v6609 = vadd.f32 %v683, %v5783
        %v6610 = vadd.f32 %v685, %v5785
        %v6611 = vadd.f32 %v724, %v5947
        %v6612 = vadd.f32 %v726, %v5949
        %v6613 = vxor.u32 %v6609, 2147483648
        %v6614 = vxor.u32 %v6610, 2147483648
        %v6615 = vxor.u32 %v6611, 2147483648
        %v6616 = vxor.u32 %v6612, 2147483648
        %v6617 = vmul.f32 %v6613, 1.442695
        %v6618 = vpow.pop %v6617
        %v6619 = vmul.f32 %v6614, 1.442695
        %v6620 = vpow.pop %v6619
        %v6621 = vmul.f32 %v6615, 1.442695
        %v6622 = vpow.pop %v6621
        %v6623 = vmul.f32 %v6616, 1.442695
        %v6624 = vpow.pop %v6623
        %v6625 = vadd.f32 %v6618, 1.0
        %v6626 = vadd.f32 %v6620, 1.0
        %v6627 = vadd.f32 %v6622, 1.0
        %v6628 = vadd.f32 %v6624, 1.0
        %v6629 = vrcp.pop %v6625
        %v6630 = vmul.f32 1.0, %v6629
        %v6631 = vrcp.pop %v6626
        %v6632 = vmul.f32 1.0, %v6631
        %v6633 = vrcp.pop %v6627
        %v6634 = vmul.f32 1.0, %v6633
        %v6635 = vrcp.pop %v6628
        %v6636 = vmul.f32 1.0, %v6635
        %v6637 = vadd.f32 %v765, %v6111
        %v6638 = vadd.f32 %v767, %v6113
        %v6639 = vadd.f32 %v806, %v6275
        %v6640 = vadd.f32 %v808, %v6277
        %v6641 = vxor.u32 %v6637, 2147483648
        %v6642 = vxor.u32 %v6638, 2147483648
        %v6643 = vxor.u32 %v6639, 2147483648
        %v6644 = vxor.u32 %v6640, 2147483648
        %v6645 = vmul.f32 %v6641, 1.442695
        %v6646 = vpow.pop %v6645
        %v6647 = vmul.f32 %v6642, 1.442695
        %v6648 = vpow.pop %v6647
        %v6649 = vmul.f32 %v6643, 1.442695
        %v6650 = vpow.pop %v6649
        %v6651 = vmul.f32 %v6644, 1.442695
        %v6652 = vpow.pop %v6651
        %v6653 = vadd.f32 %v6646, 1.0
        %v6654 = vadd.f32 %v6648, 1.0
        %v6655 = vadd.f32 %v6650, 1.0
        %v6656 = vadd.f32 %v6652, 1.0
        %v6657 = vrcp.pop %v6653
        %v6658 = vmul.f32 1.0, %v6657
        %v6659 = vrcp.pop %v6654
        %v6660 = vmul.f32 1.0, %v6659
        %v6661 = vrcp.pop %v6655
        %v6662 = vmul.f32 1.0, %v6661
        %v6663 = vrcp.pop %v6656
        %v6664 = vmul.f32 1.0, %v6663
        %v6665 = vmul.f32 %v6630, %v6439
        %v6666 = vmul.f32 %v6632, %v6441
        %v6667 = vmul.f32 %v6634, %v6603
        %v6668 = vmul.f32 %v6636, %v6605
        %v6669 = vadd.f32 %v847, %v6665
        %v6670 = vadd.f32 %v849, %v6666
        %v6671 = vadd.f32 %v888, %v6667
        %v6672 = vadd.f32 %v890, %v6668
        %v6673 = vtanh.pop %v6669
        %v6674 = vtanh.pop %v6670
        %v6675 = vtanh.pop %v6671
        %v6676 = vtanh.pop %v6672
        %v6677 = vld [vmem:[%s423] sm:$0xf]
        %v6678 = vsub.f32 1.0, %v6658
        %v6679 = vsub.f32 1.0, %v6660
        %v6680 = vsub.f32 1.0, %v6662
        %v6681 = vsub.f32 1.0, %v6664
        %v6682 = vmul.f32 %v6678, %v6673
        %v6683 = vmul.f32 %v6679, %v6674
        %v6684 = vmul.f32 %v6680, %v6675
        %v6685 = vmul.f32 %v6681, %v6676
        %v6687 = vlaneseq
        %v6688 = vshrl.u32 %v6687, 7
        %v6689 = vsub.s32 0, %v6688
        %v6690 = vrot.slane %v6677, %v6689
        %v6691 = vlaneseq
        %v6692 = vshrl.u32 %v6691, 7
        %v6693 = vsub.s32 1, %v6692
        %v6694 = vrot.slane %v6677, %v6693
        %v6695 = vlaneseq
        %v6696 = vshrl.u32 %v6695, 7
        %v6697 = vsub.s32 2, %v6696
        %v6698 = vrot.slane %v6677, %v6697
        %v6699 = vlaneseq
        %v6700 = vshrl.u32 %v6699, 7
        %v6701 = vsub.s32 3, %v6700
        %v6702 = vrot.slane %v6677, %v6701
        %v6707 = vmul.f32 %v6658, %v6690
        %v6708 = vmul.f32 %v6660, %v6694
        %v6709 = vmul.f32 %v6662, %v6698
        %v6710 = vmul.f32 %v6664, %v6702
        %v6711 = vadd.f32 %v6682, %v6707
        %v6712 = vadd.f32 %v6683, %v6708
        %v6713 = vadd.f32 %v6684, %v6709
        %v6714 = vadd.f32 %v6685, %v6710
        %v6719 = vcombine.low %v6711, %v6712
        %v6720 = vcombine.low %v6713, %v6714
        %v6722 = vunpack.c.l.s4 1966171168
        %v6723 = vunpack.c.0.s8 %v6722
        %v6724 = vlaneseq
        %v6725 = vshrl.u32 %v6724, 7
        %v6726 = vsub.s32 %v6723, %v6725
        %v6727 = vrot.slane %v6719, %v6726
        %v6729 = vunpack.c.l.s4 1966171168
        %v6730 = vunpack.c.0.s8 %v6729
        %v6731 = vlaneseq
        %v6732 = vshrl.u32 %v6731, 7
        %v6733 = vsub.s32 %v6730, %v6732
        %v6734 = vrot.slane %v6720, %v6733
        %v6735 = vcombine.low %v6727, %v6734
        %v6737 = vunpack.c.l.s4 1966171168
        %v6738 = vunpack.c.0.s8 %v6737
        %v6739 = vlaneseq
        %v6740 = vshrl.u32 %v6739, 7
        %v6741 = vsub.s32 %v6738, %v6740
        %v6742 = vrot.slane %v6735, %v6741
        %v6744 = vlaneseq
        %vm6745 = vcmp.ge.s32.totalorder %v6744, 0
        %vm6746 = vcmp.lt.s32.totalorder %v6744, 512
        %vm6747 = vmand %vm6745, %vm6746
        %6748 = vst.msk [vmem:[%s432] sm:$0xf] %vm6747, %v6742
        %s6749 = smul.u32 4, %s27
        %p6750 = scmp.lt.s32.totalorder %s6749, 7
        %s6751 = scalar_select %p6750, %s6749, 7
        %s6752 = scalar_lea.vmem %s7, %s6751
        // Predicated region
        $region65: #{weight_update_gru.1} parent=47 // pred_check
          %p6753 = pneg %p217
        $region66: #{weight_update_gru.1} parent=47 // pred_check_branch
          %6755 = sbr.rel (%p6753) target = $region68
        $region67: #{weight_update_gru.1} parent=47 // pred_region
          %s6756 = smul.u32 4, %s27
        $region68: #{weight_update_gru.1} parent=47 // pred_fallthru
          _
      $region48: #{weight_update_gru.1} parent=5 // pred_fallthru
        _
      %p6757 = scmp.le.s32.totalorder 2, %s22
      // Predicated region
      $region69: #{weight_update_gru.1} parent=5 // pred_check
        %p6758 = pneg %p6757
      $region70: #{weight_update_gru.1} parent=5 // pred_check_branch
        %6760 = sbr.rel (%p6758) target = $region72
      $region71: #{weight_update_gru.1} parent=5 // pred_region
        %s6761 = ssub.s32 %s22, 2
        // Predicated region
        $region73: #{weight_update_gru.1} parent=71 // pred_check
          %p6762 = pneg %p223
        $region74: #{weight_update_gru.1} parent=71 // pred_check_branch
          %6764 = sbr.rel (%p6762) target = $region76
        $region75: #{weight_update_gru.1} parent=71 // pred_region
          %s6765 = smul.u32 4, %s28
          %p6766 = scmp.lt.s32.totalorder %s6765, 7
          %s6767 = scalar_select %p6766, %s6765, 7
          %s6768 = scalar_lea.vmem %s7, %s6767
        $region76: #{weight_update_gru.1} parent=71 // pred_fallthru
          _
      $region72: #{weight_update_gru.1} parent=5 // pred_fallthru
        _
    $region6: #{weight_update_gru.1} parent=1 // loop_footer
      %s26 = sadd.s32 1, %s22
    $region7: #{weight_update_gru.1} parent=1 // loop_footer_branch
      %21 = sbr.rel target = $region3
    $region8: #{weight_update_gru.1} parent=1 // loop_exit
      _
    %6769 = vsyncpa [#allocation3], 1
    %s6770 = scalar_lea.sflag [#allocation3], 1
    %6771 = vsyncpa %s6770, 1
    %6772 = vsyncpa [#allocation5], 1
    %s6773 = scalar_lea.sflag [#allocation5], 1
    %6774 = vsyncpa %s6773, 1
    %6775 = vsyncpa [#allocation8], 1
    %s6776 = scalar_lea.sflag [#allocation8], 1
    %6777 = vsyncpa %s6776, 1

</llo_original>
